<compile_context>
chip_gen: v6e
topology: v6e:2x2x1
jax: 0.10.0
libtpu: 0.0.40
codegen_flags: <defaults>
</compile_context>

<pallas_src>
import functools

import jax
import jax.numpy as jnp
from jax.experimental import pallas as pl
from jax.experimental.pallas import tpu as pltpu


# ----------------------------------------------------------------------------
# Fused encoder kernel: one grid step == one image.
# ----------------------------------------------------------------------------
def _encoder_kernel(cols1_ref, w1_ref, b1_ref, w2_ref, b2_ref, fcw_ref,
                    fcb_ref, out_ref, *, wo1, ho2, wo2):
    f32 = jnp.float32
    bf16 = jnp.bfloat16

    # ---- conv1: one MXU matmul over the pre-gathered stride-2 patches ------
    # cols1_ref[0]: (ho1*wo1, kh*kw*Cin) bf16 ; w1: (kh*kw*Cin, 32) bf16
    a1 = jnp.dot(cols1_ref[0], w1_ref[...], preferred_element_type=f32)
    a1 = jnp.maximum(a1 + b1_ref[...], 0.0)            # (ho1*wo1, 32) f32

    # Hoisted weight loads / bias broadcasts (no per-iteration re-broadcast).
    w2 = w2_ref[...]                                   # (9, 32, 32) bf16
    fcw = fcw_ref[...]                                 # (ho2*wo2, 32, 32) bf16
    c_hid = w2.shape[2]
    b2_blk = jnp.broadcast_to(b2_ref[...], (wo2, c_hid))   # (wo2, 32) f32
    emb = fcb_ref[...]                                 # (1, embed) f32 accum

    # ---- conv2 + ReLU + (flatten . fc), one conv2 output row at a time -----
    # conv2 output position (oh, ow) reads a1 rows wo1*(oh+i) + (ow+j); for a
    # fixed (oh, i, j) the ow=0..wo2-1 rows are a contiguous slab, so each tap
    # is a contiguous (wo2, 32) slice -> one small bf16 MXU dot, accumulated
    # in f32.  Only safe ops are used: static contiguous slices + 2-D dots.
    for oh in range(ho2):
        acc = b2_blk                                   # (wo2, 32) f32
        for i in range(3):
            base = wo1 * (oh + i)
            for j in range(3):
                lhs = a1[base + j:base + j + wo2, :].astype(bf16)
                acc = acc + jnp.dot(lhs, w2[3 * i + j],
                                    preferred_element_type=f32)
        row = jnp.maximum(acc, 0.0)                    # (wo2, 32) f32

        # fc consumes positions in (oh, ow, c) order; fcw was permuted at
        # trace time so PyTorch's NCHW flatten needs no activation transpose.
        for ow in range(wo2):
            emb = emb + jnp.dot(row[ow:ow + 1, :].astype(bf16),
                                fcw[wo2 * oh + ow],
                                preferred_element_type=f32)

    out_ref[...] = emb.reshape(1, 1, emb.shape[-1]).astype(out_ref.dtype)


# ----------------------------------------------------------------------------
# Wrapper-side conv1 im2col straight from NCHW (one tiny XLA fusion, ~7 KB).
# ----------------------------------------------------------------------------
def _conv1_im2col_nchw(obs_nchw, kh, kw, stride):
    B, C, H, W = obs_nchw.shape
    ho = (H - kh) // stride + 1
    wo = (W - kw) // stride + 1
    pats = []
    for i in range(kh):
        for j in range(kw):
            pats.append(obs_nchw[:, :,
                                 i:i + stride * (ho - 1) + 1:stride,
                                 j:j + stride * (wo - 1) + 1:stride])
    cols = jnp.stack(pats, axis=0)                 # (kh*kw, B, C, ho, wo)
    cols = jnp.transpose(cols, (1, 3, 4, 0, 2))    # (B, ho, wo, kh*kw, C)
    return cols.reshape(B, ho * wo, kh * kw * C), (ho, wo)


# ----------------------------------------------------------------------------
# Parameters (PyTorch-convention storage).
# ----------------------------------------------------------------------------
def init_params(key, c_in=4, hw=16, c_hidden=32, embed_dim=32):
    k1, k2, k3 = jax.random.split(key, 3)

    def kaiming(k, shape, fan_in):
        return jax.random.normal(k, shape, jnp.float32) * jnp.sqrt(2.0 / fan_in)

    h1 = (hw - 3) // 2 + 1          # conv1: k=3, s=2, valid
    h2 = h1 - 2                      # conv2: k=3, s=1, valid
    flat = h2 * h2 * c_hidden
    return {
        "conv1_w": kaiming(k1, (c_hidden, c_in, 3, 3), c_in * 9),
        "conv1_b": jnp.zeros((c_hidden,), jnp.float32),
        "conv2_w": kaiming(k2, (c_hidden, c_hidden, 3, 3), c_hidden * 9),
        "conv2_b": jnp.zeros((c_hidden,), jnp.float32),
        # (in, out) with `in` index = c*h2*w2 + oh*w2 + ow, i.e. PyTorch's
        # NCHW flatten order.  (nn.Linear stores (out, in): transpose when
        # porting a real checkpoint.)
        "fc_w": kaiming(k3, (flat, embed_dim), flat),
        "fc_b": jnp.zeros((embed_dim,), jnp.float32),
    }


# ----------------------------------------------------------------------------
# ImageEncoder forward: one fused pallas_call.
# ----------------------------------------------------------------------------
@jax.jit
def image_encoder_forward(params, obs_nchw):
    obs = obs_nchw.astype(jnp.float32)
    B, C, H, W = obs.shape
    c_hid = params["conv1_b"].shape[0]
    embed = params["fc_b"].shape[0]

    cols1, (ho1, wo1) = _conv1_im2col_nchw(obs, 3, 3, 2)
    ho2, wo2 = ho1 - 2, wo1 - 2
    cols1 = cols1.astype(jnp.bfloat16)              # (B, ho1*wo1, 9*C)

    # Trace-time weight re-arrangements (tiny, fused by XLA).
    w1 = jnp.transpose(params["conv1_w"], (2, 3, 1, 0))        # (3,3,C,32)
    w1 = w1.reshape(9 * C, c_hid).astype(jnp.bfloat16)
    w2 = jnp.transpose(params["conv2_w"], (2, 3, 1, 0))        # (3,3,32,32)
    w2 = w2.reshape(9, c_hid, c_hid).astype(jnp.bfloat16)
    # Fold PyTorch's (c, oh, ow) flatten order into the fc weight: permute to
    # (oh, ow) major, then split per spatial position -> (ho2*wo2, c, embed).
    fcw = params["fc_w"].reshape(c_hid, ho2, wo2, embed)
    fcw = jnp.transpose(fcw, (1, 2, 0, 3)).reshape(ho2 * wo2, c_hid, embed)
    fcw = fcw.astype(jnp.bfloat16)

    b1 = params["conv1_b"].reshape(1, c_hid).astype(jnp.float32)
    b2 = params["conv2_b"].reshape(1, c_hid).astype(jnp.float32)
    fcb = params["fc_b"].reshape(1, embed).astype(jnp.float32)

    kernel = functools.partial(_encoder_kernel, wo1=wo1, ho2=ho2, wo2=wo2)

    flops = 2 * B * (ho1 * wo1 * 9 * C * c_hid
                     + ho2 * wo2 * 9 * c_hid * c_hid
                     + ho2 * wo2 * c_hid * embed)
    bytes_accessed = (cols1.size * 2 + w1.size * 2 + w2.size * 2
                      + fcw.size * 2 + (b1.size + b2.size + fcb.size) * 4
                      + B * embed * 4)

    out = pl.pallas_call(
        kernel,
        out_shape=jax.ShapeDtypeStruct((B, 1, embed), jnp.float32),
        grid=(B,),
        in_specs=[
            pl.BlockSpec((1, ho1 * wo1, 9 * C), lambda b: (b, 0, 0)),
            pl.BlockSpec((9 * C, c_hid), lambda b: (0, 0)),
            pl.BlockSpec((1, c_hid), lambda b: (0, 0)),
            pl.BlockSpec((9, c_hid, c_hid), lambda b: (0, 0, 0)),
            pl.BlockSpec((1, c_hid), lambda b: (0, 0)),
            pl.BlockSpec((ho2 * wo2, c_hid, embed), lambda b: (0, 0, 0)),
            pl.BlockSpec((1, embed), lambda b: (0, 0)),
        ],
        out_specs=pl.BlockSpec((1, 1, embed), lambda b: (b, 0, 0)),
        compiler_params=pltpu.CompilerParams(
            dimension_semantics=("parallel",)),
        cost_estimate=pl.CostEstimate(flops=flops, transcendentals=0,
                                      bytes_accessed=bytes_accessed),
    )(cols1, w1, b1, w2, b2, fcw, fcb)

    return out.reshape(B, embed)


if __name__ == "__main__":
    key = jax.random.PRNGKey(0)
    kp, kx = jax.random.split(key)

    B, C, H, W = 2, 4, 16, 16            # small shapes consistent with the module
    params = init_params(kp, c_in=C, hw=H, c_hidden=32, embed_dim=32)
    obs = jax.random.normal(kx, (B, C, H, W), jnp.float32)

    emb = image_encoder_forward(params, obs)
    jax.block_until_ready(emb)
    assert emb.shape == (B, 32), emb.shape
    assert bool(jnp.all(jnp.isfinite(emb))), "non-finite embedding"
    print("KERNEL_OK")
</pallas_src>

<mosaic_0001>
module attributes {stable_mosaic.version = 11 : i64} {
  func.func @_encoder_kernel(%arg0: i32, %arg1: memref<1x49x36xbf16, #tpu.memory_space<vmem>>, %arg2: memref<36x32xbf16, #tpu.memory_space<vmem>>, %arg3: memref<1x32xf32, #tpu.memory_space<vmem>>, %arg4: memref<9x32x32xbf16, #tpu.memory_space<vmem>>, %arg5: memref<1x32xf32, #tpu.memory_space<vmem>>, %arg6: memref<25x32x32xbf16, #tpu.memory_space<vmem>>, %arg7: memref<1x32xf32, #tpu.memory_space<vmem>>, %arg8: memref<1x1x32xf32, #tpu.memory_space<vmem>>) attributes {dimension_semantics = [#tpu.dimension_semantics<parallel>], iteration_bounds = array<i64: 2>, scalar_prefetch = 0 : i64, scratch_operands = 0 : i64, tpu.core_type = #tpu.core_type<tc>, window_params = [{transform_indices = @transform_0, window_bounds = array<i64: 1, 49, 36>}, {pipeline_mode = #tpu.pipeline_mode<synchronous>, transform_indices = @transform_1, window_bounds = array<i64: 36, 32>}, {pipeline_mode = #tpu.pipeline_mode<synchronous>, transform_indices = @transform_2, window_bounds = array<i64: 1, 32>}, {pipeline_mode = #tpu.pipeline_mode<synchronous>, transform_indices = @transform_3, window_bounds = array<i64: 9, 32, 32>}, {pipeline_mode = #tpu.pipeline_mode<synchronous>, transform_indices = @transform_4, window_bounds = array<i64: 1, 32>}, {pipeline_mode = #tpu.pipeline_mode<synchronous>, transform_indices = @transform_5, window_bounds = array<i64: 25, 32, 32>}, {pipeline_mode = #tpu.pipeline_mode<synchronous>, transform_indices = @transform_6, window_bounds = array<i64: 1, 32>}, {transform_indices = @transform_7, window_bounds = array<i64: 1, 1, 32>}]} {
    %c0 = arith.constant 0 : index
    %c0_0 = arith.constant 0 : index
    %c0_1 = arith.constant 0 : index
    %0 = vector.load %arg1[%c0, %c0_0, %c0_1] : memref<1x49x36xbf16, #tpu.memory_space<vmem>>, vector<1x49x36xbf16>
    %1 = vector.shape_cast %0 : vector<1x49x36xbf16> to vector<49x36xbf16>
    %c0_2 = arith.constant 0 : index
    %c0_3 = arith.constant 0 : index
    %2 = vector.load %arg2[%c0_2, %c0_3] : memref<36x32xbf16, #tpu.memory_space<vmem>>, vector<36x32xbf16>
    %cst = arith.constant dense<0.000000e+00> : vector<49x32xf32>
    %3 = tpu.matmul %1, %2, %cst {dimension_numbers = #tpu.dot_dimension_numbers<[1], [0], [0], [1], [0, 0, 1, 1], [], []>} : vector<49x36xbf16>, vector<36x32xbf16>, vector<49x32xf32> -> vector<49x32xf32>
    %c0_4 = arith.constant 0 : index
    %c0_5 = arith.constant 0 : index
    %4 = vector.load %arg3[%c0_4, %c0_5] : memref<1x32xf32, #tpu.memory_space<vmem>>, vector<1x32xf32>
    %5 = vector.broadcast %4 : vector<1x32xf32> to vector<49x32xf32>
    %6 = arith.addf %3, %5 : vector<49x32xf32>
    %cst_6 = arith.constant 0.000000e+00 : f32
    %7 = vector.broadcast %cst_6 : f32 to vector<49x32xf32>
    %8 = arith.maximumf %6, %7 : vector<49x32xf32>
    %c0_7 = arith.constant 0 : index
    %c0_8 = arith.constant 0 : index
    %c0_9 = arith.constant 0 : index
    %9 = vector.load %arg4[%c0_7, %c0_8, %c0_9] : memref<9x32x32xbf16, #tpu.memory_space<vmem>>, vector<9x32x32xbf16>
    %c0_10 = arith.constant 0 : index
    %c0_11 = arith.constant 0 : index
    %c0_12 = arith.constant 0 : index
    %10 = vector.load %arg6[%c0_10, %c0_11, %c0_12] : memref<25x32x32xbf16, #tpu.memory_space<vmem>>, vector<25x32x32xbf16>
    %c0_13 = arith.constant 0 : index
    %c0_14 = arith.constant 0 : index
    %11 = vector.load %arg5[%c0_13, %c0_14] : memref<1x32xf32, #tpu.memory_space<vmem>>, vector<1x32xf32>
    %12 = vector.shape_cast %11 : vector<1x32xf32> to vector<1x32xf32>
    %13 = vector.broadcast %12 : vector<1x32xf32> to vector<5x32xf32>
    %c0_15 = arith.constant 0 : index
    %c0_16 = arith.constant 0 : index
    %14 = vector.load %arg7[%c0_15, %c0_16] : memref<1x32xf32, #tpu.memory_space<vmem>>, vector<1x32xf32>
    %15 = vector.extract_strided_slice %8 {offsets = [0, 0], sizes = [5, 32], strides = [1, 1]} : vector<49x32xf32> to vector<5x32xf32>
    %16 = arith.truncf %15 : vector<5x32xf32> to vector<5x32xbf16>
    %17 = vector.extract_strided_slice %9 {offsets = [0, 0, 0], sizes = [1, 32, 32], strides = [1, 1, 1]} : vector<9x32x32xbf16> to vector<1x32x32xbf16>
    %18 = vector.shape_cast %17 : vector<1x32x32xbf16> to vector<32x32xbf16>
    %cst_17 = arith.constant dense<0.000000e+00> : vector<5x32xf32>
    %19 = tpu.matmul %16, %18, %cst_17 {dimension_numbers = #tpu.dot_dimension_numbers<[1], [0], [0], [1], [0, 0, 1, 1], [], []>} : vector<5x32xbf16>, vector<32x32xbf16>, vector<5x32xf32> -> vector<5x32xf32>
    %20 = arith.addf %13, %19 : vector<5x32xf32>
    %21 = vector.extract_strided_slice %8 {offsets = [1, 0], sizes = [5, 32], strides = [1, 1]} : vector<49x32xf32> to vector<5x32xf32>
    %22 = arith.truncf %21 : vector<5x32xf32> to vector<5x32xbf16>
    %23 = vector.extract_strided_slice %9 {offsets = [1, 0, 0], sizes = [1, 32, 32], strides = [1, 1, 1]} : vector<9x32x32xbf16> to vector<1x32x32xbf16>
    %24 = vector.shape_cast %23 : vector<1x32x32xbf16> to vector<32x32xbf16>
    %cst_18 = arith.constant dense<0.000000e+00> : vector<5x32xf32>
    %25 = tpu.matmul %22, %24, %cst_18 {dimension_numbers = #tpu.dot_dimension_numbers<[1], [0], [0], [1], [0, 0, 1, 1], [], []>} : vector<5x32xbf16>, vector<32x32xbf16>, vector<5x32xf32> -> vector<5x32xf32>
    %26 = arith.addf %20, %25 : vector<5x32xf32>
    %27 = vector.extract_strided_slice %8 {offsets = [2, 0], sizes = [5, 32], strides = [1, 1]} : vector<49x32xf32> to vector<5x32xf32>
    %28 = arith.truncf %27 : vector<5x32xf32> to vector<5x32xbf16>
    %29 = vector.extract_strided_slice %9 {offsets = [2, 0, 0], sizes = [1, 32, 32], strides = [1, 1, 1]} : vector<9x32x32xbf16> to vector<1x32x32xbf16>
    %30 = vector.shape_cast %29 : vector<1x32x32xbf16> to vector<32x32xbf16>
    %cst_19 = arith.constant dense<0.000000e+00> : vector<5x32xf32>
    %31 = tpu.matmul %28, %30, %cst_19 {dimension_numbers = #tpu.dot_dimension_numbers<[1], [0], [0], [1], [0, 0, 1, 1], [], []>} : vector<5x32xbf16>, vector<32x32xbf16>, vector<5x32xf32> -> vector<5x32xf32>
    %32 = arith.addf %26, %31 : vector<5x32xf32>
    %33 = vector.extract_strided_slice %8 {offsets = [7, 0], sizes = [5, 32], strides = [1, 1]} : vector<49x32xf32> to vector<5x32xf32>
    %34 = arith.truncf %33 : vector<5x32xf32> to vector<5x32xbf16>
    %35 = vector.extract_strided_slice %9 {offsets = [3, 0, 0], sizes = [1, 32, 32], strides = [1, 1, 1]} : vector<9x32x32xbf16> to vector<1x32x32xbf16>
    %36 = vector.shape_cast %35 : vector<1x32x32xbf16> to vector<32x32xbf16>
    %cst_20 = arith.constant dense<0.000000e+00> : vector<5x32xf32>
    %37 = tpu.matmul %34, %36, %cst_20 {dimension_numbers = #tpu.dot_dimension_numbers<[1], [0], [0], [1], [0, 0, 1, 1], [], []>} : vector<5x32xbf16>, vector<32x32xbf16>, vector<5x32xf32> -> vector<5x32xf32>
    %38 = arith.addf %32, %37 : vector<5x32xf32>
    %39 = vector.extract_strided_slice %8 {offsets = [8, 0], sizes = [5, 32], strides = [1, 1]} : vector<49x32xf32> to vector<5x32xf32>
    %40 = arith.truncf %39 : vector<5x32xf32> to vector<5x32xbf16>
    %41 = vector.extract_strided_slice %9 {offsets = [4, 0, 0], sizes = [1, 32, 32], strides = [1, 1, 1]} : vector<9x32x32xbf16> to vector<1x32x32xbf16>
    %42 = vector.shape_cast %41 : vector<1x32x32xbf16> to vector<32x32xbf16>
    %cst_21 = arith.constant dense<0.000000e+00> : vector<5x32xf32>
    %43 = tpu.matmul %40, %42, %cst_21 {dimension_numbers = #tpu.dot_dimension_numbers<[1], [0], [0], [1], [0, 0, 1, 1], [], []>} : vector<5x32xbf16>, vector<32x32xbf16>, vector<5x32xf32> -> vector<5x32xf32>
    %44 = arith.addf %38, %43 : vector<5x32xf32>
    %45 = vector.extract_strided_slice %8 {offsets = [9, 0], sizes = [5, 32], strides = [1, 1]} : vector<49x32xf32> to vector<5x32xf32>
    %46 = arith.truncf %45 : vector<5x32xf32> to vector<5x32xbf16>
    %47 = vector.extract_strided_slice %9 {offsets = [5, 0, 0], sizes = [1, 32, 32], strides = [1, 1, 1]} : vector<9x32x32xbf16> to vector<1x32x32xbf16>
    %48 = vector.shape_cast %47 : vector<1x32x32xbf16> to vector<32x32xbf16>
    %cst_22 = arith.constant dense<0.000000e+00> : vector<5x32xf32>
    %49 = tpu.matmul %46, %48, %cst_22 {dimension_numbers = #tpu.dot_dimension_numbers<[1], [0], [0], [1], [0, 0, 1, 1], [], []>} : vector<5x32xbf16>, vector<32x32xbf16>, vector<5x32xf32> -> vector<5x32xf32>
    %50 = arith.addf %44, %49 : vector<5x32xf32>
    %51 = vector.extract_strided_slice %8 {offsets = [14, 0], sizes = [5, 32], strides = [1, 1]} : vector<49x32xf32> to vector<5x32xf32>
    %52 = arith.truncf %51 : vector<5x32xf32> to vector<5x32xbf16>
    %53 = vector.extract_strided_slice %9 {offsets = [6, 0, 0], sizes = [1, 32, 32], strides = [1, 1, 1]} : vector<9x32x32xbf16> to vector<1x32x32xbf16>
    %54 = vector.shape_cast %53 : vector<1x32x32xbf16> to vector<32x32xbf16>
    %cst_23 = arith.constant dense<0.000000e+00> : vector<5x32xf32>
    %55 = tpu.matmul %52, %54, %cst_23 {dimension_numbers = #tpu.dot_dimension_numbers<[1], [0], [0], [1], [0, 0, 1, 1], [], []>} : vector<5x32xbf16>, vector<32x32xbf16>, vector<5x32xf32> -> vector<5x32xf32>
    %56 = arith.addf %50, %55 : vector<5x32xf32>
    %57 = vector.extract_strided_slice %8 {offsets = [15, 0], sizes = [5, 32], strides = [1, 1]} : vector<49x32xf32> to vector<5x32xf32>
    %58 = arith.truncf %57 : vector<5x32xf32> to vector<5x32xbf16>
    %59 = vector.extract_strided_slice %9 {offsets = [7, 0, 0], sizes = [1, 32, 32], strides = [1, 1, 1]} : vector<9x32x32xbf16> to vector<1x32x32xbf16>
    %60 = vector.shape_cast %59 : vector<1x32x32xbf16> to vector<32x32xbf16>
    %cst_24 = arith.constant dense<0.000000e+00> : vector<5x32xf32>
    %61 = tpu.matmul %58, %60, %cst_24 {dimension_numbers = #tpu.dot_dimension_numbers<[1], [0], [0], [1], [0, 0, 1, 1], [], []>} : vector<5x32xbf16>, vector<32x32xbf16>, vector<5x32xf32> -> vector<5x32xf32>
    %62 = arith.addf %56, %61 : vector<5x32xf32>
    %63 = vector.extract_strided_slice %8 {offsets = [16, 0], sizes = [5, 32], strides = [1, 1]} : vector<49x32xf32> to vector<5x32xf32>
    %64 = arith.truncf %63 : vector<5x32xf32> to vector<5x32xbf16>
    %65 = vector.extract_strided_slice %9 {offsets = [8, 0, 0], sizes = [1, 32, 32], strides = [1, 1, 1]} : vector<9x32x32xbf16> to vector<1x32x32xbf16>
    %66 = vector.shape_cast %65 : vector<1x32x32xbf16> to vector<32x32xbf16>
    %cst_25 = arith.constant dense<0.000000e+00> : vector<5x32xf32>
    %67 = tpu.matmul %64, %66, %cst_25 {dimension_numbers = #tpu.dot_dimension_numbers<[1], [0], [0], [1], [0, 0, 1, 1], [], []>} : vector<5x32xbf16>, vector<32x32xbf16>, vector<5x32xf32> -> vector<5x32xf32>
    %68 = arith.addf %62, %67 : vector<5x32xf32>
    %cst_26 = arith.constant 0.000000e+00 : f32
    %69 = vector.broadcast %cst_26 : f32 to vector<5x32xf32>
    %70 = arith.maximumf %68, %69 : vector<5x32xf32>
    %71 = vector.extract_strided_slice %70 {offsets = [0, 0], sizes = [1, 32], strides = [1, 1]} : vector<5x32xf32> to vector<1x32xf32>
    %72 = arith.truncf %71 : vector<1x32xf32> to vector<1x32xbf16>
    %73 = vector.extract_strided_slice %10 {offsets = [0, 0, 0], sizes = [1, 32, 32], strides = [1, 1, 1]} : vector<25x32x32xbf16> to vector<1x32x32xbf16>
    %74 = vector.shape_cast %73 : vector<1x32x32xbf16> to vector<32x32xbf16>
    %cst_27 = arith.constant dense<0.000000e+00> : vector<1x32xf32>
    %75 = tpu.matmul %72, %74, %cst_27 {dimension_numbers = #tpu.dot_dimension_numbers<[1], [0], [0], [1], [0, 0, 1, 1], [], []>} : vector<1x32xbf16>, vector<32x32xbf16>, vector<1x32xf32> -> vector<1x32xf32>
    %76 = arith.addf %14, %75 : vector<1x32xf32>
    %77 = vector.extract_strided_slice %70 {offsets = [1, 0], sizes = [1, 32], strides = [1, 1]} : vector<5x32xf32> to vector<1x32xf32>
    %78 = arith.truncf %77 : vector<1x32xf32> to vector<1x32xbf16>
    %79 = vector.extract_strided_slice %10 {offsets = [1, 0, 0], sizes = [1, 32, 32], strides = [1, 1, 1]} : vector<25x32x32xbf16> to vector<1x32x32xbf16>
    %80 = vector.shape_cast %79 : vector<1x32x32xbf16> to vector<32x32xbf16>
    %cst_28 = arith.constant dense<0.000000e+00> : vector<1x32xf32>
    %81 = tpu.matmul %78, %80, %cst_28 {dimension_numbers = #tpu.dot_dimension_numbers<[1], [0], [0], [1], [0, 0, 1, 1], [], []>} : vector<1x32xbf16>, vector<32x32xbf16>, vector<1x32xf32> -> vector<1x32xf32>
    %82 = arith.addf %76, %81 : vector<1x32xf32>
    %83 = vector.extract_strided_slice %70 {offsets = [2, 0], sizes = [1, 32], strides = [1, 1]} : vector<5x32xf32> to vector<1x32xf32>
    %84 = arith.truncf %83 : vector<1x32xf32> to vector<1x32xbf16>
    %85 = vector.extract_strided_slice %10 {offsets = [2, 0, 0], sizes = [1, 32, 32], strides = [1, 1, 1]} : vector<25x32x32xbf16> to vector<1x32x32xbf16>
    %86 = vector.shape_cast %85 : vector<1x32x32xbf16> to vector<32x32xbf16>
    %cst_29 = arith.constant dense<0.000000e+00> : vector<1x32xf32>
    %87 = tpu.matmul %84, %86, %cst_29 {dimension_numbers = #tpu.dot_dimension_numbers<[1], [0], [0], [1], [0, 0, 1, 1], [], []>} : vector<1x32xbf16>, vector<32x32xbf16>, vector<1x32xf32> -> vector<1x32xf32>
    %88 = arith.addf %82, %87 : vector<1x32xf32>
    %89 = vector.extract_strided_slice %70 {offsets = [3, 0], sizes = [1, 32], strides = [1, 1]} : vector<5x32xf32> to vector<1x32xf32>
    %90 = arith.truncf %89 : vector<1x32xf32> to vector<1x32xbf16>
    %91 = vector.extract_strided_slice %10 {offsets = [3, 0, 0], sizes = [1, 32, 32], strides = [1, 1, 1]} : vector<25x32x32xbf16> to vector<1x32x32xbf16>
    %92 = vector.shape_cast %91 : vector<1x32x32xbf16> to vector<32x32xbf16>
    %cst_30 = arith.constant dense<0.000000e+00> : vector<1x32xf32>
    %93 = tpu.matmul %90, %92, %cst_30 {dimension_numbers = #tpu.dot_dimension_numbers<[1], [0], [0], [1], [0, 0, 1, 1], [], []>} : vector<1x32xbf16>, vector<32x32xbf16>, vector<1x32xf32> -> vector<1x32xf32>
    %94 = arith.addf %88, %93 : vector<1x32xf32>
    %95 = vector.extract_strided_slice %70 {offsets = [4, 0], sizes = [1, 32], strides = [1, 1]} : vector<5x32xf32> to vector<1x32xf32>
    %96 = arith.truncf %95 : vector<1x32xf32> to vector<1x32xbf16>
    %97 = vector.extract_strided_slice %10 {offsets = [4, 0, 0], sizes = [1, 32, 32], strides = [1, 1, 1]} : vector<25x32x32xbf16> to vector<1x32x32xbf16>
    %98 = vector.shape_cast %97 : vector<1x32x32xbf16> to vector<32x32xbf16>
    %cst_31 = arith.constant dense<0.000000e+00> : vector<1x32xf32>
    %99 = tpu.matmul %96, %98, %cst_31 {dimension_numbers = #tpu.dot_dimension_numbers<[1], [0], [0], [1], [0, 0, 1, 1], [], []>} : vector<1x32xbf16>, vector<32x32xbf16>, vector<1x32xf32> -> vector<1x32xf32>
    %100 = arith.addf %94, %99 : vector<1x32xf32>
    %101 = vector.extract_strided_slice %8 {offsets = [7, 0], sizes = [5, 32], strides = [1, 1]} : vector<49x32xf32> to vector<5x32xf32>
    %102 = arith.truncf %101 : vector<5x32xf32> to vector<5x32xbf16>
    %103 = vector.extract_strided_slice %9 {offsets = [0, 0, 0], sizes = [1, 32, 32], strides = [1, 1, 1]} : vector<9x32x32xbf16> to vector<1x32x32xbf16>
    %104 = vector.shape_cast %103 : vector<1x32x32xbf16> to vector<32x32xbf16>
    %cst_32 = arith.constant dense<0.000000e+00> : vector<5x32xf32>
    %105 = tpu.matmul %102, %104, %cst_32 {dimension_numbers = #tpu.dot_dimension_numbers<[1], [0], [0], [1], [0, 0, 1, 1], [], []>} : vector<5x32xbf16>, vector<32x32xbf16>, vector<5x32xf32> -> vector<5x32xf32>
    %106 = arith.addf %13, %105 : vector<5x32xf32>
    %107 = vector.extract_strided_slice %8 {offsets = [8, 0], sizes = [5, 32], strides = [1, 1]} : vector<49x32xf32> to vector<5x32xf32>
    %108 = arith.truncf %107 : vector<5x32xf32> to vector<5x32xbf16>
    %109 = vector.extract_strided_slice %9 {offsets = [1, 0, 0], sizes = [1, 32, 32], strides = [1, 1, 1]} : vector<9x32x32xbf16> to vector<1x32x32xbf16>
    %110 = vector.shape_cast %109 : vector<1x32x32xbf16> to vector<32x32xbf16>
    %cst_33 = arith.constant dense<0.000000e+00> : vector<5x32xf32>
    %111 = tpu.matmul %108, %110, %cst_33 {dimension_numbers = #tpu.dot_dimension_numbers<[1], [0], [0], [1], [0, 0, 1, 1], [], []>} : vector<5x32xbf16>, vector<32x32xbf16>, vector<5x32xf32> -> vector<5x32xf32>
    %112 = arith.addf %106, %111 : vector<5x32xf32>
    %113 = vector.extract_strided_slice %8 {offsets = [9, 0], sizes = [5, 32], strides = [1, 1]} : vector<49x32xf32> to vector<5x32xf32>
    %114 = arith.truncf %113 : vector<5x32xf32> to vector<5x32xbf16>
    %115 = vector.extract_strided_slice %9 {offsets = [2, 0, 0], sizes = [1, 32, 32], strides = [1, 1, 1]} : vector<9x32x32xbf16> to vector<1x32x32xbf16>
    %116 = vector.shape_cast %115 : vector<1x32x32xbf16> to vector<32x32xbf16>
    %cst_34 = arith.constant dense<0.000000e+00> : vector<5x32xf32>
    %117 = tpu.matmul %114, %116, %cst_34 {dimension_numbers = #tpu.dot_dimension_numbers<[1], [0], [0], [1], [0, 0, 1, 1], [], []>} : vector<5x32xbf16>, vector<32x32xbf16>, vector<5x32xf32> -> vector<5x32xf32>
    %118 = arith.addf %112, %117 : vector<5x32xf32>
    %119 = vector.extract_strided_slice %8 {offsets = [14, 0], sizes = [5, 32], strides = [1, 1]} : vector<49x32xf32> to vector<5x32xf32>
    %120 = arith.truncf %119 : vector<5x32xf32> to vector<5x32xbf16>
    %121 = vector.extract_strided_slice %9 {offsets = [3, 0, 0], sizes = [1, 32, 32], strides = [1, 1, 1]} : vector<9x32x32xbf16> to vector<1x32x32xbf16>
    %122 = vector.shape_cast %121 : vector<1x32x32xbf16> to vector<32x32xbf16>
    %cst_35 = arith.constant dense<0.000000e+00> : vector<5x32xf32>
    %123 = tpu.matmul %120, %122, %cst_35 {dimension_numbers = #tpu.dot_dimension_numbers<[1], [0], [0], [1], [0, 0, 1, 1], [], []>} : vector<5x32xbf16>, vector<32x32xbf16>, vector<5x32xf32> -> vector<5x32xf32>
    %124 = arith.addf %118, %123 : vector<5x32xf32>
    %125 = vector.extract_strided_slice %8 {offsets = [15, 0], sizes = [5, 32], strides = [1, 1]} : vector<49x32xf32> to vector<5x32xf32>
    %126 = arith.truncf %125 : vector<5x32xf32> to vector<5x32xbf16>
    %127 = vector.extract_strided_slice %9 {offsets = [4, 0, 0], sizes = [1, 32, 32], strides = [1, 1, 1]} : vector<9x32x32xbf16> to vector<1x32x32xbf16>
    %128 = vector.shape_cast %127 : vector<1x32x32xbf16> to vector<32x32xbf16>
    %cst_36 = arith.constant dense<0.000000e+00> : vector<5x32xf32>
    %129 = tpu.matmul %126, %128, %cst_36 {dimension_numbers = #tpu.dot_dimension_numbers<[1], [0], [0], [1], [0, 0, 1, 1], [], []>} : vector<5x32xbf16>, vector<32x32xbf16>, vector<5x32xf32> -> vector<5x32xf32>
    %130 = arith.addf %124, %129 : vector<5x32xf32>
    %131 = vector.extract_strided_slice %8 {offsets = [16, 0], sizes = [5, 32], strides = [1, 1]} : vector<49x32xf32> to vector<5x32xf32>
    %132 = arith.truncf %131 : vector<5x32xf32> to vector<5x32xbf16>
    %133 = vector.extract_strided_slice %9 {offsets = [5, 0, 0], sizes = [1, 32, 32], strides = [1, 1, 1]} : vector<9x32x32xbf16> to vector<1x32x32xbf16>
    %134 = vector.shape_cast %133 : vector<1x32x32xbf16> to vector<32x32xbf16>
    %cst_37 = arith.constant dense<0.000000e+00> : vector<5x32xf32>
    %135 = tpu.matmul %132, %134, %cst_37 {dimension_numbers = #tpu.dot_dimension_numbers<[1], [0], [0], [1], [0, 0, 1, 1], [], []>} : vector<5x32xbf16>, vector<32x32xbf16>, vector<5x32xf32> -> vector<5x32xf32>
    %136 = arith.addf %130, %135 : vector<5x32xf32>
    %137 = vector.extract_strided_slice %8 {offsets = [21, 0], sizes = [5, 32], strides = [1, 1]} : vector<49x32xf32> to vector<5x32xf32>
    %138 = arith.truncf %137 : vector<5x32xf32> to vector<5x32xbf16>
    %139 = vector.extract_strided_slice %9 {offsets = [6, 0, 0], sizes = [1, 32, 32], strides = [1, 1, 1]} : vector<9x32x32xbf16> to vector<1x32x32xbf16>
    %140 = vector.shape_cast %139 : vector<1x32x32xbf16> to vector<32x32xbf16>
    %cst_38 = arith.constant dense<0.000000e+00> : vector<5x32xf32>
    %141 = tpu.matmul %138, %140, %cst_38 {dimension_numbers = #tpu.dot_dimension_numbers<[1], [0], [0], [1], [0, 0, 1, 1], [], []>} : vector<5x32xbf16>, vector<32x32xbf16>, vector<5x32xf32> -> vector<5x32xf32>
    %142 = arith.addf %136, %141 : vector<5x32xf32>
    %143 = vector.extract_strided_slice %8 {offsets = [22, 0], sizes = [5, 32], strides = [1, 1]} : vector<49x32xf32> to vector<5x32xf32>
    %144 = arith.truncf %143 : vector<5x32xf32> to vector<5x32xbf16>
    %145 = vector.extract_strided_slice %9 {offsets = [7, 0, 0], sizes = [1, 32, 32], strides = [1, 1, 1]} : vector<9x32x32xbf16> to vector<1x32x32xbf16>
    %146 = vector.shape_cast %145 : vector<1x32x32xbf16> to vector<32x32xbf16>
    %cst_39 = arith.constant dense<0.000000e+00> : vector<5x32xf32>
    %147 = tpu.matmul %144, %146, %cst_39 {dimension_numbers = #tpu.dot_dimension_numbers<[1], [0], [0], [1], [0, 0, 1, 1], [], []>} : vector<5x32xbf16>, vector<32x32xbf16>, vector<5x32xf32> -> vector<5x32xf32>
    %148 = arith.addf %142, %147 : vector<5x32xf32>
    %149 = vector.extract_strided_slice %8 {offsets = [23, 0], sizes = [5, 32], strides = [1, 1]} : vector<49x32xf32> to vector<5x32xf32>
    %150 = arith.truncf %149 : vector<5x32xf32> to vector<5x32xbf16>
    %151 = vector.extract_strided_slice %9 {offsets = [8, 0, 0], sizes = [1, 32, 32], strides = [1, 1, 1]} : vector<9x32x32xbf16> to vector<1x32x32xbf16>
    %152 = vector.shape_cast %151 : vector<1x32x32xbf16> to vector<32x32xbf16>
    %cst_40 = arith.constant dense<0.000000e+00> : vector<5x32xf32>
    %153 = tpu.matmul %150, %152, %cst_40 {dimension_numbers = #tpu.dot_dimension_numbers<[1], [0], [0], [1], [0, 0, 1, 1], [], []>} : vector<5x32xbf16>, vector<32x32xbf16>, vector<5x32xf32> -> vector<5x32xf32>
    %154 = arith.addf %148, %153 : vector<5x32xf32>
    %cst_41 = arith.constant 0.000000e+00 : f32
    %155 = vector.broadcast %cst_41 : f32 to vector<5x32xf32>
    %156 = arith.maximumf %154, %155 : vector<5x32xf32>
    %157 = vector.extract_strided_slice %156 {offsets = [0, 0], sizes = [1, 32], strides = [1, 1]} : vector<5x32xf32> to vector<1x32xf32>
    %158 = arith.truncf %157 : vector<1x32xf32> to vector<1x32xbf16>
    %159 = vector.extract_strided_slice %10 {offsets = [5, 0, 0], sizes = [1, 32, 32], strides = [1, 1, 1]} : vector<25x32x32xbf16> to vector<1x32x32xbf16>
    %160 = vector.shape_cast %159 : vector<1x32x32xbf16> to vector<32x32xbf16>
    %cst_42 = arith.constant dense<0.000000e+00> : vector<1x32xf32>
    %161 = tpu.matmul %158, %160, %cst_42 {dimension_numbers = #tpu.dot_dimension_numbers<[1], [0], [0], [1], [0, 0, 1, 1], [], []>} : vector<1x32xbf16>, vector<32x32xbf16>, vector<1x32xf32> -> vector<1x32xf32>
    %162 = arith.addf %100, %161 : vector<1x32xf32>
    %163 = vector.extract_strided_slice %156 {offsets = [1, 0], sizes = [1, 32], strides = [1, 1]} : vector<5x32xf32> to vector<1x32xf32>
    %164 = arith.truncf %163 : vector<1x32xf32> to vector<1x32xbf16>
    %165 = vector.extract_strided_slice %10 {offsets = [6, 0, 0], sizes = [1, 32, 32], strides = [1, 1, 1]} : vector<25x32x32xbf16> to vector<1x32x32xbf16>
    %166 = vector.shape_cast %165 : vector<1x32x32xbf16> to vector<32x32xbf16>
    %cst_43 = arith.constant dense<0.000000e+00> : vector<1x32xf32>
    %167 = tpu.matmul %164, %166, %cst_43 {dimension_numbers = #tpu.dot_dimension_numbers<[1], [0], [0], [1], [0, 0, 1, 1], [], []>} : vector<1x32xbf16>, vector<32x32xbf16>, vector<1x32xf32> -> vector<1x32xf32>
    %168 = arith.addf %162, %167 : vector<1x32xf32>
    %169 = vector.extract_strided_slice %156 {offsets = [2, 0], sizes = [1, 32], strides = [1, 1]} : vector<5x32xf32> to vector<1x32xf32>
    %170 = arith.truncf %169 : vector<1x32xf32> to vector<1x32xbf16>
    %171 = vector.extract_strided_slice %10 {offsets = [7, 0, 0], sizes = [1, 32, 32], strides = [1, 1, 1]} : vector<25x32x32xbf16> to vector<1x32x32xbf16>
    %172 = vector.shape_cast %171 : vector<1x32x32xbf16> to vector<32x32xbf16>
    %cst_44 = arith.constant dense<0.000000e+00> : vector<1x32xf32>
    %173 = tpu.matmul %170, %172, %cst_44 {dimension_numbers = #tpu.dot_dimension_numbers<[1], [0], [0], [1], [0, 0, 1, 1], [], []>} : vector<1x32xbf16>, vector<32x32xbf16>, vector<1x32xf32> -> vector<1x32xf32>
    %174 = arith.addf %168, %173 : vector<1x32xf32>
    %175 = vector.extract_strided_slice %156 {offsets = [3, 0], sizes = [1, 32], strides = [1, 1]} : vector<5x32xf32> to vector<1x32xf32>
    %176 = arith.truncf %175 : vector<1x32xf32> to vector<1x32xbf16>
    %177 = vector.extract_strided_slice %10 {offsets = [8, 0, 0], sizes = [1, 32, 32], strides = [1, 1, 1]} : vector<25x32x32xbf16> to vector<1x32x32xbf16>
    %178 = vector.shape_cast %177 : vector<1x32x32xbf16> to vector<32x32xbf16>
    %cst_45 = arith.constant dense<0.000000e+00> : vector<1x32xf32>
    %179 = tpu.matmul %176, %178, %cst_45 {dimension_numbers = #tpu.dot_dimension_numbers<[1], [0], [0], [1], [0, 0, 1, 1], [], []>} : vector<1x32xbf16>, vector<32x32xbf16>, vector<1x32xf32> -> vector<1x32xf32>
    %180 = arith.addf %174, %179 : vector<1x32xf32>
    %181 = vector.extract_strided_slice %156 {offsets = [4, 0], sizes = [1, 32], strides = [1, 1]} : vector<5x32xf32> to vector<1x32xf32>
    %182 = arith.truncf %181 : vector<1x32xf32> to vector<1x32xbf16>
    %183 = vector.extract_strided_slice %10 {offsets = [9, 0, 0], sizes = [1, 32, 32], strides = [1, 1, 1]} : vector<25x32x32xbf16> to vector<1x32x32xbf16>
    %184 = vector.shape_cast %183 : vector<1x32x32xbf16> to vector<32x32xbf16>
    %cst_46 = arith.constant dense<0.000000e+00> : vector<1x32xf32>
    %185 = tpu.matmul %182, %184, %cst_46 {dimension_numbers = #tpu.dot_dimension_numbers<[1], [0], [0], [1], [0, 0, 1, 1], [], []>} : vector<1x32xbf16>, vector<32x32xbf16>, vector<1x32xf32> -> vector<1x32xf32>
    %186 = arith.addf %180, %185 : vector<1x32xf32>
    %187 = vector.extract_strided_slice %8 {offsets = [14, 0], sizes = [5, 32], strides = [1, 1]} : vector<49x32xf32> to vector<5x32xf32>
    %188 = arith.truncf %187 : vector<5x32xf32> to vector<5x32xbf16>
    %189 = vector.extract_strided_slice %9 {offsets = [0, 0, 0], sizes = [1, 32, 32], strides = [1, 1, 1]} : vector<9x32x32xbf16> to vector<1x32x32xbf16>
    %190 = vector.shape_cast %189 : vector<1x32x32xbf16> to vector<32x32xbf16>
    %cst_47 = arith.constant dense<0.000000e+00> : vector<5x32xf32>
    %191 = tpu.matmul %188, %190, %cst_47 {dimension_numbers = #tpu.dot_dimension_numbers<[1], [0], [0], [1], [0, 0, 1, 1], [], []>} : vector<5x32xbf16>, vector<32x32xbf16>, vector<5x32xf32> -> vector<5x32xf32>
    %192 = arith.addf %13, %191 : vector<5x32xf32>
    %193 = vector.extract_strided_slice %8 {offsets = [15, 0], sizes = [5, 32], strides = [1, 1]} : vector<49x32xf32> to vector<5x32xf32>
    %194 = arith.truncf %193 : vector<5x32xf32> to vector<5x32xbf16>
    %195 = vector.extract_strided_slice %9 {offsets = [1, 0, 0], sizes = [1, 32, 32], strides = [1, 1, 1]} : vector<9x32x32xbf16> to vector<1x32x32xbf16>
    %196 = vector.shape_cast %195 : vector<1x32x32xbf16> to vector<32x32xbf16>
    %cst_48 = arith.constant dense<0.000000e+00> : vector<5x32xf32>
    %197 = tpu.matmul %194, %196, %cst_48 {dimension_numbers = #tpu.dot_dimension_numbers<[1], [0], [0], [1], [0, 0, 1, 1], [], []>} : vector<5x32xbf16>, vector<32x32xbf16>, vector<5x32xf32> -> vector<5x32xf32>
    %198 = arith.addf %192, %197 : vector<5x32xf32>
    %199 = vector.extract_strided_slice %8 {offsets = [16, 0], sizes = [5, 32], strides = [1, 1]} : vector<49x32xf32> to vector<5x32xf32>
    %200 = arith.truncf %199 : vector<5x32xf32> to vector<5x32xbf16>
    %201 = vector.extract_strided_slice %9 {offsets = [2, 0, 0], sizes = [1, 32, 32], strides = [1, 1, 1]} : vector<9x32x32xbf16> to vector<1x32x32xbf16>
    %202 = vector.shape_cast %201 : vector<1x32x32xbf16> to vector<32x32xbf16>
    %cst_49 = arith.constant dense<0.000000e+00> : vector<5x32xf32>
    %203 = tpu.matmul %200, %202, %cst_49 {dimension_numbers = #tpu.dot_dimension_numbers<[1], [0], [0], [1], [0, 0, 1, 1], [], []>} : vector<5x32xbf16>, vector<32x32xbf16>, vector<5x32xf32> -> vector<5x32xf32>
    %204 = arith.addf %198, %203 : vector<5x32xf32>
    %205 = vector.extract_strided_slice %8 {offsets = [21, 0], sizes = [5, 32], strides = [1, 1]} : vector<49x32xf32> to vector<5x32xf32>
    %206 = arith.truncf %205 : vector<5x32xf32> to vector<5x32xbf16>
    %207 = vector.extract_strided_slice %9 {offsets = [3, 0, 0], sizes = [1, 32, 32], strides = [1, 1, 1]} : vector<9x32x32xbf16> to vector<1x32x32xbf16>
    %208 = vector.shape_cast %207 : vector<1x32x32xbf16> to vector<32x32xbf16>
    %cst_50 = arith.constant dense<0.000000e+00> : vector<5x32xf32>
    %209 = tpu.matmul %206, %208, %cst_50 {dimension_numbers = #tpu.dot_dimension_numbers<[1], [0], [0], [1], [0, 0, 1, 1], [], []>} : vector<5x32xbf16>, vector<32x32xbf16>, vector<5x32xf32> -> vector<5x32xf32>
    %210 = arith.addf %204, %209 : vector<5x32xf32>
    %211 = vector.extract_strided_slice %8 {offsets = [22, 0], sizes = [5, 32], strides = [1, 1]} : vector<49x32xf32> to vector<5x32xf32>
    %212 = arith.truncf %211 : vector<5x32xf32> to vector<5x32xbf16>
    %213 = vector.extract_strided_slice %9 {offsets = [4, 0, 0], sizes = [1, 32, 32], strides = [1, 1, 1]} : vector<9x32x32xbf16> to vector<1x32x32xbf16>
    %214 = vector.shape_cast %213 : vector<1x32x32xbf16> to vector<32x32xbf16>
    %cst_51 = arith.constant dense<0.000000e+00> : vector<5x32xf32>
    %215 = tpu.matmul %212, %214, %cst_51 {dimension_numbers = #tpu.dot_dimension_numbers<[1], [0], [0], [1], [0, 0, 1, 1], [], []>} : vector<5x32xbf16>, vector<32x32xbf16>, vector<5x32xf32> -> vector<5x32xf32>
    %216 = arith.addf %210, %215 : vector<5x32xf32>
    %217 = vector.extract_strided_slice %8 {offsets = [23, 0], sizes = [5, 32], strides = [1, 1]} : vector<49x32xf32> to vector<5x32xf32>
    %218 = arith.truncf %217 : vector<5x32xf32> to vector<5x32xbf16>
    %219 = vector.extract_strided_slice %9 {offsets = [5, 0, 0], sizes = [1, 32, 32], strides = [1, 1, 1]} : vector<9x32x32xbf16> to vector<1x32x32xbf16>
    %220 = vector.shape_cast %219 : vector<1x32x32xbf16> to vector<32x32xbf16>
    %cst_52 = arith.constant dense<0.000000e+00> : vector<5x32xf32>
    %221 = tpu.matmul %218, %220, %cst_52 {dimension_numbers = #tpu.dot_dimension_numbers<[1], [0], [0], [1], [0, 0, 1, 1], [], []>} : vector<5x32xbf16>, vector<32x32xbf16>, vector<5x32xf32> -> vector<5x32xf32>
    %222 = arith.addf %216, %221 : vector<5x32xf32>
    %223 = vector.extract_strided_slice %8 {offsets = [28, 0], sizes = [5, 32], strides = [1, 1]} : vector<49x32xf32> to vector<5x32xf32>
    %224 = arith.truncf %223 : vector<5x32xf32> to vector<5x32xbf16>
    %225 = vector.extract_strided_slice %9 {offsets = [6, 0, 0], sizes = [1, 32, 32], strides = [1, 1, 1]} : vector<9x32x32xbf16> to vector<1x32x32xbf16>
    %226 = vector.shape_cast %225 : vector<1x32x32xbf16> to vector<32x32xbf16>
    %cst_53 = arith.constant dense<0.000000e+00> : vector<5x32xf32>
    %227 = tpu.matmul %224, %226, %cst_53 {dimension_numbers = #tpu.dot_dimension_numbers<[1], [0], [0], [1], [0, 0, 1, 1], [], []>} : vector<5x32xbf16>, vector<32x32xbf16>, vector<5x32xf32> -> vector<5x32xf32>
    %228 = arith.addf %222, %227 : vector<5x32xf32>
    %229 = vector.extract_strided_slice %8 {offsets = [29, 0], sizes = [5, 32], strides = [1, 1]} : vector<49x32xf32> to vector<5x32xf32>
    %230 = arith.truncf %229 : vector<5x32xf32> to vector<5x32xbf16>
    %231 = vector.extract_strided_slice %9 {offsets = [7, 0, 0], sizes = [1, 32, 32], strides = [1, 1, 1]} : vector<9x32x32xbf16> to vector<1x32x32xbf16>
    %232 = vector.shape_cast %231 : vector<1x32x32xbf16> to vector<32x32xbf16>
    %cst_54 = arith.constant dense<0.000000e+00> : vector<5x32xf32>
    %233 = tpu.matmul %230, %232, %cst_54 {dimension_numbers = #tpu.dot_dimension_numbers<[1], [0], [0], [1], [0, 0, 1, 1], [], []>} : vector<5x32xbf16>, vector<32x32xbf16>, vector<5x32xf32> -> vector<5x32xf32>
    %234 = arith.addf %228, %233 : vector<5x32xf32>
    %235 = vector.extract_strided_slice %8 {offsets = [30, 0], sizes = [5, 32], strides = [1, 1]} : vector<49x32xf32> to vector<5x32xf32>
    %236 = arith.truncf %235 : vector<5x32xf32> to vector<5x32xbf16>
    %237 = vector.extract_strided_slice %9 {offsets = [8, 0, 0], sizes = [1, 32, 32], strides = [1, 1, 1]} : vector<9x32x32xbf16> to vector<1x32x32xbf16>
    %238 = vector.shape_cast %237 : vector<1x32x32xbf16> to vector<32x32xbf16>
    %cst_55 = arith.constant dense<0.000000e+00> : vector<5x32xf32>
    %239 = tpu.matmul %236, %238, %cst_55 {dimension_numbers = #tpu.dot_dimension_numbers<[1], [0], [0], [1], [0, 0, 1, 1], [], []>} : vector<5x32xbf16>, vector<32x32xbf16>, vector<5x32xf32> -> vector<5x32xf32>
    %240 = arith.addf %234, %239 : vector<5x32xf32>
    %cst_56 = arith.constant 0.000000e+00 : f32
    %241 = vector.broadcast %cst_56 : f32 to vector<5x32xf32>
    %242 = arith.maximumf %240, %241 : vector<5x32xf32>
    %243 = vector.extract_strided_slice %242 {offsets = [0, 0], sizes = [1, 32], strides = [1, 1]} : vector<5x32xf32> to vector<1x32xf32>
    %244 = arith.truncf %243 : vector<1x32xf32> to vector<1x32xbf16>
    %245 = vector.extract_strided_slice %10 {offsets = [10, 0, 0], sizes = [1, 32, 32], strides = [1, 1, 1]} : vector<25x32x32xbf16> to vector<1x32x32xbf16>
    %246 = vector.shape_cast %245 : vector<1x32x32xbf16> to vector<32x32xbf16>
    %cst_57 = arith.constant dense<0.000000e+00> : vector<1x32xf32>
    %247 = tpu.matmul %244, %246, %cst_57 {dimension_numbers = #tpu.dot_dimension_numbers<[1], [0], [0], [1], [0, 0, 1, 1], [], []>} : vector<1x32xbf16>, vector<32x32xbf16>, vector<1x32xf32> -> vector<1x32xf32>
    %248 = arith.addf %186, %247 : vector<1x32xf32>
    %249 = vector.extract_strided_slice %242 {offsets = [1, 0], sizes = [1, 32], strides = [1, 1]} : vector<5x32xf32> to vector<1x32xf32>
    %250 = arith.truncf %249 : vector<1x32xf32> to vector<1x32xbf16>
    %251 = vector.extract_strided_slice %10 {offsets = [11, 0, 0], sizes = [1, 32, 32], strides = [1, 1, 1]} : vector<25x32x32xbf16> to vector<1x32x32xbf16>
    %252 = vector.shape_cast %251 : vector<1x32x32xbf16> to vector<32x32xbf16>
    %cst_58 = arith.constant dense<0.000000e+00> : vector<1x32xf32>
    %253 = tpu.matmul %250, %252, %cst_58 {dimension_numbers = #tpu.dot_dimension_numbers<[1], [0], [0], [1], [0, 0, 1, 1], [], []>} : vector<1x32xbf16>, vector<32x32xbf16>, vector<1x32xf32> -> vector<1x32xf32>
    %254 = arith.addf %248, %253 : vector<1x32xf32>
    %255 = vector.extract_strided_slice %242 {offsets = [2, 0], sizes = [1, 32], strides = [1, 1]} : vector<5x32xf32> to vector<1x32xf32>
    %256 = arith.truncf %255 : vector<1x32xf32> to vector<1x32xbf16>
    %257 = vector.extract_strided_slice %10 {offsets = [12, 0, 0], sizes = [1, 32, 32], strides = [1, 1, 1]} : vector<25x32x32xbf16> to vector<1x32x32xbf16>
    %258 = vector.shape_cast %257 : vector<1x32x32xbf16> to vector<32x32xbf16>
    %cst_59 = arith.constant dense<0.000000e+00> : vector<1x32xf32>
    %259 = tpu.matmul %256, %258, %cst_59 {dimension_numbers = #tpu.dot_dimension_numbers<[1], [0], [0], [1], [0, 0, 1, 1], [], []>} : vector<1x32xbf16>, vector<32x32xbf16>, vector<1x32xf32> -> vector<1x32xf32>
    %260 = arith.addf %254, %259 : vector<1x32xf32>
    %261 = vector.extract_strided_slice %242 {offsets = [3, 0], sizes = [1, 32], strides = [1, 1]} : vector<5x32xf32> to vector<1x32xf32>
    %262 = arith.truncf %261 : vector<1x32xf32> to vector<1x32xbf16>
    %263 = vector.extract_strided_slice %10 {offsets = [13, 0, 0], sizes = [1, 32, 32], strides = [1, 1, 1]} : vector<25x32x32xbf16> to vector<1x32x32xbf16>
    %264 = vector.shape_cast %263 : vector<1x32x32xbf16> to vector<32x32xbf16>
    %cst_60 = arith.constant dense<0.000000e+00> : vector<1x32xf32>
    %265 = tpu.matmul %262, %264, %cst_60 {dimension_numbers = #tpu.dot_dimension_numbers<[1], [0], [0], [1], [0, 0, 1, 1], [], []>} : vector<1x32xbf16>, vector<32x32xbf16>, vector<1x32xf32> -> vector<1x32xf32>
    %266 = arith.addf %260, %265 : vector<1x32xf32>
    %267 = vector.extract_strided_slice %242 {offsets = [4, 0], sizes = [1, 32], strides = [1, 1]} : vector<5x32xf32> to vector<1x32xf32>
    %268 = arith.truncf %267 : vector<1x32xf32> to vector<1x32xbf16>
    %269 = vector.extract_strided_slice %10 {offsets = [14, 0, 0], sizes = [1, 32, 32], strides = [1, 1, 1]} : vector<25x32x32xbf16> to vector<1x32x32xbf16>
    %270 = vector.shape_cast %269 : vector<1x32x32xbf16> to vector<32x32xbf16>
    %cst_61 = arith.constant dense<0.000000e+00> : vector<1x32xf32>
    %271 = tpu.matmul %268, %270, %cst_61 {dimension_numbers = #tpu.dot_dimension_numbers<[1], [0], [0], [1], [0, 0, 1, 1], [], []>} : vector<1x32xbf16>, vector<32x32xbf16>, vector<1x32xf32> -> vector<1x32xf32>
    %272 = arith.addf %266, %271 : vector<1x32xf32>
    %273 = vector.extract_strided_slice %8 {offsets = [21, 0], sizes = [5, 32], strides = [1, 1]} : vector<49x32xf32> to vector<5x32xf32>
    %274 = arith.truncf %273 : vector<5x32xf32> to vector<5x32xbf16>
    %275 = vector.extract_strided_slice %9 {offsets = [0, 0, 0], sizes = [1, 32, 32], strides = [1, 1, 1]} : vector<9x32x32xbf16> to vector<1x32x32xbf16>
    %276 = vector.shape_cast %275 : vector<1x32x32xbf16> to vector<32x32xbf16>
    %cst_62 = arith.constant dense<0.000000e+00> : vector<5x32xf32>
    %277 = tpu.matmul %274, %276, %cst_62 {dimension_numbers = #tpu.dot_dimension_numbers<[1], [0], [0], [1], [0, 0, 1, 1], [], []>} : vector<5x32xbf16>, vector<32x32xbf16>, vector<5x32xf32> -> vector<5x32xf32>
    %278 = arith.addf %13, %277 : vector<5x32xf32>
    %279 = vector.extract_strided_slice %8 {offsets = [22, 0], sizes = [5, 32], strides = [1, 1]} : vector<49x32xf32> to vector<5x32xf32>
    %280 = arith.truncf %279 : vector<5x32xf32> to vector<5x32xbf16>
    %281 = vector.extract_strided_slice %9 {offsets = [1, 0, 0], sizes = [1, 32, 32], strides = [1, 1, 1]} : vector<9x32x32xbf16> to vector<1x32x32xbf16>
    %282 = vector.shape_cast %281 : vector<1x32x32xbf16> to vector<32x32xbf16>
    %cst_63 = arith.constant dense<0.000000e+00> : vector<5x32xf32>
    %283 = tpu.matmul %280, %282, %cst_63 {dimension_numbers = #tpu.dot_dimension_numbers<[1], [0], [0], [1], [0, 0, 1, 1], [], []>} : vector<5x32xbf16>, vector<32x32xbf16>, vector<5x32xf32> -> vector<5x32xf32>
    %284 = arith.addf %278, %283 : vector<5x32xf32>
    %285 = vector.extract_strided_slice %8 {offsets = [23, 0], sizes = [5, 32], strides = [1, 1]} : vector<49x32xf32> to vector<5x32xf32>
    %286 = arith.truncf %285 : vector<5x32xf32> to vector<5x32xbf16>
    %287 = vector.extract_strided_slice %9 {offsets = [2, 0, 0], sizes = [1, 32, 32], strides = [1, 1, 1]} : vector<9x32x32xbf16> to vector<1x32x32xbf16>
    %288 = vector.shape_cast %287 : vector<1x32x32xbf16> to vector<32x32xbf16>
    %cst_64 = arith.constant dense<0.000000e+00> : vector<5x32xf32>
    %289 = tpu.matmul %286, %288, %cst_64 {dimension_numbers = #tpu.dot_dimension_numbers<[1], [0], [0], [1], [0, 0, 1, 1], [], []>} : vector<5x32xbf16>, vector<32x32xbf16>, vector<5x32xf32> -> vector<5x32xf32>
    %290 = arith.addf %284, %289 : vector<5x32xf32>
    %291 = vector.extract_strided_slice %8 {offsets = [28, 0], sizes = [5, 32], strides = [1, 1]} : vector<49x32xf32> to vector<5x32xf32>
    %292 = arith.truncf %291 : vector<5x32xf32> to vector<5x32xbf16>
    %293 = vector.extract_strided_slice %9 {offsets = [3, 0, 0], sizes = [1, 32, 32], strides = [1, 1, 1]} : vector<9x32x32xbf16> to vector<1x32x32xbf16>
    %294 = vector.shape_cast %293 : vector<1x32x32xbf16> to vector<32x32xbf16>
    %cst_65 = arith.constant dense<0.000000e+00> : vector<5x32xf32>
    %295 = tpu.matmul %292, %294, %cst_65 {dimension_numbers = #tpu.dot_dimension_numbers<[1], [0], [0], [1], [0, 0, 1, 1], [], []>} : vector<5x32xbf16>, vector<32x32xbf16>, vector<5x32xf32> -> vector<5x32xf32>
    %296 = arith.addf %290, %295 : vector<5x32xf32>
    %297 = vector.extract_strided_slice %8 {offsets = [29, 0], sizes = [5, 32], strides = [1, 1]} : vector<49x32xf32> to vector<5x32xf32>
    %298 = arith.truncf %297 : vector<5x32xf32> to vector<5x32xbf16>
    %299 = vector.extract_strided_slice %9 {offsets = [4, 0, 0], sizes = [1, 32, 32], strides = [1, 1, 1]} : vector<9x32x32xbf16> to vector<1x32x32xbf16>
    %300 = vector.shape_cast %299 : vector<1x32x32xbf16> to vector<32x32xbf16>
    %cst_66 = arith.constant dense<0.000000e+00> : vector<5x32xf32>
    %301 = tpu.matmul %298, %300, %cst_66 {dimension_numbers = #tpu.dot_dimension_numbers<[1], [0], [0], [1], [0, 0, 1, 1], [], []>} : vector<5x32xbf16>, vector<32x32xbf16>, vector<5x32xf32> -> vector<5x32xf32>
    %302 = arith.addf %296, %301 : vector<5x32xf32>
    %303 = vector.extract_strided_slice %8 {offsets = [30, 0], sizes = [5, 32], strides = [1, 1]} : vector<49x32xf32> to vector<5x32xf32>
    %304 = arith.truncf %303 : vector<5x32xf32> to vector<5x32xbf16>
    %305 = vector.extract_strided_slice %9 {offsets = [5, 0, 0], sizes = [1, 32, 32], strides = [1, 1, 1]} : vector<9x32x32xbf16> to vector<1x32x32xbf16>
    %306 = vector.shape_cast %305 : vector<1x32x32xbf16> to vector<32x32xbf16>
    %cst_67 = arith.constant dense<0.000000e+00> : vector<5x32xf32>
    %307 = tpu.matmul %304, %306, %cst_67 {dimension_numbers = #tpu.dot_dimension_numbers<[1], [0], [0], [1], [0, 0, 1, 1], [], []>} : vector<5x32xbf16>, vector<32x32xbf16>, vector<5x32xf32> -> vector<5x32xf32>
    %308 = arith.addf %302, %307 : vector<5x32xf32>
    %309 = vector.extract_strided_slice %8 {offsets = [35, 0], sizes = [5, 32], strides = [1, 1]} : vector<49x32xf32> to vector<5x32xf32>
    %310 = arith.truncf %309 : vector<5x32xf32> to vector<5x32xbf16>
    %311 = vector.extract_strided_slice %9 {offsets = [6, 0, 0], sizes = [1, 32, 32], strides = [1, 1, 1]} : vector<9x32x32xbf16> to vector<1x32x32xbf16>
    %312 = vector.shape_cast %311 : vector<1x32x32xbf16> to vector<32x32xbf16>
    %cst_68 = arith.constant dense<0.000000e+00> : vector<5x32xf32>
    %313 = tpu.matmul %310, %312, %cst_68 {dimension_numbers = #tpu.dot_dimension_numbers<[1], [0], [0], [1], [0, 0, 1, 1], [], []>} : vector<5x32xbf16>, vector<32x32xbf16>, vector<5x32xf32> -> vector<5x32xf32>
    %314 = arith.addf %308, %313 : vector<5x32xf32>
    %315 = vector.extract_strided_slice %8 {offsets = [36, 0], sizes = [5, 32], strides = [1, 1]} : vector<49x32xf32> to vector<5x32xf32>
    %316 = arith.truncf %315 : vector<5x32xf32> to vector<5x32xbf16>
    %317 = vector.extract_strided_slice %9 {offsets = [7, 0, 0], sizes = [1, 32, 32], strides = [1, 1, 1]} : vector<9x32x32xbf16> to vector<1x32x32xbf16>
    %318 = vector.shape_cast %317 : vector<1x32x32xbf16> to vector<32x32xbf16>
    %cst_69 = arith.constant dense<0.000000e+00> : vector<5x32xf32>
    %319 = tpu.matmul %316, %318, %cst_69 {dimension_numbers = #tpu.dot_dimension_numbers<[1], [0], [0], [1], [0, 0, 1, 1], [], []>} : vector<5x32xbf16>, vector<32x32xbf16>, vector<5x32xf32> -> vector<5x32xf32>
    %320 = arith.addf %314, %319 : vector<5x32xf32>
    %321 = vector.extract_strided_slice %8 {offsets = [37, 0], sizes = [5, 32], strides = [1, 1]} : vector<49x32xf32> to vector<5x32xf32>
    %322 = arith.truncf %321 : vector<5x32xf32> to vector<5x32xbf16>
    %323 = vector.extract_strided_slice %9 {offsets = [8, 0, 0], sizes = [1, 32, 32], strides = [1, 1, 1]} : vector<9x32x32xbf16> to vector<1x32x32xbf16>
    %324 = vector.shape_cast %323 : vector<1x32x32xbf16> to vector<32x32xbf16>
    %cst_70 = arith.constant dense<0.000000e+00> : vector<5x32xf32>
    %325 = tpu.matmul %322, %324, %cst_70 {dimension_numbers = #tpu.dot_dimension_numbers<[1], [0], [0], [1], [0, 0, 1, 1], [], []>} : vector<5x32xbf16>, vector<32x32xbf16>, vector<5x32xf32> -> vector<5x32xf32>
    %326 = arith.addf %320, %325 : vector<5x32xf32>
    %cst_71 = arith.constant 0.000000e+00 : f32
    %327 = vector.broadcast %cst_71 : f32 to vector<5x32xf32>
    %328 = arith.maximumf %326, %327 : vector<5x32xf32>
    %329 = vector.extract_strided_slice %328 {offsets = [0, 0], sizes = [1, 32], strides = [1, 1]} : vector<5x32xf32> to vector<1x32xf32>
    %330 = arith.truncf %329 : vector<1x32xf32> to vector<1x32xbf16>
    %331 = vector.extract_strided_slice %10 {offsets = [15, 0, 0], sizes = [1, 32, 32], strides = [1, 1, 1]} : vector<25x32x32xbf16> to vector<1x32x32xbf16>
    %332 = vector.shape_cast %331 : vector<1x32x32xbf16> to vector<32x32xbf16>
    %cst_72 = arith.constant dense<0.000000e+00> : vector<1x32xf32>
    %333 = tpu.matmul %330, %332, %cst_72 {dimension_numbers = #tpu.dot_dimension_numbers<[1], [0], [0], [1], [0, 0, 1, 1], [], []>} : vector<1x32xbf16>, vector<32x32xbf16>, vector<1x32xf32> -> vector<1x32xf32>
    %334 = arith.addf %272, %333 : vector<1x32xf32>
    %335 = vector.extract_strided_slice %328 {offsets = [1, 0], sizes = [1, 32], strides = [1, 1]} : vector<5x32xf32> to vector<1x32xf32>
    %336 = arith.truncf %335 : vector<1x32xf32> to vector<1x32xbf16>
    %337 = vector.extract_strided_slice %10 {offsets = [16, 0, 0], sizes = [1, 32, 32], strides = [1, 1, 1]} : vector<25x32x32xbf16> to vector<1x32x32xbf16>
    %338 = vector.shape_cast %337 : vector<1x32x32xbf16> to vector<32x32xbf16>
    %cst_73 = arith.constant dense<0.000000e+00> : vector<1x32xf32>
    %339 = tpu.matmul %336, %338, %cst_73 {dimension_numbers = #tpu.dot_dimension_numbers<[1], [0], [0], [1], [0, 0, 1, 1], [], []>} : vector<1x32xbf16>, vector<32x32xbf16>, vector<1x32xf32> -> vector<1x32xf32>
    %340 = arith.addf %334, %339 : vector<1x32xf32>
    %341 = vector.extract_strided_slice %328 {offsets = [2, 0], sizes = [1, 32], strides = [1, 1]} : vector<5x32xf32> to vector<1x32xf32>
    %342 = arith.truncf %341 : vector<1x32xf32> to vector<1x32xbf16>
    %343 = vector.extract_strided_slice %10 {offsets = [17, 0, 0], sizes = [1, 32, 32], strides = [1, 1, 1]} : vector<25x32x32xbf16> to vector<1x32x32xbf16>
    %344 = vector.shape_cast %343 : vector<1x32x32xbf16> to vector<32x32xbf16>
    %cst_74 = arith.constant dense<0.000000e+00> : vector<1x32xf32>
    %345 = tpu.matmul %342, %344, %cst_74 {dimension_numbers = #tpu.dot_dimension_numbers<[1], [0], [0], [1], [0, 0, 1, 1], [], []>} : vector<1x32xbf16>, vector<32x32xbf16>, vector<1x32xf32> -> vector<1x32xf32>
    %346 = arith.addf %340, %345 : vector<1x32xf32>
    %347 = vector.extract_strided_slice %328 {offsets = [3, 0], sizes = [1, 32], strides = [1, 1]} : vector<5x32xf32> to vector<1x32xf32>
    %348 = arith.truncf %347 : vector<1x32xf32> to vector<1x32xbf16>
    %349 = vector.extract_strided_slice %10 {offsets = [18, 0, 0], sizes = [1, 32, 32], strides = [1, 1, 1]} : vector<25x32x32xbf16> to vector<1x32x32xbf16>
    %350 = vector.shape_cast %349 : vector<1x32x32xbf16> to vector<32x32xbf16>
    %cst_75 = arith.constant dense<0.000000e+00> : vector<1x32xf32>
    %351 = tpu.matmul %348, %350, %cst_75 {dimension_numbers = #tpu.dot_dimension_numbers<[1], [0], [0], [1], [0, 0, 1, 1], [], []>} : vector<1x32xbf16>, vector<32x32xbf16>, vector<1x32xf32> -> vector<1x32xf32>
    %352 = arith.addf %346, %351 : vector<1x32xf32>
    %353 = vector.extract_strided_slice %328 {offsets = [4, 0], sizes = [1, 32], strides = [1, 1]} : vector<5x32xf32> to vector<1x32xf32>
    %354 = arith.truncf %353 : vector<1x32xf32> to vector<1x32xbf16>
    %355 = vector.extract_strided_slice %10 {offsets = [19, 0, 0], sizes = [1, 32, 32], strides = [1, 1, 1]} : vector<25x32x32xbf16> to vector<1x32x32xbf16>
    %356 = vector.shape_cast %355 : vector<1x32x32xbf16> to vector<32x32xbf16>
    %cst_76 = arith.constant dense<0.000000e+00> : vector<1x32xf32>
    %357 = tpu.matmul %354, %356, %cst_76 {dimension_numbers = #tpu.dot_dimension_numbers<[1], [0], [0], [1], [0, 0, 1, 1], [], []>} : vector<1x32xbf16>, vector<32x32xbf16>, vector<1x32xf32> -> vector<1x32xf32>
    %358 = arith.addf %352, %357 : vector<1x32xf32>
    %359 = vector.extract_strided_slice %8 {offsets = [28, 0], sizes = [5, 32], strides = [1, 1]} : vector<49x32xf32> to vector<5x32xf32>
    %360 = arith.truncf %359 : vector<5x32xf32> to vector<5x32xbf16>
    %361 = vector.extract_strided_slice %9 {offsets = [0, 0, 0], sizes = [1, 32, 32], strides = [1, 1, 1]} : vector<9x32x32xbf16> to vector<1x32x32xbf16>
    %362 = vector.shape_cast %361 : vector<1x32x32xbf16> to vector<32x32xbf16>
    %cst_77 = arith.constant dense<0.000000e+00> : vector<5x32xf32>
    %363 = tpu.matmul %360, %362, %cst_77 {dimension_numbers = #tpu.dot_dimension_numbers<[1], [0], [0], [1], [0, 0, 1, 1], [], []>} : vector<5x32xbf16>, vector<32x32xbf16>, vector<5x32xf32> -> vector<5x32xf32>
    %364 = arith.addf %13, %363 : vector<5x32xf32>
    %365 = vector.extract_strided_slice %8 {offsets = [29, 0], sizes = [5, 32], strides = [1, 1]} : vector<49x32xf32> to vector<5x32xf32>
    %366 = arith.truncf %365 : vector<5x32xf32> to vector<5x32xbf16>
    %367 = vector.extract_strided_slice %9 {offsets = [1, 0, 0], sizes = [1, 32, 32], strides = [1, 1, 1]} : vector<9x32x32xbf16> to vector<1x32x32xbf16>
    %368 = vector.shape_cast %367 : vector<1x32x32xbf16> to vector<32x32xbf16>
    %cst_78 = arith.constant dense<0.000000e+00> : vector<5x32xf32>
    %369 = tpu.matmul %366, %368, %cst_78 {dimension_numbers = #tpu.dot_dimension_numbers<[1], [0], [0], [1], [0, 0, 1, 1], [], []>} : vector<5x32xbf16>, vector<32x32xbf16>, vector<5x32xf32> -> vector<5x32xf32>
    %370 = arith.addf %364, %369 : vector<5x32xf32>
    %371 = vector.extract_strided_slice %8 {offsets = [30, 0], sizes = [5, 32], strides = [1, 1]} : vector<49x32xf32> to vector<5x32xf32>
    %372 = arith.truncf %371 : vector<5x32xf32> to vector<5x32xbf16>
    %373 = vector.extract_strided_slice %9 {offsets = [2, 0, 0], sizes = [1, 32, 32], strides = [1, 1, 1]} : vector<9x32x32xbf16> to vector<1x32x32xbf16>
    %374 = vector.shape_cast %373 : vector<1x32x32xbf16> to vector<32x32xbf16>
    %cst_79 = arith.constant dense<0.000000e+00> : vector<5x32xf32>
    %375 = tpu.matmul %372, %374, %cst_79 {dimension_numbers = #tpu.dot_dimension_numbers<[1], [0], [0], [1], [0, 0, 1, 1], [], []>} : vector<5x32xbf16>, vector<32x32xbf16>, vector<5x32xf32> -> vector<5x32xf32>
    %376 = arith.addf %370, %375 : vector<5x32xf32>
    %377 = vector.extract_strided_slice %8 {offsets = [35, 0], sizes = [5, 32], strides = [1, 1]} : vector<49x32xf32> to vector<5x32xf32>
    %378 = arith.truncf %377 : vector<5x32xf32> to vector<5x32xbf16>
    %379 = vector.extract_strided_slice %9 {offsets = [3, 0, 0], sizes = [1, 32, 32], strides = [1, 1, 1]} : vector<9x32x32xbf16> to vector<1x32x32xbf16>
    %380 = vector.shape_cast %379 : vector<1x32x32xbf16> to vector<32x32xbf16>
    %cst_80 = arith.constant dense<0.000000e+00> : vector<5x32xf32>
    %381 = tpu.matmul %378, %380, %cst_80 {dimension_numbers = #tpu.dot_dimension_numbers<[1], [0], [0], [1], [0, 0, 1, 1], [], []>} : vector<5x32xbf16>, vector<32x32xbf16>, vector<5x32xf32> -> vector<5x32xf32>
    %382 = arith.addf %376, %381 : vector<5x32xf32>
    %383 = vector.extract_strided_slice %8 {offsets = [36, 0], sizes = [5, 32], strides = [1, 1]} : vector<49x32xf32> to vector<5x32xf32>
    %384 = arith.truncf %383 : vector<5x32xf32> to vector<5x32xbf16>
    %385 = vector.extract_strided_slice %9 {offsets = [4, 0, 0], sizes = [1, 32, 32], strides = [1, 1, 1]} : vector<9x32x32xbf16> to vector<1x32x32xbf16>
    %386 = vector.shape_cast %385 : vector<1x32x32xbf16> to vector<32x32xbf16>
    %cst_81 = arith.constant dense<0.000000e+00> : vector<5x32xf32>
    %387 = tpu.matmul %384, %386, %cst_81 {dimension_numbers = #tpu.dot_dimension_numbers<[1], [0], [0], [1], [0, 0, 1, 1], [], []>} : vector<5x32xbf16>, vector<32x32xbf16>, vector<5x32xf32> -> vector<5x32xf32>
    %388 = arith.addf %382, %387 : vector<5x32xf32>
    %389 = vector.extract_strided_slice %8 {offsets = [37, 0], sizes = [5, 32], strides = [1, 1]} : vector<49x32xf32> to vector<5x32xf32>
    %390 = arith.truncf %389 : vector<5x32xf32> to vector<5x32xbf16>
    %391 = vector.extract_strided_slice %9 {offsets = [5, 0, 0], sizes = [1, 32, 32], strides = [1, 1, 1]} : vector<9x32x32xbf16> to vector<1x32x32xbf16>
    %392 = vector.shape_cast %391 : vector<1x32x32xbf16> to vector<32x32xbf16>
    %cst_82 = arith.constant dense<0.000000e+00> : vector<5x32xf32>
    %393 = tpu.matmul %390, %392, %cst_82 {dimension_numbers = #tpu.dot_dimension_numbers<[1], [0], [0], [1], [0, 0, 1, 1], [], []>} : vector<5x32xbf16>, vector<32x32xbf16>, vector<5x32xf32> -> vector<5x32xf32>
    %394 = arith.addf %388, %393 : vector<5x32xf32>
    %395 = vector.extract_strided_slice %8 {offsets = [42, 0], sizes = [5, 32], strides = [1, 1]} : vector<49x32xf32> to vector<5x32xf32>
    %396 = arith.truncf %395 : vector<5x32xf32> to vector<5x32xbf16>
    %397 = vector.extract_strided_slice %9 {offsets = [6, 0, 0], sizes = [1, 32, 32], strides = [1, 1, 1]} : vector<9x32x32xbf16> to vector<1x32x32xbf16>
    %398 = vector.shape_cast %397 : vector<1x32x32xbf16> to vector<32x32xbf16>
    %cst_83 = arith.constant dense<0.000000e+00> : vector<5x32xf32>
    %399 = tpu.matmul %396, %398, %cst_83 {dimension_numbers = #tpu.dot_dimension_numbers<[1], [0], [0], [1], [0, 0, 1, 1], [], []>} : vector<5x32xbf16>, vector<32x32xbf16>, vector<5x32xf32> -> vector<5x32xf32>
    %400 = arith.addf %394, %399 : vector<5x32xf32>
    %401 = vector.extract_strided_slice %8 {offsets = [43, 0], sizes = [5, 32], strides = [1, 1]} : vector<49x32xf32> to vector<5x32xf32>
    %402 = arith.truncf %401 : vector<5x32xf32> to vector<5x32xbf16>
    %403 = vector.extract_strided_slice %9 {offsets = [7, 0, 0], sizes = [1, 32, 32], strides = [1, 1, 1]} : vector<9x32x32xbf16> to vector<1x32x32xbf16>
    %404 = vector.shape_cast %403 : vector<1x32x32xbf16> to vector<32x32xbf16>
    %cst_84 = arith.constant dense<0.000000e+00> : vector<5x32xf32>
    %405 = tpu.matmul %402, %404, %cst_84 {dimension_numbers = #tpu.dot_dimension_numbers<[1], [0], [0], [1], [0, 0, 1, 1], [], []>} : vector<5x32xbf16>, vector<32x32xbf16>, vector<5x32xf32> -> vector<5x32xf32>
    %406 = arith.addf %400, %405 : vector<5x32xf32>
    %407 = vector.extract_strided_slice %8 {offsets = [44, 0], sizes = [5, 32], strides = [1, 1]} : vector<49x32xf32> to vector<5x32xf32>
    %408 = arith.truncf %407 : vector<5x32xf32> to vector<5x32xbf16>
    %409 = vector.extract_strided_slice %9 {offsets = [8, 0, 0], sizes = [1, 32, 32], strides = [1, 1, 1]} : vector<9x32x32xbf16> to vector<1x32x32xbf16>
    %410 = vector.shape_cast %409 : vector<1x32x32xbf16> to vector<32x32xbf16>
    %cst_85 = arith.constant dense<0.000000e+00> : vector<5x32xf32>
    %411 = tpu.matmul %408, %410, %cst_85 {dimension_numbers = #tpu.dot_dimension_numbers<[1], [0], [0], [1], [0, 0, 1, 1], [], []>} : vector<5x32xbf16>, vector<32x32xbf16>, vector<5x32xf32> -> vector<5x32xf32>
    %412 = arith.addf %406, %411 : vector<5x32xf32>
    %cst_86 = arith.constant 0.000000e+00 : f32
    %413 = vector.broadcast %cst_86 : f32 to vector<5x32xf32>
    %414 = arith.maximumf %412, %413 : vector<5x32xf32>
    %415 = vector.extract_strided_slice %414 {offsets = [0, 0], sizes = [1, 32], strides = [1, 1]} : vector<5x32xf32> to vector<1x32xf32>
    %416 = arith.truncf %415 : vector<1x32xf32> to vector<1x32xbf16>
    %417 = vector.extract_strided_slice %10 {offsets = [20, 0, 0], sizes = [1, 32, 32], strides = [1, 1, 1]} : vector<25x32x32xbf16> to vector<1x32x32xbf16>
    %418 = vector.shape_cast %417 : vector<1x32x32xbf16> to vector<32x32xbf16>
    %cst_87 = arith.constant dense<0.000000e+00> : vector<1x32xf32>
    %419 = tpu.matmul %416, %418, %cst_87 {dimension_numbers = #tpu.dot_dimension_numbers<[1], [0], [0], [1], [0, 0, 1, 1], [], []>} : vector<1x32xbf16>, vector<32x32xbf16>, vector<1x32xf32> -> vector<1x32xf32>
    %420 = arith.addf %358, %419 : vector<1x32xf32>
    %421 = vector.extract_strided_slice %414 {offsets = [1, 0], sizes = [1, 32], strides = [1, 1]} : vector<5x32xf32> to vector<1x32xf32>
    %422 = arith.truncf %421 : vector<1x32xf32> to vector<1x32xbf16>
    %423 = vector.extract_strided_slice %10 {offsets = [21, 0, 0], sizes = [1, 32, 32], strides = [1, 1, 1]} : vector<25x32x32xbf16> to vector<1x32x32xbf16>
    %424 = vector.shape_cast %423 : vector<1x32x32xbf16> to vector<32x32xbf16>
    %cst_88 = arith.constant dense<0.000000e+00> : vector<1x32xf32>
    %425 = tpu.matmul %422, %424, %cst_88 {dimension_numbers = #tpu.dot_dimension_numbers<[1], [0], [0], [1], [0, 0, 1, 1], [], []>} : vector<1x32xbf16>, vector<32x32xbf16>, vector<1x32xf32> -> vector<1x32xf32>
    %426 = arith.addf %420, %425 : vector<1x32xf32>
    %427 = vector.extract_strided_slice %414 {offsets = [2, 0], sizes = [1, 32], strides = [1, 1]} : vector<5x32xf32> to vector<1x32xf32>
    %428 = arith.truncf %427 : vector<1x32xf32> to vector<1x32xbf16>
    %429 = vector.extract_strided_slice %10 {offsets = [22, 0, 0], sizes = [1, 32, 32], strides = [1, 1, 1]} : vector<25x32x32xbf16> to vector<1x32x32xbf16>
    %430 = vector.shape_cast %429 : vector<1x32x32xbf16> to vector<32x32xbf16>
    %cst_89 = arith.constant dense<0.000000e+00> : vector<1x32xf32>
    %431 = tpu.matmul %428, %430, %cst_89 {dimension_numbers = #tpu.dot_dimension_numbers<[1], [0], [0], [1], [0, 0, 1, 1], [], []>} : vector<1x32xbf16>, vector<32x32xbf16>, vector<1x32xf32> -> vector<1x32xf32>
    %432 = arith.addf %426, %431 : vector<1x32xf32>
    %433 = vector.extract_strided_slice %414 {offsets = [3, 0], sizes = [1, 32], strides = [1, 1]} : vector<5x32xf32> to vector<1x32xf32>
    %434 = arith.truncf %433 : vector<1x32xf32> to vector<1x32xbf16>
    %435 = vector.extract_strided_slice %10 {offsets = [23, 0, 0], sizes = [1, 32, 32], strides = [1, 1, 1]} : vector<25x32x32xbf16> to vector<1x32x32xbf16>
    %436 = vector.shape_cast %435 : vector<1x32x32xbf16> to vector<32x32xbf16>
    %cst_90 = arith.constant dense<0.000000e+00> : vector<1x32xf32>
    %437 = tpu.matmul %434, %436, %cst_90 {dimension_numbers = #tpu.dot_dimension_numbers<[1], [0], [0], [1], [0, 0, 1, 1], [], []>} : vector<1x32xbf16>, vector<32x32xbf16>, vector<1x32xf32> -> vector<1x32xf32>
    %438 = arith.addf %432, %437 : vector<1x32xf32>
    %439 = vector.extract_strided_slice %414 {offsets = [4, 0], sizes = [1, 32], strides = [1, 1]} : vector<5x32xf32> to vector<1x32xf32>
    %440 = arith.truncf %439 : vector<1x32xf32> to vector<1x32xbf16>
    %441 = vector.extract_strided_slice %10 {offsets = [24, 0, 0], sizes = [1, 32, 32], strides = [1, 1, 1]} : vector<25x32x32xbf16> to vector<1x32x32xbf16>
    %442 = vector.shape_cast %441 : vector<1x32x32xbf16> to vector<32x32xbf16>
    %cst_91 = arith.constant dense<0.000000e+00> : vector<1x32xf32>
    %443 = tpu.matmul %440, %442, %cst_91 {dimension_numbers = #tpu.dot_dimension_numbers<[1], [0], [0], [1], [0, 0, 1, 1], [], []>} : vector<1x32xbf16>, vector<32x32xbf16>, vector<1x32xf32> -> vector<1x32xf32>
    %444 = arith.addf %438, %443 : vector<1x32xf32>
    %445 = vector.shape_cast %444 : vector<1x32xf32> to vector<1x1x32xf32>
    %c0_92 = arith.constant 0 : index
    %c0_93 = arith.constant 0 : index
    %c0_94 = arith.constant 0 : index
    %446 = vector.load %arg8[%c0_92, %c0_93, %c0_94] : memref<1x1x32xf32, #tpu.memory_space<vmem>>, vector<1x1x32xf32>
    tpu.vector_store %arg8[%c0_92, %c0_93, %c0_94], %445 {strides = array<i32>} : memref<1x1x32xf32, #tpu.memory_space<vmem>>, vector<1x1x32xf32>,
    return
  }
  func.func @transform_0(%arg0: i32) -> (i32, i32, i32) {
    %c0_i32 = arith.constant 0 : i32
    %c0_i32_0 = arith.constant 0 : i32
    %c0_i32_1 = arith.constant 0 : i32
    return %arg0, %c0_i32, %c0_i32_0 : i32, i32, i32
  }
  func.func @transform_1(%arg0: i32) -> (i32, i32) {
    %c0_i32 = arith.constant 0 : i32
    %c0_i32_0 = arith.constant 0 : i32
    %c0_i32_1 = arith.constant 0 : i32
    return %c0_i32, %c0_i32_0 : i32, i32
  }
  func.func @transform_2(%arg0: i32) -> (i32, i32) {
    %c0_i32 = arith.constant 0 : i32
    %c0_i32_0 = arith.constant 0 : i32
    %c0_i32_1 = arith.constant 0 : i32
    return %c0_i32, %c0_i32_0 : i32, i32
  }
  func.func @transform_3(%arg0: i32) -> (i32, i32, i32) {
    %c0_i32 = arith.constant 0 : i32
    %c0_i32_0 = arith.constant 0 : i32
    %c0_i32_1 = arith.constant 0 : i32
    %c0_i32_2 = arith.constant 0 : i32
    return %c0_i32, %c0_i32_0, %c0_i32_1 : i32, i32, i32
  }
  func.func @transform_4(%arg0: i32) -> (i32, i32) {
    %c0_i32 = arith.constant 0 : i32
    %c0_i32_0 = arith.constant 0 : i32
    %c0_i32_1 = arith.constant 0 : i32
    return %c0_i32, %c0_i32_0 : i32, i32
  }
  func.func @transform_5(%arg0: i32) -> (i32, i32, i32) {
    %c0_i32 = arith.constant 0 : i32
    %c0_i32_0 = arith.constant 0 : i32
    %c0_i32_1 = arith.constant 0 : i32
    %c0_i32_2 = arith.constant 0 : i32
    return %c0_i32, %c0_i32_0, %c0_i32_1 : i32, i32, i32
  }
  func.func @transform_6(%arg0: i32) -> (i32, i32) {
    %c0_i32 = arith.constant 0 : i32
    %c0_i32_0 = arith.constant 0 : i32
    %c0_i32_1 = arith.constant 0 : i32
    return %c0_i32, %c0_i32_0 : i32, i32
  }
  func.func @transform_7(%arg0: i32) -> (i32, i32, i32) {
    %c0_i32 = arith.constant 0 : i32
    %c0_i32_0 = arith.constant 0 : i32
    %c0_i32_1 = arith.constant 0 : i32
    return %arg0, %c0_i32, %c0_i32_0 : i32, i32, i32
  }
}

</mosaic_0001>

<llo_original>
// kernel: image_encoder_forward.1
$region0: #{image_encoder_forward.1}
  #allocation0 [shape = 'u32[]', space=smem, size = 0x4, offset = 0x4, fixed_abs, tag = 'smem constant byte address 0x4 - core index']
  #allocation1 [shape = 'u32[144,128]{1,0:T(1,128)}', space=vmem, size = 0x12000, scoped, tag = 'internal scratch']
  %s0 = inlined_call_operand.vmem [shape: bf16[2,49,36], index: 0, kind: input, shape index: {}]
  %s1 = inlined_call_operand.vmem [shape: bf16[36,32], index: 1, kind: input, shape index: {}]
  %s2 = inlined_call_operand.vmem [shape: f32[1,32], index: 2, kind: input, shape index: {}]
  %s3 = inlined_call_operand.vmem [shape: bf16[9,32,32], index: 3, kind: input, shape index: {}]
  %s4 = inlined_call_operand.vmem [shape: f32[1,32], index: 4, kind: input, shape index: {}]
  %s5 = inlined_call_operand.vmem [shape: bf16[25,32,32], index: 5, kind: input, shape index: {}]
  %s6 = inlined_call_operand.vmem [shape: f32[1,32], index: 6, kind: input, shape index: {}]
  %s7 = inlined_call_operand.hbm [shape: f32[2,1,32], index: 7, kind: output, shape index: {}]
  %s8 = sld [smem:[#allocation0]]
  $region61: #{image_encoder_forward.1} parent=0
    _
  %s10 = ssub.s32 1, %s8
  %s11 = scalar_select 0, %s10, %s8
  $region1: #{image_encoder_forward.1} parent=0
    #allocation2 [shape = 'u8[1024]{0}', space=vmem, size = 0x400, scoped, tag = 'output window, operand 0']
    #allocation3 [shape = 's32[2]{0}', space=sflag, size = 0x8, scoped, tag = 'scoped memory for image_encoder_forward.1']
    %12 = vsyncpa [#allocation3], 0
    %s13 = scalar_lea.sflag [#allocation3], 1
    %14 = vsyncpa %s13, 0
    loop: start=0, step=1, limit=4
    $region2: #{image_encoder_forward.1} parent=1 // loop_pre_header
      _
    $region3: #{image_encoder_forward.1} parent=1 // loop_header
      %s16 = sphi 0, %s20
      %p17 = scmp.ge.s32.totalorder %s16, 4
      %s26 = sphi 0, %s28
      %s29 = sphi 0, %s26
      %s30 = sphi 0, %s29
      %s46 = sphi 0, %s30
      %s50 = sphi 0, %s50
      %s52 = sphi 0, %s50
      %s53 = sphi 0, %s52
      %s67 = sphi 0, %s53
      %s71 = sphi 0, %s71
      %s73 = sphi 0, %s71
      %s74 = sphi 0, %s73
      %s88 = sphi 0, %s74
      %s92 = sphi 0, %s92
      %s94 = sphi 0, %s92
      %s95 = sphi 0, %s94
      %s109 = sphi 0, %s95
      %s113 = sphi 0, %s113
      %s115 = sphi 0, %s113
      %s116 = sphi 0, %s115
      %s130 = sphi 0, %s116
      %s134 = sphi 0, %s134
      %s136 = sphi 0, %s134
      %s137 = sphi 0, %s136
      %s151 = sphi 0, %s137
      %s155 = sphi 0, %s155
      %s157 = sphi 0, %s155
      %s158 = sphi 0, %s157
      %s172 = sphi 0, %s158
      %s178 = sphi 0, %s180
      %s181 = sphi 0, %s178
      %s182 = sphi 0, %s181
      %s198 = sphi 0, %s182
    $region4: #{image_encoder_forward.1} parent=1 // loop_header_branch
      %19 = sbr.rel (%p17) target = $region8
    $region5: #{image_encoder_forward.1} parent=1 // loop_body
      %s21 = ssub.s32 %s16, 1
      %s22 = ssub.s32 %s16, 2
      %s23 = sadd.s32 %s16, 1
      %s24 = ssub.s32 %s16, %s23
      %p25 = scmp.eq.s32.totalorder %s24, 0
      %s27 = sadd.s32 %s26, 1
      %s28 = scalar_select %p25, %s26, %s27
      %p31 = pneg %p25
      %p32 = scmp.eq.s32.totalorder %s16, 1
      %p33 = por %p31, %p32
      %p34 = scmp.ne.s32.totalorder %s26, %s29
      %p35 = scmp.eq.s32.totalorder %s16, 0
      %p36 = por %p34, %p35
      %p37 = scmp.ne.s32.totalorder %s26, %s29
      %p38 = scmp.eq.s32.totalorder %s21, 1
      %p39 = por %p37, %p38
      %p40 = scmp.ne.s32.totalorder %s29, %s30
      %p41 = scmp.eq.s32.totalorder %s21, 0
      %p42 = por %p40, %p41
      %p43 = scmp.ne.s32.totalorder %s29, %s30
      %p44 = scmp.eq.s32.totalorder %s22, 1
      %p45 = por %p43, %p44
      %p47 = scmp.ne.s32.totalorder %s30, %s46
      %p48 = scmp.eq.s32.totalorder %s22, 0
      %p49 = por %p47, %p48
      %s51 = sadd.s32 %s50, 1
      %p54 = scmp.eq.s32.totalorder %s16, 1
      %p55 = scmp.ne.s32.totalorder %s50, %s52
      %p56 = scmp.eq.s32.totalorder %s16, 0
      %p57 = por %p55, %p56
      %p58 = scmp.ne.s32.totalorder %s50, %s52
      %p59 = scmp.eq.s32.totalorder %s21, 1
      %p60 = por %p58, %p59
      %p61 = scmp.ne.s32.totalorder %s52, %s53
      %p62 = scmp.eq.s32.totalorder %s21, 0
      %p63 = por %p61, %p62
      %p64 = scmp.ne.s32.totalorder %s52, %s53
      %p65 = scmp.eq.s32.totalorder %s22, 1
      %p66 = por %p64, %p65
      %p68 = scmp.ne.s32.totalorder %s53, %s67
      %p69 = scmp.eq.s32.totalorder %s22, 0
      %p70 = por %p68, %p69
      %s72 = sadd.s32 %s71, 1
      %p75 = scmp.eq.s32.totalorder %s16, 1
      %p76 = scmp.ne.s32.totalorder %s71, %s73
      %p77 = scmp.eq.s32.totalorder %s16, 0
      %p78 = por %p76, %p77
      %p79 = scmp.ne.s32.totalorder %s71, %s73
      %p80 = scmp.eq.s32.totalorder %s21, 1
      %p81 = por %p79, %p80
      %p82 = scmp.ne.s32.totalorder %s73, %s74
      %p83 = scmp.eq.s32.totalorder %s21, 0
      %p84 = por %p82, %p83
      %p85 = scmp.ne.s32.totalorder %s73, %s74
      %p86 = scmp.eq.s32.totalorder %s22, 1
      %p87 = por %p85, %p86
      %p89 = scmp.ne.s32.totalorder %s74, %s88
      %p90 = scmp.eq.s32.totalorder %s22, 0
      %p91 = por %p89, %p90
      %s93 = sadd.s32 %s92, 1
      %p96 = scmp.eq.s32.totalorder %s16, 1
      %p97 = scmp.ne.s32.totalorder %s92, %s94
      %p98 = scmp.eq.s32.totalorder %s16, 0
      %p99 = por %p97, %p98
      %p100 = scmp.ne.s32.totalorder %s92, %s94
      %p101 = scmp.eq.s32.totalorder %s21, 1
      %p102 = por %p100, %p101
      %p103 = scmp.ne.s32.totalorder %s94, %s95
      %p104 = scmp.eq.s32.totalorder %s21, 0
      %p105 = por %p103, %p104
      %p106 = scmp.ne.s32.totalorder %s94, %s95
      %p107 = scmp.eq.s32.totalorder %s22, 1
      %p108 = por %p106, %p107
      %p110 = scmp.ne.s32.totalorder %s95, %s109
      %p111 = scmp.eq.s32.totalorder %s22, 0
      %p112 = por %p110, %p111
      %s114 = sadd.s32 %s113, 1
      %p117 = scmp.eq.s32.totalorder %s16, 1
      %p118 = scmp.ne.s32.totalorder %s113, %s115
      %p119 = scmp.eq.s32.totalorder %s16, 0
      %p120 = por %p118, %p119
      %p121 = scmp.ne.s32.totalorder %s113, %s115
      %p122 = scmp.eq.s32.totalorder %s21, 1
      %p123 = por %p121, %p122
      %p124 = scmp.ne.s32.totalorder %s115, %s116
      %p125 = scmp.eq.s32.totalorder %s21, 0
      %p126 = por %p124, %p125
      %p127 = scmp.ne.s32.totalorder %s115, %s116
      %p128 = scmp.eq.s32.totalorder %s22, 1
      %p129 = por %p127, %p128
      %p131 = scmp.ne.s32.totalorder %s116, %s130
      %p132 = scmp.eq.s32.totalorder %s22, 0
      %p133 = por %p131, %p132
      %s135 = sadd.s32 %s134, 1
      %p138 = scmp.eq.s32.totalorder %s16, 1
      %p139 = scmp.ne.s32.totalorder %s134, %s136
      %p140 = scmp.eq.s32.totalorder %s16, 0
      %p141 = por %p139, %p140
      %p142 = scmp.ne.s32.totalorder %s134, %s136
      %p143 = scmp.eq.s32.totalorder %s21, 1
      %p144 = por %p142, %p143
      %p145 = scmp.ne.s32.totalorder %s136, %s137
      %p146 = scmp.eq.s32.totalorder %s21, 0
      %p147 = por %p145, %p146
      %p148 = scmp.ne.s32.totalorder %s136, %s137
      %p149 = scmp.eq.s32.totalorder %s22, 1
      %p150 = por %p148, %p149
      %p152 = scmp.ne.s32.totalorder %s137, %s151
      %p153 = scmp.eq.s32.totalorder %s22, 0
      %p154 = por %p152, %p153
      %s156 = sadd.s32 %s155, 1
      %p159 = scmp.eq.s32.totalorder %s16, 1
      %p160 = scmp.ne.s32.totalorder %s155, %s157
      %p161 = scmp.eq.s32.totalorder %s16, 0
      %p162 = por %p160, %p161
      %p163 = scmp.ne.s32.totalorder %s155, %s157
      %p164 = scmp.eq.s32.totalorder %s21, 1
      %p165 = por %p163, %p164
      %p166 = scmp.ne.s32.totalorder %s157, %s158
      %p167 = scmp.eq.s32.totalorder %s21, 0
      %p168 = por %p166, %p167
      %p169 = scmp.ne.s32.totalorder %s157, %s158
      %p170 = scmp.eq.s32.totalorder %s22, 1
      %p171 = por %p169, %p170
      %p173 = scmp.ne.s32.totalorder %s158, %s172
      %p174 = scmp.eq.s32.totalorder %s22, 0
      %p175 = por %p173, %p174
      %s176 = ssub.s32 %s16, %s23
      %p177 = scmp.eq.s32.totalorder %s176, 0
      %s179 = sadd.s32 %s178, 1
      %s180 = scalar_select %p177, %s178, %s179
      %p183 = pneg %p177
      %p184 = scmp.eq.s32.totalorder %s16, 1
      %p185 = por %p183, %p184
      %p186 = scmp.ne.s32.totalorder %s178, %s181
      %p187 = scmp.eq.s32.totalorder %s16, 0
      %p188 = por %p186, %p187
      %p189 = scmp.ne.s32.totalorder %s178, %s181
      %p190 = scmp.eq.s32.totalorder %s21, 1
      %p191 = por %p189, %p190
      %p192 = scmp.ne.s32.totalorder %s181, %s182
      %p193 = scmp.eq.s32.totalorder %s21, 0
      %p194 = por %p192, %p193
      %p195 = scmp.ne.s32.totalorder %s181, %s182
      %p196 = scmp.eq.s32.totalorder %s22, 1
      %p197 = por %p195, %p196
      %p199 = scmp.ne.s32.totalorder %s182, %s198
      %p200 = scmp.eq.s32.totalorder %s22, 0
      %p201 = por %p199, %p200
      %p202 = scmp.le.s32.totalorder 1, %s16
      %p203 = scmp.lt.s32.totalorder %s16, 3
      %p204 = pnand %p202, %p203
      %p205 = pneg %p204
      // Predicated region
      $region9: #{image_encoder_forward.1} parent=5 // pred_check
        _
      $region10: #{image_encoder_forward.1} parent=5 // pred_check_branch
        %207 = sbr.rel (%p204) target = $region12
      $region11: #{image_encoder_forward.1} parent=5 // pred_region
        %s208 = ssub.s32 %s16, 1
        // Predicated region
        $region13: #{image_encoder_forward.1} parent=11 // pred_check
          %p209 = pneg %p63
        $region14: #{image_encoder_forward.1} parent=11 // pred_check_branch
          %211 = sbr.rel (%p209) target = $region16
        $region15: #{image_encoder_forward.1} parent=11 // pred_region
          _
        $region16: #{image_encoder_forward.1} parent=11 // pred_fallthru
          _
        // Predicated region
        $region17: #{image_encoder_forward.1} parent=11 // pred_check
          %p212 = pneg %p84
        $region18: #{image_encoder_forward.1} parent=11 // pred_check_branch
          %214 = sbr.rel (%p212) target = $region20
        $region19: #{image_encoder_forward.1} parent=11 // pred_region
          _
        $region20: #{image_encoder_forward.1} parent=11 // pred_fallthru
          _
        // Predicated region
        $region21: #{image_encoder_forward.1} parent=11 // pred_check
          %p215 = pneg %p105
        $region22: #{image_encoder_forward.1} parent=11 // pred_check_branch
          %217 = sbr.rel (%p215) target = $region24
        $region23: #{image_encoder_forward.1} parent=11 // pred_region
          _
        $region24: #{image_encoder_forward.1} parent=11 // pred_fallthru
          _
        // Predicated region
        $region25: #{image_encoder_forward.1} parent=11 // pred_check
          %p218 = pneg %p126
        $region26: #{image_encoder_forward.1} parent=11 // pred_check_branch
          %220 = sbr.rel (%p218) target = $region28
        $region27: #{image_encoder_forward.1} parent=11 // pred_region
          _
        $region28: #{image_encoder_forward.1} parent=11 // pred_fallthru
          _
        // Predicated region
        $region29: #{image_encoder_forward.1} parent=11 // pred_check
          %p221 = pneg %p147
        $region30: #{image_encoder_forward.1} parent=11 // pred_check_branch
          %223 = sbr.rel (%p221) target = $region32
        $region31: #{image_encoder_forward.1} parent=11 // pred_region
          _
        $region32: #{image_encoder_forward.1} parent=11 // pred_fallthru
          _
        // Predicated region
        $region33: #{image_encoder_forward.1} parent=11 // pred_check
          %p224 = pneg %p168
        $region34: #{image_encoder_forward.1} parent=11 // pred_check_branch
          %226 = sbr.rel (%p224) target = $region36
        $region35: #{image_encoder_forward.1} parent=11 // pred_region
          _
        $region36: #{image_encoder_forward.1} parent=11 // pred_fallthru
          _
      $region12: #{image_encoder_forward.1} parent=5 // pred_fallthru
        _
      %p227 = scmp.lt.s32.totalorder %s16, 2
      // Predicated region
      $region37: #{image_encoder_forward.1} parent=5 // pred_check
        %p228 = pneg %p227
      $region38: #{image_encoder_forward.1} parent=5 // pred_check_branch
        %230 = sbr.rel (%p228) target = $region40
      $region39: #{image_encoder_forward.1} parent=5 // pred_region
        // Predicated region
        $region41: #{image_encoder_forward.1} parent=39 // pred_check
          %p231 = pneg %p36
        $region42: #{image_encoder_forward.1} parent=39 // pred_check_branch
          %233 = sbr.rel (%p231) target = $region44
        $region43: #{image_encoder_forward.1} parent=39 // pred_region
          %p234 = scmp.lt.s32.totalorder %s16, 1
          %s235 = scalar_select %p234, %s16, 1
          %s236 = smul.addr %s235, 7
          %s237 = smul.addr %s236, 4
          %s238 = scalar_lea.vmem %s0, %s237
        $region44: #{image_encoder_forward.1} parent=39 // pred_fallthru
          _
      $region40: #{image_encoder_forward.1} parent=5 // pred_fallthru
        _
      %p239 = scmp.le.s32.totalorder 1, %s16
      %p240 = scmp.lt.s32.totalorder %s16, 3
      %p241 = pnand %p239, %p240
      %p242 = pneg %p241
      // Predicated region
      $region45: #{image_encoder_forward.1} parent=5 // pred_check
        _
      $region46: #{image_encoder_forward.1} parent=5 // pred_check_branch
        %244 = sbr.rel (%p241) target = $region48
      $region47: #{image_encoder_forward.1} parent=5 // pred_region
        %s245 = ssub.s32 %s16, 1
        %p246 = scmp.lt.s32.totalorder %s21, 1
        %s247 = scalar_select %p246, %s21, 1
        %s248 = smul.addr %s247, 7
        %s249 = smul.addr %s248, 4
        %s250 = scalar_lea.vmem %s0, %s249
        %p251 = pneg %p42
        %p252 = pneg %p39
        %p253 = pneg %p63
        %p254 = pneg %p60
        %p255 = pneg %p84
        %p256 = pneg %p81
        %p257 = pneg %p105
        %p258 = pneg %p102
        %p259 = pneg %p126
        %p260 = pneg %p123
        %p261 = pneg %p147
        %p262 = pneg %p144
        %p263 = pneg %p168
        %p264 = pneg %p165
        %p265 = pneg %p194
        %p266 = pneg %p191
        %s267 = sand.u32 %s181, 1
        %s268 = scalar_lea.sflag [#allocation3], %s267
        %s269 = sand.u32 %s181, 1
        %s270 = scalar_lea.vmem [#allocation2], %s269
        %p271 = scmp.lt.s32.totalorder %s21, 1
        %s272 = scalar_select %p271, %s21, 1
        %s273 = smul.addr %s272, 7
        %s274 = smul.addr %s273, 4
        %s275 = scalar_lea.vmem %s0, %s274
        %v277 = vld [vmem:[%s275] sm:$0xf]
        %v278 = vld [vmem:[%s275 + $0x4] sm:$0xf]
        %v279 = vld [vmem:[%s275 + $0x8] sm:$0xf]
        %v280 = vld [vmem:[%s275 + $0xc] sm:$0xf]
        %v281 = vld [vmem:[%s275 + $0x10] sm:$0xf]
        %v282 = vld [vmem:[%s275 + $0x14] sm:$0xf]
        %v283 = vld [vmem:[%s275 + $0x18] sm:$0x1]
        %v284 = vld [vmem:[%s1] sm:$0xf]
        %v285 = vld [vmem:[%s1 + $0x4] sm:$0xf]
        %v286 = vld [vmem:[%s1 + $0x8] sm:$0xf]
        %v287 = vld [vmem:[%s1 + $0xc] sm:$0xf]
        %v288 = vld [vmem:[%s1 + $0x10] sm:$0x3]
        %v289 = vld [vmem:[%s2] sm:$0x1]
        %v291 = vlaneseq
        %v292 = vshrl.u32 %v291, 7
        %v293 = vsub.s32 0, %v292
        %v294 = vrot.slane %v289, %v293
        %v303 = vunpack.c.l.b16 %v277
        %v304 = vunpack.c.l.b16 %v278
        %v305 = vunpack.c.l.b16 %v279
        %v306 = vunpack.c.l.b16 %v280
        %v307 = vunpack.c.l.b16 %v281
        %v308 = vunpack.c.l.b16 %v282
        %v309 = vunpack.c.l.b16 %v283
        %v310 = vpack.c.b16 %v304, %v303
        %v311 = vpack.c.b16 %v306, %v305
        %v312 = vpack.c.b16 %v308, %v307
        %v313 = vpack.c.b16 %v309, %v309
        %v319 = vunpack.c.l.b16 %v284
        %v320 = vunpack.c.l.b16 %v285
        %v321 = vunpack.c.l.b16 %v286
        %v322 = vunpack.c.l.b16 %v287
        %v323 = vunpack.c.l.b16 %v288
        %v324 = vpack.c.b16 %v320, %v319
        %v325 = vpack.c.b16 %v322, %v321
        %v326 = vpack.c.b16 %v323, %v323
        %vm329 = vcmask 293888
        %v331 = vsel %vm329, %v310, 0
        %v334 = vsel %vm329, %v311, 0
        %v337 = vsel %vm329, %v312, 0
        %v340 = vsel %vm329, %v313, 0
        %vm342 = vcmask 1041408
        %v344 = vsel %vm342, %v326, 0
        %346 = vmatprep.subr.bf16.mxu0 0
        %347 = vmatpush1.bf16.msra.mxu0 0
        %348 = vmatprep.subr.bf16.mxu0 0
        %349 = vmatpush1.bf16.msra.mxu0 0
        %350 = vmatprep.subr.bf16.mxu0 0
        %351 = vmatpush1.bf16.msra.mxu0 0
        %352 = vmatprep.subr.bf16.mxu0 0
        %353 = vmatpush1.bf16.msra.mxu0 0
        %354 = vmatprep.subr.bf16.mxu0 0
        %355 = vmatpush1.bf16.msra.mxu0 0
        %356 = vmatprep.subr.bf16.mxu0 0
        %357 = vmatpush1.bf16.msra.mxu0 %v344
        %358 = vmatprep.subr.bf16.mxu0 0
        %359 = vmatpush1.bf16.msra.mxu0 %v325
        %360 = vmatprep.subr.bf16.mxu0 0
        %361 = vmatpush1.bf16.msra.mxu0 %v324
        %362 = vmatprep.subr.bf16.mxu0 0
        %363 = vmatpush2.bf16.msra.mxu0 0
        %364 = vmatprep.subr.bf16.mxu0 0
        %365 = vmatpush2.bf16.msra.mxu0 0
        %366 = vmatprep.subr.bf16.mxu0 0
        %367 = vmatpush2.bf16.msra.mxu0 0
        %368 = vmatprep.subr.bf16.mxu0 0
        %369 = vmatpush2.bf16.msra.mxu0 0
        %370 = vmatprep.subr.bf16.mxu0 0
        %371 = vmatpush2.bf16.msra.mxu0 0
        %372 = vmatprep.subr.bf16.mxu0 0
        %373 = vmatpush2.bf16.msra.mxu0 0
        %374 = vmatprep.subr.bf16.mxu0 0
        %375 = vmatpush2.bf16.msra.mxu0 0
        %376 = vmatprep.subr.bf16.mxu0 0
        %377 = vmatpush2.bf16.msra.mxu0 0
        %378 = vmatprep.mubr.bf16.mxu0 0
        %379 = vmatmul.mubr.bf16.gmra.mxu0 %v331
        %v380 = vpop.f32.mrf.mxu0
        %v381 = vadd.f32 %v294, %v380
        %v382 = vpop.f32.mrf.mxu0
        %v383 = vpop.f32.mrf.mxu0
        %v384 = vadd.f32 %v294, %v383
        %v385 = vpop.f32.mrf.mxu0
        %386 = vmatprep.mubr.bf16.mxu0 0
        %387 = vmatmul.mubr.bf16.gmra.mxu0 %v334
        %v388 = vpop.f32.mrf.mxu0
        %v389 = vadd.f32 %v294, %v388
        %v390 = vpop.f32.mrf.mxu0
        %v391 = vpop.f32.mrf.mxu0
        %v392 = vadd.f32 %v294, %v391
        %v393 = vpop.f32.mrf.mxu0
        %394 = vmatprep.mubr.bf16.mxu0 0
        %395 = vmatmul.mubr.bf16.gmra.mxu0 %v337
        %v396 = vpop.f32.mrf.mxu0
        %v397 = vadd.f32 %v294, %v396
        %v398 = vpop.f32.mrf.mxu0
        %v399 = vpop.f32.mrf.mxu0
        %v400 = vadd.f32 %v294, %v399
        %v401 = vpop.f32.mrf.mxu0
        %402 = vmatprep.mubr.bf16.mxu0 0
        %403 = vmatmul.mubr.bf16.gmra.mxu0 %v340
        %v404 = vpop.f32.mrf.mxu0
        %v405 = vadd.f32 %v294, %v404
        %v406 = vpop.f32.mrf.mxu0
        %v407 = vpop.f32.mrf.mxu0
        %v408 = vpop.f32.mrf.mxu0
        %409 = vdwg.mxu0
        %v410 = vmax.f32 %v381, 0.0
        %v411 = vmax.f32 %v384, 0.0
        %v412 = vmax.f32 %v389, 0.0
        %v413 = vmax.f32 %v392, 0.0
        %v414 = vmax.f32 %v397, 0.0
        %v415 = vmax.f32 %v400, 0.0
        %v416 = vmax.f32 %v405, 0.0
        %v417 = vld [vmem:[%s3] sm:$0xf]
        %v418 = vld [vmem:[%s3 + $0x4] sm:$0xf]
        %v419 = vld [vmem:[%s3 + $0x8] sm:$0xf]
        %v420 = vld [vmem:[%s3 + $0xc] sm:$0xf]
        %v421 = vld [vmem:[%s3 + $0x10] sm:$0xf]
        %v422 = vld [vmem:[%s3 + $0x14] sm:$0xf]
        %v423 = vld [vmem:[%s3 + $0x18] sm:$0xf]
        %v424 = vld [vmem:[%s3 + $0x1c] sm:$0xf]
        %v425 = vld [vmem:[%s3 + $0x20] sm:$0xf]
        %v426 = vld [vmem:[%s3 + $0x24] sm:$0xf]
        %v427 = vld [vmem:[%s3 + $0x28] sm:$0xf]
        %v428 = vld [vmem:[%s3 + $0x2c] sm:$0xf]
        %v429 = vld [vmem:[%s3 + $0x30] sm:$0xf]
        %v430 = vld [vmem:[%s3 + $0x34] sm:$0xf]
        %v431 = vld [vmem:[%s3 + $0x38] sm:$0xf]
        %v432 = vld [vmem:[%s3 + $0x3c] sm:$0xf]
        %v433 = vld [vmem:[%s3 + $0x40] sm:$0xf]
        %v434 = vld [vmem:[%s3 + $0x44] sm:$0xf]
        %v435 = vld [vmem:[%s3 + $0x48] sm:$0xf]
        %v436 = vld [vmem:[%s3 + $0x4c] sm:$0xf]
        %v437 = vld [vmem:[%s3 + $0x50] sm:$0xf]
        %v438 = vld [vmem:[%s3 + $0x54] sm:$0xf]
        %v439 = vld [vmem:[%s3 + $0x58] sm:$0xf]
        %v440 = vld [vmem:[%s3 + $0x5c] sm:$0xf]
        %v441 = vld [vmem:[%s3 + $0x60] sm:$0xf]
        %v442 = vld [vmem:[%s3 + $0x64] sm:$0xf]
        %v443 = vld [vmem:[%s3 + $0x68] sm:$0xf]
        %v444 = vld [vmem:[%s3 + $0x6c] sm:$0xf]
        %v445 = vld [vmem:[%s3 + $0x70] sm:$0xf]
        %v446 = vld [vmem:[%s3 + $0x74] sm:$0xf]
        %v447 = vld [vmem:[%s3 + $0x78] sm:$0xf]
        %v448 = vld [vmem:[%s3 + $0x7c] sm:$0xf]
        %v449 = vld [vmem:[%s3 + $0x80] sm:$0xf]
        %v450 = vld [vmem:[%s3 + $0x84] sm:$0xf]
        %v451 = vld [vmem:[%s3 + $0x88] sm:$0xf]
        %v452 = vld [vmem:[%s3 + $0x8c] sm:$0xf]
        %v453 = vld [vmem:[%s5] sm:$0xf]
        %v454 = vld [vmem:[%s5 + $0x4] sm:$0xf]
        %v455 = vld [vmem:[%s5 + $0x8] sm:$0xf]
        %v456 = vld [vmem:[%s5 + $0xc] sm:$0xf]
        %v457 = vld [vmem:[%s5 + $0x10] sm:$0xf]
        %v458 = vld [vmem:[%s5 + $0x14] sm:$0xf]
        %v459 = vld [vmem:[%s5 + $0x18] sm:$0xf]
        %v460 = vld [vmem:[%s5 + $0x1c] sm:$0xf]
        %v461 = vld [vmem:[%s5 + $0x20] sm:$0xf]
        %v462 = vld [vmem:[%s5 + $0x24] sm:$0xf]
        %v463 = vld [vmem:[%s5 + $0x28] sm:$0xf]
        %v464 = vld [vmem:[%s5 + $0x2c] sm:$0xf]
        %v465 = vld [vmem:[%s5 + $0x30] sm:$0xf]
        %v466 = vld [vmem:[%s5 + $0x34] sm:$0xf]
        %v467 = vld [vmem:[%s5 + $0x38] sm:$0xf]
        %v468 = vld [vmem:[%s5 + $0x3c] sm:$0xf]
        %v469 = vld [vmem:[%s5 + $0x40] sm:$0xf]
        %v470 = vld [vmem:[%s5 + $0x44] sm:$0xf]
        %v471 = vld [vmem:[%s5 + $0x48] sm:$0xf]
        %v472 = vld [vmem:[%s5 + $0x4c] sm:$0xf]
        %v473 = vld [vmem:[%s5 + $0x50] sm:$0xf]
        %v474 = vld [vmem:[%s5 + $0x54] sm:$0xf]
        %v475 = vld [vmem:[%s5 + $0x58] sm:$0xf]
        %v476 = vld [vmem:[%s5 + $0x5c] sm:$0xf]
        %v477 = vld [vmem:[%s5 + $0x60] sm:$0xf]
        %v478 = vld [vmem:[%s5 + $0x64] sm:$0xf]
        %v479 = vld [vmem:[%s5 + $0x68] sm:$0xf]
        %v480 = vld [vmem:[%s5 + $0x6c] sm:$0xf]
        %v481 = vld [vmem:[%s5 + $0x70] sm:$0xf]
        %v482 = vld [vmem:[%s5 + $0x74] sm:$0xf]
        %v483 = vld [vmem:[%s5 + $0x78] sm:$0xf]
        %v484 = vld [vmem:[%s5 + $0x7c] sm:$0xf]
        %v485 = vld [vmem:[%s5 + $0x80] sm:$0xf]
        %v486 = vld [vmem:[%s5 + $0x84] sm:$0xf]
        %v487 = vld [vmem:[%s5 + $0x88] sm:$0xf]
        %v488 = vld [vmem:[%s5 + $0x8c] sm:$0xf]
        %v489 = vld [vmem:[%s5 + $0x90] sm:$0xf]
        %v490 = vld [vmem:[%s5 + $0x94] sm:$0xf]
        %v491 = vld [vmem:[%s5 + $0x98] sm:$0xf]
        %v492 = vld [vmem:[%s5 + $0x9c] sm:$0xf]
        %v493 = vld [vmem:[%s5 + $0xa0] sm:$0xf]
        %v494 = vld [vmem:[%s5 + $0xa4] sm:$0xf]
        %v495 = vld [vmem:[%s5 + $0xa8] sm:$0xf]
        %v496 = vld [vmem:[%s5 + $0xac] sm:$0xf]
        %v497 = vld [vmem:[%s5 + $0xb0] sm:$0xf]
        %v498 = vld [vmem:[%s5 + $0xb4] sm:$0xf]
        %v499 = vld [vmem:[%s5 + $0xb8] sm:$0xf]
        %v500 = vld [vmem:[%s5 + $0xbc] sm:$0xf]
        %v501 = vld [vmem:[%s5 + $0xc0] sm:$0xf]
        %v502 = vld [vmem:[%s5 + $0xc4] sm:$0xf]
        %v503 = vld [vmem:[%s5 + $0xc8] sm:$0xf]
        %v504 = vld [vmem:[%s5 + $0xcc] sm:$0xf]
        %v505 = vld [vmem:[%s5 + $0xd0] sm:$0xf]
        %v506 = vld [vmem:[%s5 + $0xd4] sm:$0xf]
        %v507 = vld [vmem:[%s5 + $0xd8] sm:$0xf]
        %v508 = vld [vmem:[%s5 + $0xdc] sm:$0xf]
        %v509 = vld [vmem:[%s5 + $0xe0] sm:$0xf]
        %v510 = vld [vmem:[%s5 + $0xe4] sm:$0xf]
        %v511 = vld [vmem:[%s5 + $0xe8] sm:$0xf]
        %v512 = vld [vmem:[%s5 + $0xec] sm:$0xf]
        %v513 = vld [vmem:[%s5 + $0xf0] sm:$0xf]
        %v514 = vld [vmem:[%s5 + $0xf4] sm:$0xf]
        %v515 = vld [vmem:[%s5 + $0xf8] sm:$0xf]
        %v516 = vld [vmem:[%s5 + $0xfc] sm:$0xf]
        %v517 = vld [vmem:[%s5 + $0x100] sm:$0xf]
        %v518 = vld [vmem:[%s5 + $0x104] sm:$0xf]
        %v519 = vld [vmem:[%s5 + $0x108] sm:$0xf]
        %v520 = vld [vmem:[%s5 + $0x10c] sm:$0xf]
        %v521 = vld [vmem:[%s5 + $0x110] sm:$0xf]
        %v522 = vld [vmem:[%s5 + $0x114] sm:$0xf]
        %v523 = vld [vmem:[%s5 + $0x118] sm:$0xf]
        %v524 = vld [vmem:[%s5 + $0x11c] sm:$0xf]
        %v525 = vld [vmem:[%s5 + $0x120] sm:$0xf]
        %v526 = vld [vmem:[%s5 + $0x124] sm:$0xf]
        %v527 = vld [vmem:[%s5 + $0x128] sm:$0xf]
        %v528 = vld [vmem:[%s5 + $0x12c] sm:$0xf]
        %v529 = vld [vmem:[%s5 + $0x130] sm:$0xf]
        %v530 = vld [vmem:[%s5 + $0x134] sm:$0xf]
        %v531 = vld [vmem:[%s5 + $0x138] sm:$0xf]
        %v532 = vld [vmem:[%s5 + $0x13c] sm:$0xf]
        %v533 = vld [vmem:[%s5 + $0x140] sm:$0xf]
        %v534 = vld [vmem:[%s5 + $0x144] sm:$0xf]
        %v535 = vld [vmem:[%s5 + $0x148] sm:$0xf]
        %v536 = vld [vmem:[%s5 + $0x14c] sm:$0xf]
        %v537 = vld [vmem:[%s5 + $0x150] sm:$0xf]
        %v538 = vld [vmem:[%s5 + $0x154] sm:$0xf]
        %v539 = vld [vmem:[%s5 + $0x158] sm:$0xf]
        %v540 = vld [vmem:[%s5 + $0x15c] sm:$0xf]
        %v541 = vld [vmem:[%s5 + $0x160] sm:$0xf]
        %v542 = vld [vmem:[%s5 + $0x164] sm:$0xf]
        %v543 = vld [vmem:[%s5 + $0x168] sm:$0xf]
        %v544 = vld [vmem:[%s5 + $0x16c] sm:$0xf]
        %v545 = vld [vmem:[%s5 + $0x170] sm:$0xf]
        %v546 = vld [vmem:[%s5 + $0x174] sm:$0xf]
        %v547 = vld [vmem:[%s5 + $0x178] sm:$0xf]
        %v548 = vld [vmem:[%s5 + $0x17c] sm:$0xf]
        %v549 = vld [vmem:[%s5 + $0x180] sm:$0xf]
        %v550 = vld [vmem:[%s5 + $0x184] sm:$0xf]
        %v551 = vld [vmem:[%s5 + $0x188] sm:$0xf]
        %v552 = vld [vmem:[%s5 + $0x18c] sm:$0xf]
        %v553 = vld [vmem:[%s4] sm:$0x1]
        %v555 = vlaneseq
        %v556 = vshrl.u32 %v555, 7
        %v557 = vsub.s32 0, %v556
        %v558 = vrot.slane %v553, %v557
        %v560 = vld [vmem:[%s6] sm:$0x1]
        %v561 = vpack.c.bf16 %v410, %v410
        %v566 = vunpack.c.l.b16 %v417
        %v567 = vunpack.c.l.b16 %v418
        %v568 = vunpack.c.l.b16 %v419
        %v569 = vunpack.c.l.b16 %v420
        %v570 = vpack.c.b16 %v567, %v566
        %v571 = vpack.c.b16 %v569, %v568
        %vm574 = vcmask 261120
        %v576 = vsel %vm574, %v561, 0
        %578 = vmatprep.subr.bf16.mxu0 0
        %579 = vmatpush1.bf16.msra.mxu0 0
        %580 = vmatprep.subr.bf16.mxu0 0
        %581 = vmatpush1.bf16.msra.mxu0 0
        %582 = vmatprep.subr.bf16.mxu0 0
        %583 = vmatpush1.bf16.msra.mxu0 0
        %584 = vmatprep.subr.bf16.mxu0 0
        %585 = vmatpush1.bf16.msra.mxu0 0
        %586 = vmatprep.subr.bf16.mxu0 0
        %587 = vmatpush1.bf16.msra.mxu0 0
        %588 = vmatprep.subr.bf16.mxu0 0
        %589 = vmatpush1.bf16.msra.mxu0 0
        %590 = vmatprep.subr.bf16.mxu0 0
        %591 = vmatpush1.bf16.msra.mxu0 %v571
        %592 = vmatprep.subr.bf16.mxu0 0
        %593 = vmatpush1.bf16.msra.mxu0 %v570
        %594 = vmatprep.subr.bf16.mxu0 0
        %595 = vmatpush2.bf16.msra.mxu0 0
        %596 = vmatprep.subr.bf16.mxu0 0
        %597 = vmatpush2.bf16.msra.mxu0 0
        %598 = vmatprep.subr.bf16.mxu0 0
        %599 = vmatpush2.bf16.msra.mxu0 0
        %600 = vmatprep.subr.bf16.mxu0 0
        %601 = vmatpush2.bf16.msra.mxu0 0
        %602 = vmatprep.subr.bf16.mxu0 0
        %603 = vmatpush2.bf16.msra.mxu0 0
        %604 = vmatprep.subr.bf16.mxu0 0
        %605 = vmatpush2.bf16.msra.mxu0 0
        %606 = vmatprep.subr.bf16.mxu0 0
        %607 = vmatpush2.bf16.msra.mxu0 0
        %608 = vmatprep.subr.bf16.mxu0 0
        %609 = vmatpush2.bf16.msra.mxu0 0
        %610 = vmatprep.mubr.bf16.mxu0 0
        %611 = vmatmul.mubr.bf16.gmra.mxu0 %v576
        %v612 = vpop.f32.mrf.mxu0
        %v613 = vadd.f32 0.0, %v612
        %v614 = vpop.f32.mrf.mxu0
        %v615 = vpop.f32.mrf.mxu0
        %v616 = vpop.f32.mrf.mxu0
        %617 = vdwg.mxu0
        %v618 = vadd.f32 %v558, %v613
        %v619 = vshrl.u32 %v561, 16
        %v621 = vshll.u32 %v561, 16
        %v623 = vrot.slane %v621, 1
        %v624 = vor.u32 %v619, %v623
        %v629 = vunpack.c.l.b16 %v421
        %v630 = vunpack.c.l.b16 %v422
        %v631 = vunpack.c.l.b16 %v423
        %v632 = vunpack.c.l.b16 %v424
        %v633 = vpack.c.b16 %v630, %v629
        %v634 = vpack.c.b16 %v632, %v631
        %v638 = vsel %vm574, %v624, 0
        %640 = vmatprep.subr.bf16.mxu0 0
        %641 = vmatpush1.bf16.msra.mxu0 0
        %642 = vmatprep.subr.bf16.mxu0 0
        %643 = vmatpush1.bf16.msra.mxu0 0
        %644 = vmatprep.subr.bf16.mxu0 0
        %645 = vmatpush1.bf16.msra.mxu0 0
        %646 = vmatprep.subr.bf16.mxu0 0
        %647 = vmatpush1.bf16.msra.mxu0 0
        %648 = vmatprep.subr.bf16.mxu0 0
        %649 = vmatpush1.bf16.msra.mxu0 0
        %650 = vmatprep.subr.bf16.mxu0 0
        %651 = vmatpush1.bf16.msra.mxu0 0
        %652 = vmatprep.subr.bf16.mxu0 0
        %653 = vmatpush1.bf16.msra.mxu0 %v634
        %654 = vmatprep.subr.bf16.mxu0 0
        %655 = vmatpush1.bf16.msra.mxu0 %v633
        %656 = vmatprep.subr.bf16.mxu0 0
        %657 = vmatpush2.bf16.msra.mxu0 0
        %658 = vmatprep.subr.bf16.mxu0 0
        %659 = vmatpush2.bf16.msra.mxu0 0
        %660 = vmatprep.subr.bf16.mxu0 0
        %661 = vmatpush2.bf16.msra.mxu0 0
        %662 = vmatprep.subr.bf16.mxu0 0
        %663 = vmatpush2.bf16.msra.mxu0 0
        %664 = vmatprep.subr.bf16.mxu0 0
        %665 = vmatpush2.bf16.msra.mxu0 0
        %666 = vmatprep.subr.bf16.mxu0 0
        %667 = vmatpush2.bf16.msra.mxu0 0
        %668 = vmatprep.subr.bf16.mxu0 0
        %669 = vmatpush2.bf16.msra.mxu0 0
        %670 = vmatprep.subr.bf16.mxu0 0
        %671 = vmatpush2.bf16.msra.mxu0 0
        %672 = vmatprep.mubr.bf16.mxu0 0
        %673 = vmatmul.mubr.bf16.gmra.mxu0 %v638
        %v674 = vpop.f32.mrf.mxu0
        %v675 = vadd.f32 0.0, %v674
        %v676 = vpop.f32.mrf.mxu0
        %v677 = vpop.f32.mrf.mxu0
        %v678 = vpop.f32.mrf.mxu0
        %679 = vdwg.mxu0
        %v680 = vadd.f32 %v618, %v675
        %v682 = vrot.slane %v561, 1
        %v687 = vunpack.c.l.b16 %v425
        %v688 = vunpack.c.l.b16 %v426
        %v689 = vunpack.c.l.b16 %v427
        %v690 = vunpack.c.l.b16 %v428
        %v691 = vpack.c.b16 %v688, %v687
        %v692 = vpack.c.b16 %v690, %v689
        %v696 = vsel %vm574, %v682, 0
        %698 = vmatprep.subr.bf16.mxu0 0
        %699 = vmatpush1.bf16.msra.mxu0 0
        %700 = vmatprep.subr.bf16.mxu0 0
        %701 = vmatpush1.bf16.msra.mxu0 0
        %702 = vmatprep.subr.bf16.mxu0 0
        %703 = vmatpush1.bf16.msra.mxu0 0
        %704 = vmatprep.subr.bf16.mxu0 0
        %705 = vmatpush1.bf16.msra.mxu0 0
        %706 = vmatprep.subr.bf16.mxu0 0
        %707 = vmatpush1.bf16.msra.mxu0 0
        %708 = vmatprep.subr.bf16.mxu0 0
        %709 = vmatpush1.bf16.msra.mxu0 0
        %710 = vmatprep.subr.bf16.mxu0 0
        %711 = vmatpush1.bf16.msra.mxu0 %v692
        %712 = vmatprep.subr.bf16.mxu0 0
        %713 = vmatpush1.bf16.msra.mxu0 %v691
        %714 = vmatprep.subr.bf16.mxu0 0
        %715 = vmatpush2.bf16.msra.mxu0 0
        %716 = vmatprep.subr.bf16.mxu0 0
        %717 = vmatpush2.bf16.msra.mxu0 0
        %718 = vmatprep.subr.bf16.mxu0 0
        %719 = vmatpush2.bf16.msra.mxu0 0
        %720 = vmatprep.subr.bf16.mxu0 0
        %721 = vmatpush2.bf16.msra.mxu0 0
        %722 = vmatprep.subr.bf16.mxu0 0
        %723 = vmatpush2.bf16.msra.mxu0 0
        %724 = vmatprep.subr.bf16.mxu0 0
        %725 = vmatpush2.bf16.msra.mxu0 0
        %726 = vmatprep.subr.bf16.mxu0 0
        %727 = vmatpush2.bf16.msra.mxu0 0
        %728 = vmatprep.subr.bf16.mxu0 0
        %729 = vmatpush2.bf16.msra.mxu0 0
        %730 = vmatprep.mubr.bf16.mxu0 0
        %731 = vmatmul.mubr.bf16.gmra.mxu0 %v696
        %v732 = vpop.f32.mrf.mxu0
        %v733 = vadd.f32 0.0, %v732
        %v734 = vpop.f32.mrf.mxu0
        %v735 = vpop.f32.mrf.mxu0
        %v736 = vpop.f32.mrf.mxu0
        %737 = vdwg.mxu0
        %v738 = vadd.f32 %v680, %v733
        %v739 = vpack.c.bf16 %v411, %v410
        %v741 = vshrl.u32 %v739, 16
        %v743 = vrot.slane %v741, 3
        %v744 = vshll.u32 %v739, 16
        %v746 = vrot.slane %v744, 4
        %v747 = vor.u32 %v743, %v746
        %v752 = vunpack.c.l.b16 %v429
        %v753 = vunpack.c.l.b16 %v430
        %v754 = vunpack.c.l.b16 %v431
        %v755 = vunpack.c.l.b16 %v432
        %v756 = vpack.c.b16 %v753, %v752
        %v757 = vpack.c.b16 %v755, %v754
        %v761 = vsel %vm574, %v747, 0
        %763 = vmatprep.subr.bf16.mxu0 0
        %764 = vmatpush1.bf16.msra.mxu0 0
        %765 = vmatprep.subr.bf16.mxu0 0
        %766 = vmatpush1.bf16.msra.mxu0 0
        %767 = vmatprep.subr.bf16.mxu0 0
        %768 = vmatpush1.bf16.msra.mxu0 0
        %769 = vmatprep.subr.bf16.mxu0 0
        %770 = vmatpush1.bf16.msra.mxu0 0
        %771 = vmatprep.subr.bf16.mxu0 0
        %772 = vmatpush1.bf16.msra.mxu0 0
        %773 = vmatprep.subr.bf16.mxu0 0
        %774 = vmatpush1.bf16.msra.mxu0 0
        %775 = vmatprep.subr.bf16.mxu0 0
        %776 = vmatpush1.bf16.msra.mxu0 %v757
        %777 = vmatprep.subr.bf16.mxu0 0
        %778 = vmatpush1.bf16.msra.mxu0 %v756
        %779 = vmatprep.subr.bf16.mxu0 0
        %780 = vmatpush2.bf16.msra.mxu0 0
        %781 = vmatprep.subr.bf16.mxu0 0
        %782 = vmatpush2.bf16.msra.mxu0 0
        %783 = vmatprep.subr.bf16.mxu0 0
        %784 = vmatpush2.bf16.msra.mxu0 0
        %785 = vmatprep.subr.bf16.mxu0 0
        %786 = vmatpush2.bf16.msra.mxu0 0
        %787 = vmatprep.subr.bf16.mxu0 0
        %788 = vmatpush2.bf16.msra.mxu0 0
        %789 = vmatprep.subr.bf16.mxu0 0
        %790 = vmatpush2.bf16.msra.mxu0 0
        %791 = vmatprep.subr.bf16.mxu0 0
        %792 = vmatpush2.bf16.msra.mxu0 0
        %793 = vmatprep.subr.bf16.mxu0 0
        %794 = vmatpush2.bf16.msra.mxu0 0
        %795 = vmatprep.mubr.bf16.mxu0 0
        %796 = vmatmul.mubr.bf16.gmra.mxu0 %v761
        %v797 = vpop.f32.mrf.mxu0
        %v798 = vadd.f32 0.0, %v797
        %v799 = vpop.f32.mrf.mxu0
        %v800 = vpop.f32.mrf.mxu0
        %v801 = vpop.f32.mrf.mxu0
        %802 = vdwg.mxu0
        %v803 = vadd.f32 %v738, %v798
        %v804 = vpack.c.bf16 %v411, %v411
        %v809 = vunpack.c.l.b16 %v433
        %v810 = vunpack.c.l.b16 %v434
        %v811 = vunpack.c.l.b16 %v435
        %v812 = vunpack.c.l.b16 %v436
        %v813 = vpack.c.b16 %v810, %v809
        %v814 = vpack.c.b16 %v812, %v811
        %v818 = vsel %vm574, %v804, 0
        %820 = vmatprep.subr.bf16.mxu0 0
        %821 = vmatpush1.bf16.msra.mxu0 0
        %822 = vmatprep.subr.bf16.mxu0 0
        %823 = vmatpush1.bf16.msra.mxu0 0
        %824 = vmatprep.subr.bf16.mxu0 0
        %825 = vmatpush1.bf16.msra.mxu0 0
        %826 = vmatprep.subr.bf16.mxu0 0
        %827 = vmatpush1.bf16.msra.mxu0 0
        %828 = vmatprep.subr.bf16.mxu0 0
        %829 = vmatpush1.bf16.msra.mxu0 0
        %830 = vmatprep.subr.bf16.mxu0 0
        %831 = vmatpush1.bf16.msra.mxu0 0
        %832 = vmatprep.subr.bf16.mxu0 0
        %833 = vmatpush1.bf16.msra.mxu0 %v814
        %834 = vmatprep.subr.bf16.mxu0 0
        %835 = vmatpush1.bf16.msra.mxu0 %v813
        %836 = vmatprep.subr.bf16.mxu0 0
        %837 = vmatpush2.bf16.msra.mxu0 0
        %838 = vmatprep.subr.bf16.mxu0 0
        %839 = vmatpush2.bf16.msra.mxu0 0
        %840 = vmatprep.subr.bf16.mxu0 0
        %841 = vmatpush2.bf16.msra.mxu0 0
        %842 = vmatprep.subr.bf16.mxu0 0
        %843 = vmatpush2.bf16.msra.mxu0 0
        %844 = vmatprep.subr.bf16.mxu0 0
        %845 = vmatpush2.bf16.msra.mxu0 0
        %846 = vmatprep.subr.bf16.mxu0 0
        %847 = vmatpush2.bf16.msra.mxu0 0
        %848 = vmatprep.subr.bf16.mxu0 0
        %849 = vmatpush2.bf16.msra.mxu0 0
        %850 = vmatprep.subr.bf16.mxu0 0
        %851 = vmatpush2.bf16.msra.mxu0 0
        %852 = vmatprep.mubr.bf16.mxu0 0
        %853 = vmatmul.mubr.bf16.gmra.mxu0 %v818
        %v854 = vpop.f32.mrf.mxu0
        %v855 = vadd.f32 0.0, %v854
        %v856 = vpop.f32.mrf.mxu0
        %v857 = vpop.f32.mrf.mxu0
        %v858 = vpop.f32.mrf.mxu0
        %859 = vdwg.mxu0
        %v860 = vadd.f32 %v803, %v855
        %v861 = vshrl.u32 %v804, 16
        %v863 = vshll.u32 %v804, 16
        %v865 = vrot.slane %v863, 1
        %v866 = vor.u32 %v861, %v865
        %v871 = vunpack.c.l.b16 %v437
        %v872 = vunpack.c.l.b16 %v438
        %v873 = vunpack.c.l.b16 %v439
        %v874 = vunpack.c.l.b16 %v440
        %v875 = vpack.c.b16 %v872, %v871
        %v876 = vpack.c.b16 %v874, %v873
        %v880 = vsel %vm574, %v866, 0
        %882 = vmatprep.subr.bf16.mxu0 0
        %883 = vmatpush1.bf16.msra.mxu0 0
        %884 = vmatprep.subr.bf16.mxu0 0
        %885 = vmatpush1.bf16.msra.mxu0 0
        %886 = vmatprep.subr.bf16.mxu0 0
        %887 = vmatpush1.bf16.msra.mxu0 0
        %888 = vmatprep.subr.bf16.mxu0 0
        %889 = vmatpush1.bf16.msra.mxu0 0
        %890 = vmatprep.subr.bf16.mxu0 0
        %891 = vmatpush1.bf16.msra.mxu0 0
        %892 = vmatprep.subr.bf16.mxu0 0
        %893 = vmatpush1.bf16.msra.mxu0 0
        %894 = vmatprep.subr.bf16.mxu0 0
        %895 = vmatpush1.bf16.msra.mxu0 %v876
        %896 = vmatprep.subr.bf16.mxu0 0
        %897 = vmatpush1.bf16.msra.mxu0 %v875
        %898 = vmatprep.subr.bf16.mxu0 0
        %899 = vmatpush2.bf16.msra.mxu0 0
        %900 = vmatprep.subr.bf16.mxu0 0
        %901 = vmatpush2.bf16.msra.mxu0 0
        %902 = vmatprep.subr.bf16.mxu0 0
        %903 = vmatpush2.bf16.msra.mxu0 0
        %904 = vmatprep.subr.bf16.mxu0 0
        %905 = vmatpush2.bf16.msra.mxu0 0
        %906 = vmatprep.subr.bf16.mxu0 0
        %907 = vmatpush2.bf16.msra.mxu0 0
        %908 = vmatprep.subr.bf16.mxu0 0
        %909 = vmatpush2.bf16.msra.mxu0 0
        %910 = vmatprep.subr.bf16.mxu0 0
        %911 = vmatpush2.bf16.msra.mxu0 0
        %912 = vmatprep.subr.bf16.mxu0 0
        %913 = vmatpush2.bf16.msra.mxu0 0
        %914 = vmatprep.mubr.bf16.mxu0 0
        %915 = vmatmul.mubr.bf16.gmra.mxu0 %v880
        %v916 = vpop.f32.mrf.mxu0
        %v917 = vadd.f32 0.0, %v916
        %v918 = vpop.f32.mrf.mxu0
        %v919 = vpop.f32.mrf.mxu0
        %v920 = vpop.f32.mrf.mxu0
        %921 = vdwg.mxu0
        %v922 = vadd.f32 %v860, %v917
        %v923 = vpack.c.bf16 %v412, %v411
        %v925 = vrot.slane %v923, 3
        %v930 = vunpack.c.l.b16 %v441
        %v931 = vunpack.c.l.b16 %v442
        %v932 = vunpack.c.l.b16 %v443
        %v933 = vunpack.c.l.b16 %v444
        %v934 = vpack.c.b16 %v931, %v930
        %v935 = vpack.c.b16 %v933, %v932
        %v939 = vsel %vm574, %v925, 0
        %941 = vmatprep.subr.bf16.mxu0 0
        %942 = vmatpush1.bf16.msra.mxu0 0
        %943 = vmatprep.subr.bf16.mxu0 0
        %944 = vmatpush1.bf16.msra.mxu0 0
        %945 = vmatprep.subr.bf16.mxu0 0
        %946 = vmatpush1.bf16.msra.mxu0 0
        %947 = vmatprep.subr.bf16.mxu0 0
        %948 = vmatpush1.bf16.msra.mxu0 0
        %949 = vmatprep.subr.bf16.mxu0 0
        %950 = vmatpush1.bf16.msra.mxu0 0
        %951 = vmatprep.subr.bf16.mxu0 0
        %952 = vmatpush1.bf16.msra.mxu0 0
        %953 = vmatprep.subr.bf16.mxu0 0
        %954 = vmatpush1.bf16.msra.mxu0 %v935
        %955 = vmatprep.subr.bf16.mxu0 0
        %956 = vmatpush1.bf16.msra.mxu0 %v934
        %957 = vmatprep.subr.bf16.mxu0 0
        %958 = vmatpush2.bf16.msra.mxu0 0
        %959 = vmatprep.subr.bf16.mxu0 0
        %960 = vmatpush2.bf16.msra.mxu0 0
        %961 = vmatprep.subr.bf16.mxu0 0
        %962 = vmatpush2.bf16.msra.mxu0 0
        %963 = vmatprep.subr.bf16.mxu0 0
        %964 = vmatpush2.bf16.msra.mxu0 0
        %965 = vmatprep.subr.bf16.mxu0 0
        %966 = vmatpush2.bf16.msra.mxu0 0
        %967 = vmatprep.subr.bf16.mxu0 0
        %968 = vmatpush2.bf16.msra.mxu0 0
        %969 = vmatprep.subr.bf16.mxu0 0
        %970 = vmatpush2.bf16.msra.mxu0 0
        %971 = vmatprep.subr.bf16.mxu0 0
        %972 = vmatpush2.bf16.msra.mxu0 0
        %973 = vmatprep.mubr.bf16.mxu0 0
        %974 = vmatmul.mubr.bf16.gmra.mxu0 %v939
        %v975 = vpop.f32.mrf.mxu0
        %v976 = vadd.f32 0.0, %v975
        %v977 = vpop.f32.mrf.mxu0
        %v978 = vpop.f32.mrf.mxu0
        %v979 = vpop.f32.mrf.mxu0
        %980 = vdwg.mxu0
        %v981 = vadd.f32 %v922, %v976
        %v983 = vshrl.u32 %v923, 16
        %v985 = vrot.slane %v983, 3
        %v986 = vshll.u32 %v923, 16
        %v988 = vrot.slane %v986, 4
        %v989 = vor.u32 %v985, %v988
        %v994 = vunpack.c.l.b16 %v445
        %v995 = vunpack.c.l.b16 %v446
        %v996 = vunpack.c.l.b16 %v447
        %v997 = vunpack.c.l.b16 %v448
        %v998 = vpack.c.b16 %v995, %v994
        %v999 = vpack.c.b16 %v997, %v996
        %v1003 = vsel %vm574, %v989, 0
        %1005 = vmatprep.subr.bf16.mxu0 0
        %1006 = vmatpush1.bf16.msra.mxu0 0
        %1007 = vmatprep.subr.bf16.mxu0 0
        %1008 = vmatpush1.bf16.msra.mxu0 0
        %1009 = vmatprep.subr.bf16.mxu0 0
        %1010 = vmatpush1.bf16.msra.mxu0 0
        %1011 = vmatprep.subr.bf16.mxu0 0
        %1012 = vmatpush1.bf16.msra.mxu0 0
        %1013 = vmatprep.subr.bf16.mxu0 0
        %1014 = vmatpush1.bf16.msra.mxu0 0
        %1015 = vmatprep.subr.bf16.mxu0 0
        %1016 = vmatpush1.bf16.msra.mxu0 0
        %1017 = vmatprep.subr.bf16.mxu0 0
        %1018 = vmatpush1.bf16.msra.mxu0 %v999
        %1019 = vmatprep.subr.bf16.mxu0 0
        %1020 = vmatpush1.bf16.msra.mxu0 %v998
        %1021 = vmatprep.subr.bf16.mxu0 0
        %1022 = vmatpush2.bf16.msra.mxu0 0
        %1023 = vmatprep.subr.bf16.mxu0 0
        %1024 = vmatpush2.bf16.msra.mxu0 0
        %1025 = vmatprep.subr.bf16.mxu0 0
        %1026 = vmatpush2.bf16.msra.mxu0 0
        %1027 = vmatprep.subr.bf16.mxu0 0
        %1028 = vmatpush2.bf16.msra.mxu0 0
        %1029 = vmatprep.subr.bf16.mxu0 0
        %1030 = vmatpush2.bf16.msra.mxu0 0
        %1031 = vmatprep.subr.bf16.mxu0 0
        %1032 = vmatpush2.bf16.msra.mxu0 0
        %1033 = vmatprep.subr.bf16.mxu0 0
        %1034 = vmatpush2.bf16.msra.mxu0 0
        %1035 = vmatprep.subr.bf16.mxu0 0
        %1036 = vmatpush2.bf16.msra.mxu0 0
        %1037 = vmatprep.mubr.bf16.mxu0 0
        %1038 = vmatmul.mubr.bf16.gmra.mxu0 %v1003
        %v1039 = vpop.f32.mrf.mxu0
        %v1040 = vadd.f32 0.0, %v1039
        %v1041 = vpop.f32.mrf.mxu0
        %v1042 = vpop.f32.mrf.mxu0
        %v1043 = vpop.f32.mrf.mxu0
        %1044 = vdwg.mxu0
        %v1045 = vadd.f32 %v981, %v1040
        %v1046 = vpack.c.bf16 %v412, %v412
        %v1051 = vunpack.c.l.b16 %v449
        %v1052 = vunpack.c.l.b16 %v450
        %v1053 = vunpack.c.l.b16 %v451
        %v1054 = vunpack.c.l.b16 %v452
        %v1055 = vpack.c.b16 %v1052, %v1051
        %v1056 = vpack.c.b16 %v1054, %v1053
        %v1060 = vsel %vm574, %v1046, 0
        %1062 = vmatprep.subr.bf16.mxu0 0
        %1063 = vmatpush1.bf16.msra.mxu0 0
        %1064 = vmatprep.subr.bf16.mxu0 0
        %1065 = vmatpush1.bf16.msra.mxu0 0
        %1066 = vmatprep.subr.bf16.mxu0 0
        %1067 = vmatpush1.bf16.msra.mxu0 0
        %1068 = vmatprep.subr.bf16.mxu0 0
        %1069 = vmatpush1.bf16.msra.mxu0 0
        %1070 = vmatprep.subr.bf16.mxu0 0
        %1071 = vmatpush1.bf16.msra.mxu0 0
        %1072 = vmatprep.subr.bf16.mxu0 0
        %1073 = vmatpush1.bf16.msra.mxu0 0
        %1074 = vmatprep.subr.bf16.mxu0 0
        %1075 = vmatpush1.bf16.msra.mxu0 %v1056
        %1076 = vmatprep.subr.bf16.mxu0 0
        %1077 = vmatpush1.bf16.msra.mxu0 %v1055
        %1078 = vmatprep.subr.bf16.mxu0 0
        %1079 = vmatpush2.bf16.msra.mxu0 0
        %1080 = vmatprep.subr.bf16.mxu0 0
        %1081 = vmatpush2.bf16.msra.mxu0 0
        %1082 = vmatprep.subr.bf16.mxu0 0
        %1083 = vmatpush2.bf16.msra.mxu0 0
        %1084 = vmatprep.subr.bf16.mxu0 0
        %1085 = vmatpush2.bf16.msra.mxu0 0
        %1086 = vmatprep.subr.bf16.mxu0 0
        %1087 = vmatpush2.bf16.msra.mxu0 0
        %1088 = vmatprep.subr.bf16.mxu0 0
        %1089 = vmatpush2.bf16.msra.mxu0 0
        %1090 = vmatprep.subr.bf16.mxu0 0
        %1091 = vmatpush2.bf16.msra.mxu0 0
        %1092 = vmatprep.subr.bf16.mxu0 0
        %1093 = vmatpush2.bf16.msra.mxu0 0
        %1094 = vmatprep.mubr.bf16.mxu0 0
        %1095 = vmatmul.mubr.bf16.gmra.mxu0 %v1060
        %v1096 = vpop.f32.mrf.mxu0
        %v1097 = vadd.f32 0.0, %v1096
        %v1098 = vpop.f32.mrf.mxu0
        %v1099 = vpop.f32.mrf.mxu0
        %v1100 = vpop.f32.mrf.mxu0
        %1101 = vdwg.mxu0
        %v1102 = vadd.f32 %v1045, %v1097
        %v1103 = vmax.f32 %v1102, 0.0
        %v1104 = vpack.c.bf16 %v1103, %v1103
        %v1109 = vunpack.c.l.b16 %v453
        %v1110 = vunpack.c.l.b16 %v454
        %v1111 = vunpack.c.l.b16 %v455
        %v1112 = vunpack.c.l.b16 %v456
        %v1113 = vpack.c.b16 %v1110, %v1109
        %v1114 = vpack.c.b16 %v1112, %v1111
        %v1118 = vsel %vm574, %v1104, 0
        %1120 = vmatprep.subr.bf16.mxu0 0
        %1121 = vmatpush1.bf16.msra.mxu0 0
        %1122 = vmatprep.subr.bf16.mxu0 0
        %1123 = vmatpush1.bf16.msra.mxu0 0
        %1124 = vmatprep.subr.bf16.mxu0 0
        %1125 = vmatpush1.bf16.msra.mxu0 0
        %1126 = vmatprep.subr.bf16.mxu0 0
        %1127 = vmatpush1.bf16.msra.mxu0 0
        %1128 = vmatprep.subr.bf16.mxu0 0
        %1129 = vmatpush1.bf16.msra.mxu0 0
        %1130 = vmatprep.subr.bf16.mxu0 0
        %1131 = vmatpush1.bf16.msra.mxu0 0
        %1132 = vmatprep.subr.bf16.mxu0 0
        %1133 = vmatpush1.bf16.msra.mxu0 %v1114
        %1134 = vmatprep.subr.bf16.mxu0 0
        %1135 = vmatpush1.bf16.msra.mxu0 %v1113
        %1136 = vmatprep.subr.bf16.mxu0 0
        %1137 = vmatpush2.bf16.msra.mxu0 0
        %1138 = vmatprep.subr.bf16.mxu0 0
        %1139 = vmatpush2.bf16.msra.mxu0 0
        %1140 = vmatprep.subr.bf16.mxu0 0
        %1141 = vmatpush2.bf16.msra.mxu0 0
        %1142 = vmatprep.subr.bf16.mxu0 0
        %1143 = vmatpush2.bf16.msra.mxu0 0
        %1144 = vmatprep.subr.bf16.mxu0 0
        %1145 = vmatpush2.bf16.msra.mxu0 0
        %1146 = vmatprep.subr.bf16.mxu0 0
        %1147 = vmatpush2.bf16.msra.mxu0 0
        %1148 = vmatprep.subr.bf16.mxu0 0
        %1149 = vmatpush2.bf16.msra.mxu0 0
        %1150 = vmatprep.subr.bf16.mxu0 0
        %1151 = vmatpush2.bf16.msra.mxu0 0
        %1152 = vmatprep.mubr.bf16.mxu0 0
        %1153 = vmatmul.mubr.bf16.gmra.mxu0 %v1118
        %v1154 = vpop.f32.mrf.mxu0
        %v1155 = vadd.f32 0.0, %v1154
        %v1156 = vpop.f32.mrf.mxu0
        %v1157 = vpop.f32.mrf.mxu0
        %v1158 = vpop.f32.mrf.mxu0
        %1159 = vdwg.mxu0
        %v1160 = vadd.f32 %v560, %v1155
        %v1161 = vshrl.u32 %v1104, 16
        %v1167 = vunpack.c.l.b16 %v457
        %v1168 = vunpack.c.l.b16 %v458
        %v1169 = vunpack.c.l.b16 %v459
        %v1170 = vunpack.c.l.b16 %v460
        %v1171 = vpack.c.b16 %v1168, %v1167
        %v1172 = vpack.c.b16 %v1170, %v1169
        %v1176 = vsel %vm574, %v1161, 0
        %1178 = vmatprep.subr.bf16.mxu0 0
        %1179 = vmatpush1.bf16.msra.mxu0 0
        %1180 = vmatprep.subr.bf16.mxu0 0
        %1181 = vmatpush1.bf16.msra.mxu0 0
        %1182 = vmatprep.subr.bf16.mxu0 0
        %1183 = vmatpush1.bf16.msra.mxu0 0
        %1184 = vmatprep.subr.bf16.mxu0 0
        %1185 = vmatpush1.bf16.msra.mxu0 0
        %1186 = vmatprep.subr.bf16.mxu0 0
        %1187 = vmatpush1.bf16.msra.mxu0 0
        %1188 = vmatprep.subr.bf16.mxu0 0
        %1189 = vmatpush1.bf16.msra.mxu0 0
        %1190 = vmatprep.subr.bf16.mxu0 0
        %1191 = vmatpush1.bf16.msra.mxu0 %v1172
        %1192 = vmatprep.subr.bf16.mxu0 0
        %1193 = vmatpush1.bf16.msra.mxu0 %v1171
        %1194 = vmatprep.subr.bf16.mxu0 0
        %1195 = vmatpush2.bf16.msra.mxu0 0
        %1196 = vmatprep.subr.bf16.mxu0 0
        %1197 = vmatpush2.bf16.msra.mxu0 0
        %1198 = vmatprep.subr.bf16.mxu0 0
        %1199 = vmatpush2.bf16.msra.mxu0 0
        %1200 = vmatprep.subr.bf16.mxu0 0
        %1201 = vmatpush2.bf16.msra.mxu0 0
        %1202 = vmatprep.subr.bf16.mxu0 0
        %1203 = vmatpush2.bf16.msra.mxu0 0
        %1204 = vmatprep.subr.bf16.mxu0 0
        %1205 = vmatpush2.bf16.msra.mxu0 0
        %1206 = vmatprep.subr.bf16.mxu0 0
        %1207 = vmatpush2.bf16.msra.mxu0 0
        %1208 = vmatprep.subr.bf16.mxu0 0
        %1209 = vmatpush2.bf16.msra.mxu0 0
        %1210 = vmatprep.mubr.bf16.mxu0 0
        %1211 = vmatmul.mubr.bf16.gmra.mxu0 %v1176
        %v1212 = vpop.f32.mrf.mxu0
        %v1213 = vadd.f32 0.0, %v1212
        %v1214 = vpop.f32.mrf.mxu0
        %v1215 = vpop.f32.mrf.mxu0
        %v1216 = vpop.f32.mrf.mxu0
        %1217 = vdwg.mxu0
        %v1218 = vadd.f32 %v1160, %v1213
        %v1220 = vrot.slane %v1104, 1
        %v1225 = vunpack.c.l.b16 %v461
        %v1226 = vunpack.c.l.b16 %v462
        %v1227 = vunpack.c.l.b16 %v463
        %v1228 = vunpack.c.l.b16 %v464
        %v1229 = vpack.c.b16 %v1226, %v1225
        %v1230 = vpack.c.b16 %v1228, %v1227
        %v1234 = vsel %vm574, %v1220, 0
        %1236 = vmatprep.subr.bf16.mxu0 0
        %1237 = vmatpush1.bf16.msra.mxu0 0
        %1238 = vmatprep.subr.bf16.mxu0 0
        %1239 = vmatpush1.bf16.msra.mxu0 0
        %1240 = vmatprep.subr.bf16.mxu0 0
        %1241 = vmatpush1.bf16.msra.mxu0 0
        %1242 = vmatprep.subr.bf16.mxu0 0
        %1243 = vmatpush1.bf16.msra.mxu0 0
        %1244 = vmatprep.subr.bf16.mxu0 0
        %1245 = vmatpush1.bf16.msra.mxu0 0
        %1246 = vmatprep.subr.bf16.mxu0 0
        %1247 = vmatpush1.bf16.msra.mxu0 0
        %1248 = vmatprep.subr.bf16.mxu0 0
        %1249 = vmatpush1.bf16.msra.mxu0 %v1230
        %1250 = vmatprep.subr.bf16.mxu0 0
        %1251 = vmatpush1.bf16.msra.mxu0 %v1229
        %1252 = vmatprep.subr.bf16.mxu0 0
        %1253 = vmatpush2.bf16.msra.mxu0 0
        %1254 = vmatprep.subr.bf16.mxu0 0
        %1255 = vmatpush2.bf16.msra.mxu0 0
        %1256 = vmatprep.subr.bf16.mxu0 0
        %1257 = vmatpush2.bf16.msra.mxu0 0
        %1258 = vmatprep.subr.bf16.mxu0 0
        %1259 = vmatpush2.bf16.msra.mxu0 0
        %1260 = vmatprep.subr.bf16.mxu0 0
        %1261 = vmatpush2.bf16.msra.mxu0 0
        %1262 = vmatprep.subr.bf16.mxu0 0
        %1263 = vmatpush2.bf16.msra.mxu0 0
        %1264 = vmatprep.subr.bf16.mxu0 0
        %1265 = vmatpush2.bf16.msra.mxu0 0
        %1266 = vmatprep.subr.bf16.mxu0 0
        %1267 = vmatpush2.bf16.msra.mxu0 0
        %1268 = vmatprep.mubr.bf16.mxu0 0
        %1269 = vmatmul.mubr.bf16.gmra.mxu0 %v1234
        %v1270 = vpop.f32.mrf.mxu0
        %v1271 = vadd.f32 0.0, %v1270
        %v1272 = vpop.f32.mrf.mxu0
        %v1273 = vpop.f32.mrf.mxu0
        %v1274 = vpop.f32.mrf.mxu0
        %1275 = vdwg.mxu0
        %v1276 = vadd.f32 %v1218, %v1271
        %v1277 = vrot.slane %v1161, 1
        %v1282 = vunpack.c.l.b16 %v465
        %v1283 = vunpack.c.l.b16 %v466
        %v1284 = vunpack.c.l.b16 %v467
        %v1285 = vunpack.c.l.b16 %v468
        %v1286 = vpack.c.b16 %v1283, %v1282
        %v1287 = vpack.c.b16 %v1285, %v1284
        %v1291 = vsel %vm574, %v1277, 0
        %1293 = vmatprep.subr.bf16.mxu0 0
        %1294 = vmatpush1.bf16.msra.mxu0 0
        %1295 = vmatprep.subr.bf16.mxu0 0
        %1296 = vmatpush1.bf16.msra.mxu0 0
        %1297 = vmatprep.subr.bf16.mxu0 0
        %1298 = vmatpush1.bf16.msra.mxu0 0
        %1299 = vmatprep.subr.bf16.mxu0 0
        %1300 = vmatpush1.bf16.msra.mxu0 0
        %1301 = vmatprep.subr.bf16.mxu0 0
        %1302 = vmatpush1.bf16.msra.mxu0 0
        %1303 = vmatprep.subr.bf16.mxu0 0
        %1304 = vmatpush1.bf16.msra.mxu0 0
        %1305 = vmatprep.subr.bf16.mxu0 0
        %1306 = vmatpush1.bf16.msra.mxu0 %v1287
        %1307 = vmatprep.subr.bf16.mxu0 0
        %1308 = vmatpush1.bf16.msra.mxu0 %v1286
        %1309 = vmatprep.subr.bf16.mxu0 0
        %1310 = vmatpush2.bf16.msra.mxu0 0
        %1311 = vmatprep.subr.bf16.mxu0 0
        %1312 = vmatpush2.bf16.msra.mxu0 0
        %1313 = vmatprep.subr.bf16.mxu0 0
        %1314 = vmatpush2.bf16.msra.mxu0 0
        %1315 = vmatprep.subr.bf16.mxu0 0
        %1316 = vmatpush2.bf16.msra.mxu0 0
        %1317 = vmatprep.subr.bf16.mxu0 0
        %1318 = vmatpush2.bf16.msra.mxu0 0
        %1319 = vmatprep.subr.bf16.mxu0 0
        %1320 = vmatpush2.bf16.msra.mxu0 0
        %1321 = vmatprep.subr.bf16.mxu0 0
        %1322 = vmatpush2.bf16.msra.mxu0 0
        %1323 = vmatprep.subr.bf16.mxu0 0
        %1324 = vmatpush2.bf16.msra.mxu0 0
        %1325 = vmatprep.mubr.bf16.mxu0 0
        %1326 = vmatmul.mubr.bf16.gmra.mxu0 %v1291
        %v1327 = vpop.f32.mrf.mxu0
        %v1328 = vadd.f32 0.0, %v1327
        %v1329 = vpop.f32.mrf.mxu0
        %v1330 = vpop.f32.mrf.mxu0
        %v1331 = vpop.f32.mrf.mxu0
        %1332 = vdwg.mxu0
        %v1333 = vadd.f32 %v1276, %v1328
        %v1334 = vrot.slane %v1104, 2
        %v1339 = vunpack.c.l.b16 %v469
        %v1340 = vunpack.c.l.b16 %v470
        %v1341 = vunpack.c.l.b16 %v471
        %v1342 = vunpack.c.l.b16 %v472
        %v1343 = vpack.c.b16 %v1340, %v1339
        %v1344 = vpack.c.b16 %v1342, %v1341
        %v1348 = vsel %vm574, %v1334, 0
        %1350 = vmatprep.subr.bf16.mxu0 0
        %1351 = vmatpush1.bf16.msra.mxu0 0
        %1352 = vmatprep.subr.bf16.mxu0 0
        %1353 = vmatpush1.bf16.msra.mxu0 0
        %1354 = vmatprep.subr.bf16.mxu0 0
        %1355 = vmatpush1.bf16.msra.mxu0 0
        %1356 = vmatprep.subr.bf16.mxu0 0
        %1357 = vmatpush1.bf16.msra.mxu0 0
        %1358 = vmatprep.subr.bf16.mxu0 0
        %1359 = vmatpush1.bf16.msra.mxu0 0
        %1360 = vmatprep.subr.bf16.mxu0 0
        %1361 = vmatpush1.bf16.msra.mxu0 0
        %1362 = vmatprep.subr.bf16.mxu0 0
        %1363 = vmatpush1.bf16.msra.mxu0 %v1344
        %1364 = vmatprep.subr.bf16.mxu0 0
        %1365 = vmatpush1.bf16.msra.mxu0 %v1343
        %1366 = vmatprep.subr.bf16.mxu0 0
        %1367 = vmatpush2.bf16.msra.mxu0 0
        %1368 = vmatprep.subr.bf16.mxu0 0
        %1369 = vmatpush2.bf16.msra.mxu0 0
        %1370 = vmatprep.subr.bf16.mxu0 0
        %1371 = vmatpush2.bf16.msra.mxu0 0
        %1372 = vmatprep.subr.bf16.mxu0 0
        %1373 = vmatpush2.bf16.msra.mxu0 0
        %1374 = vmatprep.subr.bf16.mxu0 0
        %1375 = vmatpush2.bf16.msra.mxu0 0
        %1376 = vmatprep.subr.bf16.mxu0 0
        %1377 = vmatpush2.bf16.msra.mxu0 0
        %1378 = vmatprep.subr.bf16.mxu0 0
        %1379 = vmatpush2.bf16.msra.mxu0 0
        %1380 = vmatprep.subr.bf16.mxu0 0
        %1381 = vmatpush2.bf16.msra.mxu0 0
        %1382 = vmatprep.mubr.bf16.mxu0 0
        %1383 = vmatmul.mubr.bf16.gmra.mxu0 %v1348
        %v1384 = vpop.f32.mrf.mxu0
        %v1385 = vadd.f32 0.0, %v1384
        %v1386 = vpop.f32.mrf.mxu0
        %v1387 = vpop.f32.mrf.mxu0
        %v1388 = vpop.f32.mrf.mxu0
        %1389 = vdwg.mxu0
        %v1390 = vadd.f32 %v1333, %v1385
        %1391 = vmatprep.subr.bf16.mxu0 0
        %1392 = vmatpush1.bf16.msra.mxu0 0
        %1393 = vmatprep.subr.bf16.mxu0 0
        %1394 = vmatpush1.bf16.msra.mxu0 0
        %1395 = vmatprep.subr.bf16.mxu0 0
        %1396 = vmatpush1.bf16.msra.mxu0 0
        %1397 = vmatprep.subr.bf16.mxu0 0
        %1398 = vmatpush1.bf16.msra.mxu0 0
        %1399 = vmatprep.subr.bf16.mxu0 0
        %1400 = vmatpush1.bf16.msra.mxu0 0
        %1401 = vmatprep.subr.bf16.mxu0 0
        %1402 = vmatpush1.bf16.msra.mxu0 0
        %1403 = vmatprep.subr.bf16.mxu0 0
        %1404 = vmatpush1.bf16.msra.mxu0 %v571
        %1405 = vmatprep.subr.bf16.mxu0 0
        %1406 = vmatpush1.bf16.msra.mxu0 %v570
        %1407 = vmatprep.subr.bf16.mxu0 0
        %1408 = vmatpush2.bf16.msra.mxu0 0
        %1409 = vmatprep.subr.bf16.mxu0 0
        %1410 = vmatpush2.bf16.msra.mxu0 0
        %1411 = vmatprep.subr.bf16.mxu0 0
        %1412 = vmatpush2.bf16.msra.mxu0 0
        %1413 = vmatprep.subr.bf16.mxu0 0
        %1414 = vmatpush2.bf16.msra.mxu0 0
        %1415 = vmatprep.subr.bf16.mxu0 0
        %1416 = vmatpush2.bf16.msra.mxu0 0
        %1417 = vmatprep.subr.bf16.mxu0 0
        %1418 = vmatpush2.bf16.msra.mxu0 0
        %1419 = vmatprep.subr.bf16.mxu0 0
        %1420 = vmatpush2.bf16.msra.mxu0 0
        %1421 = vmatprep.subr.bf16.mxu0 0
        %1422 = vmatpush2.bf16.msra.mxu0 0
        %1423 = vmatprep.mubr.bf16.mxu0 0
        %1424 = vmatmul.mubr.bf16.gmra.mxu0 %v761
        %v1425 = vpop.f32.mrf.mxu0
        %v1426 = vadd.f32 0.0, %v1425
        %v1427 = vpop.f32.mrf.mxu0
        %v1428 = vpop.f32.mrf.mxu0
        %v1429 = vpop.f32.mrf.mxu0
        %1430 = vdwg.mxu0
        %v1431 = vadd.f32 %v558, %v1426
        %1432 = vmatprep.subr.bf16.mxu0 0
        %1433 = vmatpush1.bf16.msra.mxu0 0
        %1434 = vmatprep.subr.bf16.mxu0 0
        %1435 = vmatpush1.bf16.msra.mxu0 0
        %1436 = vmatprep.subr.bf16.mxu0 0
        %1437 = vmatpush1.bf16.msra.mxu0 0
        %1438 = vmatprep.subr.bf16.mxu0 0
        %1439 = vmatpush1.bf16.msra.mxu0 0
        %1440 = vmatprep.subr.bf16.mxu0 0
        %1441 = vmatpush1.bf16.msra.mxu0 0
        %1442 = vmatprep.subr.bf16.mxu0 0
        %1443 = vmatpush1.bf16.msra.mxu0 0
        %1444 = vmatprep.subr.bf16.mxu0 0
        %1445 = vmatpush1.bf16.msra.mxu0 %v634
        %1446 = vmatprep.subr.bf16.mxu0 0
        %1447 = vmatpush1.bf16.msra.mxu0 %v633
        %1448 = vmatprep.subr.bf16.mxu0 0
        %1449 = vmatpush2.bf16.msra.mxu0 0
        %1450 = vmatprep.subr.bf16.mxu0 0
        %1451 = vmatpush2.bf16.msra.mxu0 0
        %1452 = vmatprep.subr.bf16.mxu0 0
        %1453 = vmatpush2.bf16.msra.mxu0 0
        %1454 = vmatprep.subr.bf16.mxu0 0
        %1455 = vmatpush2.bf16.msra.mxu0 0
        %1456 = vmatprep.subr.bf16.mxu0 0
        %1457 = vmatpush2.bf16.msra.mxu0 0
        %1458 = vmatprep.subr.bf16.mxu0 0
        %1459 = vmatpush2.bf16.msra.mxu0 0
        %1460 = vmatprep.subr.bf16.mxu0 0
        %1461 = vmatpush2.bf16.msra.mxu0 0
        %1462 = vmatprep.subr.bf16.mxu0 0
        %1463 = vmatpush2.bf16.msra.mxu0 0
        %1464 = vmatprep.mubr.bf16.mxu0 0
        %1465 = vmatmul.mubr.bf16.gmra.mxu0 %v818
        %v1466 = vpop.f32.mrf.mxu0
        %v1467 = vadd.f32 0.0, %v1466
        %v1468 = vpop.f32.mrf.mxu0
        %v1469 = vpop.f32.mrf.mxu0
        %v1470 = vpop.f32.mrf.mxu0
        %1471 = vdwg.mxu0
        %v1472 = vadd.f32 %v1431, %v1467
        %1473 = vmatprep.subr.bf16.mxu0 0
        %1474 = vmatpush1.bf16.msra.mxu0 0
        %1475 = vmatprep.subr.bf16.mxu0 0
        %1476 = vmatpush1.bf16.msra.mxu0 0
        %1477 = vmatprep.subr.bf16.mxu0 0
        %1478 = vmatpush1.bf16.msra.mxu0 0
        %1479 = vmatprep.subr.bf16.mxu0 0
        %1480 = vmatpush1.bf16.msra.mxu0 0
        %1481 = vmatprep.subr.bf16.mxu0 0
        %1482 = vmatpush1.bf16.msra.mxu0 0
        %1483 = vmatprep.subr.bf16.mxu0 0
        %1484 = vmatpush1.bf16.msra.mxu0 0
        %1485 = vmatprep.subr.bf16.mxu0 0
        %1486 = vmatpush1.bf16.msra.mxu0 %v692
        %1487 = vmatprep.subr.bf16.mxu0 0
        %1488 = vmatpush1.bf16.msra.mxu0 %v691
        %1489 = vmatprep.subr.bf16.mxu0 0
        %1490 = vmatpush2.bf16.msra.mxu0 0
        %1491 = vmatprep.subr.bf16.mxu0 0
        %1492 = vmatpush2.bf16.msra.mxu0 0
        %1493 = vmatprep.subr.bf16.mxu0 0
        %1494 = vmatpush2.bf16.msra.mxu0 0
        %1495 = vmatprep.subr.bf16.mxu0 0
        %1496 = vmatpush2.bf16.msra.mxu0 0
        %1497 = vmatprep.subr.bf16.mxu0 0
        %1498 = vmatpush2.bf16.msra.mxu0 0
        %1499 = vmatprep.subr.bf16.mxu0 0
        %1500 = vmatpush2.bf16.msra.mxu0 0
        %1501 = vmatprep.subr.bf16.mxu0 0
        %1502 = vmatpush2.bf16.msra.mxu0 0
        %1503 = vmatprep.subr.bf16.mxu0 0
        %1504 = vmatpush2.bf16.msra.mxu0 0
        %1505 = vmatprep.mubr.bf16.mxu0 0
        %1506 = vmatmul.mubr.bf16.gmra.mxu0 %v880
        %v1507 = vpop.f32.mrf.mxu0
        %v1508 = vadd.f32 0.0, %v1507
        %v1509 = vpop.f32.mrf.mxu0
        %v1510 = vpop.f32.mrf.mxu0
        %v1511 = vpop.f32.mrf.mxu0
        %1512 = vdwg.mxu0
        %v1513 = vadd.f32 %v1472, %v1508
        %1514 = vmatprep.subr.bf16.mxu0 0
        %1515 = vmatpush1.bf16.msra.mxu0 0
        %1516 = vmatprep.subr.bf16.mxu0 0
        %1517 = vmatpush1.bf16.msra.mxu0 0
        %1518 = vmatprep.subr.bf16.mxu0 0
        %1519 = vmatpush1.bf16.msra.mxu0 0
        %1520 = vmatprep.subr.bf16.mxu0 0
        %1521 = vmatpush1.bf16.msra.mxu0 0
        %1522 = vmatprep.subr.bf16.mxu0 0
        %1523 = vmatpush1.bf16.msra.mxu0 0
        %1524 = vmatprep.subr.bf16.mxu0 0
        %1525 = vmatpush1.bf16.msra.mxu0 0
        %1526 = vmatprep.subr.bf16.mxu0 0
        %1527 = vmatpush1.bf16.msra.mxu0 %v757
        %1528 = vmatprep.subr.bf16.mxu0 0
        %1529 = vmatpush1.bf16.msra.mxu0 %v756
        %1530 = vmatprep.subr.bf16.mxu0 0
        %1531 = vmatpush2.bf16.msra.mxu0 0
        %1532 = vmatprep.subr.bf16.mxu0 0
        %1533 = vmatpush2.bf16.msra.mxu0 0
        %1534 = vmatprep.subr.bf16.mxu0 0
        %1535 = vmatpush2.bf16.msra.mxu0 0
        %1536 = vmatprep.subr.bf16.mxu0 0
        %1537 = vmatpush2.bf16.msra.mxu0 0
        %1538 = vmatprep.subr.bf16.mxu0 0
        %1539 = vmatpush2.bf16.msra.mxu0 0
        %1540 = vmatprep.subr.bf16.mxu0 0
        %1541 = vmatpush2.bf16.msra.mxu0 0
        %1542 = vmatprep.subr.bf16.mxu0 0
        %1543 = vmatpush2.bf16.msra.mxu0 0
        %1544 = vmatprep.subr.bf16.mxu0 0
        %1545 = vmatpush2.bf16.msra.mxu0 0
        %1546 = vmatprep.mubr.bf16.mxu0 0
        %1547 = vmatmul.mubr.bf16.gmra.mxu0 %v939
        %v1548 = vpop.f32.mrf.mxu0
        %v1549 = vadd.f32 0.0, %v1548
        %v1550 = vpop.f32.mrf.mxu0
        %v1551 = vpop.f32.mrf.mxu0
        %v1552 = vpop.f32.mrf.mxu0
        %1553 = vdwg.mxu0
        %v1554 = vadd.f32 %v1513, %v1549
        %1555 = vmatprep.subr.bf16.mxu0 0
        %1556 = vmatpush1.bf16.msra.mxu0 0
        %1557 = vmatprep.subr.bf16.mxu0 0
        %1558 = vmatpush1.bf16.msra.mxu0 0
        %1559 = vmatprep.subr.bf16.mxu0 0
        %1560 = vmatpush1.bf16.msra.mxu0 0
        %1561 = vmatprep.subr.bf16.mxu0 0
        %1562 = vmatpush1.bf16.msra.mxu0 0
        %1563 = vmatprep.subr.bf16.mxu0 0
        %1564 = vmatpush1.bf16.msra.mxu0 0
        %1565 = vmatprep.subr.bf16.mxu0 0
        %1566 = vmatpush1.bf16.msra.mxu0 0
        %1567 = vmatprep.subr.bf16.mxu0 0
        %1568 = vmatpush1.bf16.msra.mxu0 %v814
        %1569 = vmatprep.subr.bf16.mxu0 0
        %1570 = vmatpush1.bf16.msra.mxu0 %v813
        %1571 = vmatprep.subr.bf16.mxu0 0
        %1572 = vmatpush2.bf16.msra.mxu0 0
        %1573 = vmatprep.subr.bf16.mxu0 0
        %1574 = vmatpush2.bf16.msra.mxu0 0
        %1575 = vmatprep.subr.bf16.mxu0 0
        %1576 = vmatpush2.bf16.msra.mxu0 0
        %1577 = vmatprep.subr.bf16.mxu0 0
        %1578 = vmatpush2.bf16.msra.mxu0 0
        %1579 = vmatprep.subr.bf16.mxu0 0
        %1580 = vmatpush2.bf16.msra.mxu0 0
        %1581 = vmatprep.subr.bf16.mxu0 0
        %1582 = vmatpush2.bf16.msra.mxu0 0
        %1583 = vmatprep.subr.bf16.mxu0 0
        %1584 = vmatpush2.bf16.msra.mxu0 0
        %1585 = vmatprep.subr.bf16.mxu0 0
        %1586 = vmatpush2.bf16.msra.mxu0 0
        %1587 = vmatprep.mubr.bf16.mxu0 0
        %1588 = vmatmul.mubr.bf16.gmra.mxu0 %v1003
        %v1589 = vpop.f32.mrf.mxu0
        %v1590 = vadd.f32 0.0, %v1589
        %v1591 = vpop.f32.mrf.mxu0
        %v1592 = vpop.f32.mrf.mxu0
        %v1593 = vpop.f32.mrf.mxu0
        %1594 = vdwg.mxu0
        %v1595 = vadd.f32 %v1554, %v1590
        %1596 = vmatprep.subr.bf16.mxu0 0
        %1597 = vmatpush1.bf16.msra.mxu0 0
        %1598 = vmatprep.subr.bf16.mxu0 0
        %1599 = vmatpush1.bf16.msra.mxu0 0
        %1600 = vmatprep.subr.bf16.mxu0 0
        %1601 = vmatpush1.bf16.msra.mxu0 0
        %1602 = vmatprep.subr.bf16.mxu0 0
        %1603 = vmatpush1.bf16.msra.mxu0 0
        %1604 = vmatprep.subr.bf16.mxu0 0
        %1605 = vmatpush1.bf16.msra.mxu0 0
        %1606 = vmatprep.subr.bf16.mxu0 0
        %1607 = vmatpush1.bf16.msra.mxu0 0
        %1608 = vmatprep.subr.bf16.mxu0 0
        %1609 = vmatpush1.bf16.msra.mxu0 %v876
        %1610 = vmatprep.subr.bf16.mxu0 0
        %1611 = vmatpush1.bf16.msra.mxu0 %v875
        %1612 = vmatprep.subr.bf16.mxu0 0
        %1613 = vmatpush2.bf16.msra.mxu0 0
        %1614 = vmatprep.subr.bf16.mxu0 0
        %1615 = vmatpush2.bf16.msra.mxu0 0
        %1616 = vmatprep.subr.bf16.mxu0 0
        %1617 = vmatpush2.bf16.msra.mxu0 0
        %1618 = vmatprep.subr.bf16.mxu0 0
        %1619 = vmatpush2.bf16.msra.mxu0 0
        %1620 = vmatprep.subr.bf16.mxu0 0
        %1621 = vmatpush2.bf16.msra.mxu0 0
        %1622 = vmatprep.subr.bf16.mxu0 0
        %1623 = vmatpush2.bf16.msra.mxu0 0
        %1624 = vmatprep.subr.bf16.mxu0 0
        %1625 = vmatpush2.bf16.msra.mxu0 0
        %1626 = vmatprep.subr.bf16.mxu0 0
        %1627 = vmatpush2.bf16.msra.mxu0 0
        %1628 = vmatprep.mubr.bf16.mxu0 0
        %1629 = vmatmul.mubr.bf16.gmra.mxu0 %v1060
        %v1630 = vpop.f32.mrf.mxu0
        %v1631 = vadd.f32 0.0, %v1630
        %v1632 = vpop.f32.mrf.mxu0
        %v1633 = vpop.f32.mrf.mxu0
        %v1634 = vpop.f32.mrf.mxu0
        %1635 = vdwg.mxu0
        %v1636 = vadd.f32 %v1595, %v1631
        %v1637 = vpack.c.bf16 %v413, %v412
        %v1639 = vshrl.u32 %v1637, 16
        %v1641 = vrot.slane %v1639, 2
        %v1642 = vshll.u32 %v1637, 16
        %v1644 = vrot.slane %v1642, 3
        %v1645 = vor.u32 %v1641, %v1644
        %v1647 = vsel %vm574, %v1645, 0
        %1649 = vmatprep.subr.bf16.mxu0 0
        %1650 = vmatpush1.bf16.msra.mxu0 0
        %1651 = vmatprep.subr.bf16.mxu0 0
        %1652 = vmatpush1.bf16.msra.mxu0 0
        %1653 = vmatprep.subr.bf16.mxu0 0
        %1654 = vmatpush1.bf16.msra.mxu0 0
        %1655 = vmatprep.subr.bf16.mxu0 0
        %1656 = vmatpush1.bf16.msra.mxu0 0
        %1657 = vmatprep.subr.bf16.mxu0 0
        %1658 = vmatpush1.bf16.msra.mxu0 0
        %1659 = vmatprep.subr.bf16.mxu0 0
        %1660 = vmatpush1.bf16.msra.mxu0 0
        %1661 = vmatprep.subr.bf16.mxu0 0
        %1662 = vmatpush1.bf16.msra.mxu0 %v935
        %1663 = vmatprep.subr.bf16.mxu0 0
        %1664 = vmatpush1.bf16.msra.mxu0 %v934
        %1665 = vmatprep.subr.bf16.mxu0 0
        %1666 = vmatpush2.bf16.msra.mxu0 0
        %1667 = vmatprep.subr.bf16.mxu0 0
        %1668 = vmatpush2.bf16.msra.mxu0 0
        %1669 = vmatprep.subr.bf16.mxu0 0
        %1670 = vmatpush2.bf16.msra.mxu0 0
        %1671 = vmatprep.subr.bf16.mxu0 0
        %1672 = vmatpush2.bf16.msra.mxu0 0
        %1673 = vmatprep.subr.bf16.mxu0 0
        %1674 = vmatpush2.bf16.msra.mxu0 0
        %1675 = vmatprep.subr.bf16.mxu0 0
        %1676 = vmatpush2.bf16.msra.mxu0 0
        %1677 = vmatprep.subr.bf16.mxu0 0
        %1678 = vmatpush2.bf16.msra.mxu0 0
        %1679 = vmatprep.subr.bf16.mxu0 0
        %1680 = vmatpush2.bf16.msra.mxu0 0
        %1681 = vmatprep.mubr.bf16.mxu0 0
        %1682 = vmatmul.mubr.bf16.gmra.mxu0 %v1647
        %v1683 = vpop.f32.mrf.mxu0
        %v1684 = vadd.f32 0.0, %v1683
        %v1685 = vpop.f32.mrf.mxu0
        %v1686 = vpop.f32.mrf.mxu0
        %v1687 = vpop.f32.mrf.mxu0
        %1688 = vdwg.mxu0
        %v1689 = vadd.f32 %v1636, %v1684
        %v1691 = vrot.slane %v1637, 3
        %v1693 = vsel %vm574, %v1691, 0
        %1695 = vmatprep.subr.bf16.mxu0 0
        %1696 = vmatpush1.bf16.msra.mxu0 0
        %1697 = vmatprep.subr.bf16.mxu0 0
        %1698 = vmatpush1.bf16.msra.mxu0 0
        %1699 = vmatprep.subr.bf16.mxu0 0
        %1700 = vmatpush1.bf16.msra.mxu0 0
        %1701 = vmatprep.subr.bf16.mxu0 0
        %1702 = vmatpush1.bf16.msra.mxu0 0
        %1703 = vmatprep.subr.bf16.mxu0 0
        %1704 = vmatpush1.bf16.msra.mxu0 0
        %1705 = vmatprep.subr.bf16.mxu0 0
        %1706 = vmatpush1.bf16.msra.mxu0 0
        %1707 = vmatprep.subr.bf16.mxu0 0
        %1708 = vmatpush1.bf16.msra.mxu0 %v999
        %1709 = vmatprep.subr.bf16.mxu0 0
        %1710 = vmatpush1.bf16.msra.mxu0 %v998
        %1711 = vmatprep.subr.bf16.mxu0 0
        %1712 = vmatpush2.bf16.msra.mxu0 0
        %1713 = vmatprep.subr.bf16.mxu0 0
        %1714 = vmatpush2.bf16.msra.mxu0 0
        %1715 = vmatprep.subr.bf16.mxu0 0
        %1716 = vmatpush2.bf16.msra.mxu0 0
        %1717 = vmatprep.subr.bf16.mxu0 0
        %1718 = vmatpush2.bf16.msra.mxu0 0
        %1719 = vmatprep.subr.bf16.mxu0 0
        %1720 = vmatpush2.bf16.msra.mxu0 0
        %1721 = vmatprep.subr.bf16.mxu0 0
        %1722 = vmatpush2.bf16.msra.mxu0 0
        %1723 = vmatprep.subr.bf16.mxu0 0
        %1724 = vmatpush2.bf16.msra.mxu0 0
        %1725 = vmatprep.subr.bf16.mxu0 0
        %1726 = vmatpush2.bf16.msra.mxu0 0
        %1727 = vmatprep.mubr.bf16.mxu0 0
        %1728 = vmatmul.mubr.bf16.gmra.mxu0 %v1693
        %v1729 = vpop.f32.mrf.mxu0
        %v1730 = vadd.f32 0.0, %v1729
        %v1731 = vpop.f32.mrf.mxu0
        %v1732 = vpop.f32.mrf.mxu0
        %v1733 = vpop.f32.mrf.mxu0
        %1734 = vdwg.mxu0
        %v1735 = vadd.f32 %v1689, %v1730
        %v1736 = vrot.slane %v1639, 3
        %v1737 = vrot.slane %v1642, 4
        %v1738 = vor.u32 %v1736, %v1737
        %v1740 = vsel %vm574, %v1738, 0
        %1742 = vmatprep.subr.bf16.mxu0 0
        %1743 = vmatpush1.bf16.msra.mxu0 0
        %1744 = vmatprep.subr.bf16.mxu0 0
        %1745 = vmatpush1.bf16.msra.mxu0 0
        %1746 = vmatprep.subr.bf16.mxu0 0
        %1747 = vmatpush1.bf16.msra.mxu0 0
        %1748 = vmatprep.subr.bf16.mxu0 0
        %1749 = vmatpush1.bf16.msra.mxu0 0
        %1750 = vmatprep.subr.bf16.mxu0 0
        %1751 = vmatpush1.bf16.msra.mxu0 0
        %1752 = vmatprep.subr.bf16.mxu0 0
        %1753 = vmatpush1.bf16.msra.mxu0 0
        %1754 = vmatprep.subr.bf16.mxu0 0
        %1755 = vmatpush1.bf16.msra.mxu0 %v1056
        %1756 = vmatprep.subr.bf16.mxu0 0
        %1757 = vmatpush1.bf16.msra.mxu0 %v1055
        %1758 = vmatprep.subr.bf16.mxu0 0
        %1759 = vmatpush2.bf16.msra.mxu0 0
        %1760 = vmatprep.subr.bf16.mxu0 0
        %1761 = vmatpush2.bf16.msra.mxu0 0
        %1762 = vmatprep.subr.bf16.mxu0 0
        %1763 = vmatpush2.bf16.msra.mxu0 0
        %1764 = vmatprep.subr.bf16.mxu0 0
        %1765 = vmatpush2.bf16.msra.mxu0 0
        %1766 = vmatprep.subr.bf16.mxu0 0
        %1767 = vmatpush2.bf16.msra.mxu0 0
        %1768 = vmatprep.subr.bf16.mxu0 0
        %1769 = vmatpush2.bf16.msra.mxu0 0
        %1770 = vmatprep.subr.bf16.mxu0 0
        %1771 = vmatpush2.bf16.msra.mxu0 0
        %1772 = vmatprep.subr.bf16.mxu0 0
        %1773 = vmatpush2.bf16.msra.mxu0 0
        %1774 = vmatprep.mubr.bf16.mxu0 0
        %1775 = vmatmul.mubr.bf16.gmra.mxu0 %v1740
        %v1776 = vpop.f32.mrf.mxu0
        %v1777 = vadd.f32 0.0, %v1776
        %v1778 = vpop.f32.mrf.mxu0
        %v1779 = vpop.f32.mrf.mxu0
        %v1780 = vpop.f32.mrf.mxu0
        %1781 = vdwg.mxu0
        %v1782 = vadd.f32 %v1735, %v1777
        %v1783 = vmax.f32 %v1782, 0.0
        %v1784 = vpack.c.bf16 %v1783, %v1783
        %v1789 = vunpack.c.l.b16 %v473
        %v1790 = vunpack.c.l.b16 %v474
        %v1791 = vunpack.c.l.b16 %v475
        %v1792 = vunpack.c.l.b16 %v476
        %v1793 = vpack.c.b16 %v1790, %v1789
        %v1794 = vpack.c.b16 %v1792, %v1791
        %v1798 = vsel %vm574, %v1784, 0
        %1800 = vmatprep.subr.bf16.mxu0 0
        %1801 = vmatpush1.bf16.msra.mxu0 0
        %1802 = vmatprep.subr.bf16.mxu0 0
        %1803 = vmatpush1.bf16.msra.mxu0 0
        %1804 = vmatprep.subr.bf16.mxu0 0
        %1805 = vmatpush1.bf16.msra.mxu0 0
        %1806 = vmatprep.subr.bf16.mxu0 0
        %1807 = vmatpush1.bf16.msra.mxu0 0
        %1808 = vmatprep.subr.bf16.mxu0 0
        %1809 = vmatpush1.bf16.msra.mxu0 0
        %1810 = vmatprep.subr.bf16.mxu0 0
        %1811 = vmatpush1.bf16.msra.mxu0 0
        %1812 = vmatprep.subr.bf16.mxu0 0
        %1813 = vmatpush1.bf16.msra.mxu0 %v1794
        %1814 = vmatprep.subr.bf16.mxu0 0
        %1815 = vmatpush1.bf16.msra.mxu0 %v1793
        %1816 = vmatprep.subr.bf16.mxu0 0
        %1817 = vmatpush2.bf16.msra.mxu0 0
        %1818 = vmatprep.subr.bf16.mxu0 0
        %1819 = vmatpush2.bf16.msra.mxu0 0
        %1820 = vmatprep.subr.bf16.mxu0 0
        %1821 = vmatpush2.bf16.msra.mxu0 0
        %1822 = vmatprep.subr.bf16.mxu0 0
        %1823 = vmatpush2.bf16.msra.mxu0 0
        %1824 = vmatprep.subr.bf16.mxu0 0
        %1825 = vmatpush2.bf16.msra.mxu0 0
        %1826 = vmatprep.subr.bf16.mxu0 0
        %1827 = vmatpush2.bf16.msra.mxu0 0
        %1828 = vmatprep.subr.bf16.mxu0 0
        %1829 = vmatpush2.bf16.msra.mxu0 0
        %1830 = vmatprep.subr.bf16.mxu0 0
        %1831 = vmatpush2.bf16.msra.mxu0 0
        %1832 = vmatprep.mubr.bf16.mxu0 0
        %1833 = vmatmul.mubr.bf16.gmra.mxu0 %v1798
        %v1834 = vpop.f32.mrf.mxu0
        %v1835 = vadd.f32 0.0, %v1834
        %v1836 = vpop.f32.mrf.mxu0
        %v1837 = vpop.f32.mrf.mxu0
        %v1838 = vpop.f32.mrf.mxu0
        %1839 = vdwg.mxu0
        %v1840 = vadd.f32 %v1390, %v1835
        %v1841 = vshrl.u32 %v1784, 16
        %v1847 = vunpack.c.l.b16 %v477
        %v1848 = vunpack.c.l.b16 %v478
        %v1849 = vunpack.c.l.b16 %v479
        %v1850 = vunpack.c.l.b16 %v480
        %v1851 = vpack.c.b16 %v1848, %v1847
        %v1852 = vpack.c.b16 %v1850, %v1849
        %v1856 = vsel %vm574, %v1841, 0
        %1858 = vmatprep.subr.bf16.mxu0 0
        %1859 = vmatpush1.bf16.msra.mxu0 0
        %1860 = vmatprep.subr.bf16.mxu0 0
        %1861 = vmatpush1.bf16.msra.mxu0 0
        %1862 = vmatprep.subr.bf16.mxu0 0
        %1863 = vmatpush1.bf16.msra.mxu0 0
        %1864 = vmatprep.subr.bf16.mxu0 0
        %1865 = vmatpush1.bf16.msra.mxu0 0
        %1866 = vmatprep.subr.bf16.mxu0 0
        %1867 = vmatpush1.bf16.msra.mxu0 0
        %1868 = vmatprep.subr.bf16.mxu0 0
        %1869 = vmatpush1.bf16.msra.mxu0 0
        %1870 = vmatprep.subr.bf16.mxu0 0
        %1871 = vmatpush1.bf16.msra.mxu0 %v1852
        %1872 = vmatprep.subr.bf16.mxu0 0
        %1873 = vmatpush1.bf16.msra.mxu0 %v1851
        %1874 = vmatprep.subr.bf16.mxu0 0
        %1875 = vmatpush2.bf16.msra.mxu0 0
        %1876 = vmatprep.subr.bf16.mxu0 0
        %1877 = vmatpush2.bf16.msra.mxu0 0
        %1878 = vmatprep.subr.bf16.mxu0 0
        %1879 = vmatpush2.bf16.msra.mxu0 0
        %1880 = vmatprep.subr.bf16.mxu0 0
        %1881 = vmatpush2.bf16.msra.mxu0 0
        %1882 = vmatprep.subr.bf16.mxu0 0
        %1883 = vmatpush2.bf16.msra.mxu0 0
        %1884 = vmatprep.subr.bf16.mxu0 0
        %1885 = vmatpush2.bf16.msra.mxu0 0
        %1886 = vmatprep.subr.bf16.mxu0 0
        %1887 = vmatpush2.bf16.msra.mxu0 0
        %1888 = vmatprep.subr.bf16.mxu0 0
        %1889 = vmatpush2.bf16.msra.mxu0 0
        %1890 = vmatprep.mubr.bf16.mxu0 0
        %1891 = vmatmul.mubr.bf16.gmra.mxu0 %v1856
        %v1892 = vpop.f32.mrf.mxu0
        %v1893 = vadd.f32 0.0, %v1892
        %v1894 = vpop.f32.mrf.mxu0
        %v1895 = vpop.f32.mrf.mxu0
        %v1896 = vpop.f32.mrf.mxu0
        %1897 = vdwg.mxu0
        %v1898 = vadd.f32 %v1840, %v1893
        %v1900 = vrot.slane %v1784, 1
        %v1905 = vunpack.c.l.b16 %v481
        %v1906 = vunpack.c.l.b16 %v482
        %v1907 = vunpack.c.l.b16 %v483
        %v1908 = vunpack.c.l.b16 %v484
        %v1909 = vpack.c.b16 %v1906, %v1905
        %v1910 = vpack.c.b16 %v1908, %v1907
        %v1914 = vsel %vm574, %v1900, 0
        %1916 = vmatprep.subr.bf16.mxu0 0
        %1917 = vmatpush1.bf16.msra.mxu0 0
        %1918 = vmatprep.subr.bf16.mxu0 0
        %1919 = vmatpush1.bf16.msra.mxu0 0
        %1920 = vmatprep.subr.bf16.mxu0 0
        %1921 = vmatpush1.bf16.msra.mxu0 0
        %1922 = vmatprep.subr.bf16.mxu0 0
        %1923 = vmatpush1.bf16.msra.mxu0 0
        %1924 = vmatprep.subr.bf16.mxu0 0
        %1925 = vmatpush1.bf16.msra.mxu0 0
        %1926 = vmatprep.subr.bf16.mxu0 0
        %1927 = vmatpush1.bf16.msra.mxu0 0
        %1928 = vmatprep.subr.bf16.mxu0 0
        %1929 = vmatpush1.bf16.msra.mxu0 %v1910
        %1930 = vmatprep.subr.bf16.mxu0 0
        %1931 = vmatpush1.bf16.msra.mxu0 %v1909
        %1932 = vmatprep.subr.bf16.mxu0 0
        %1933 = vmatpush2.bf16.msra.mxu0 0
        %1934 = vmatprep.subr.bf16.mxu0 0
        %1935 = vmatpush2.bf16.msra.mxu0 0
        %1936 = vmatprep.subr.bf16.mxu0 0
        %1937 = vmatpush2.bf16.msra.mxu0 0
        %1938 = vmatprep.subr.bf16.mxu0 0
        %1939 = vmatpush2.bf16.msra.mxu0 0
        %1940 = vmatprep.subr.bf16.mxu0 0
        %1941 = vmatpush2.bf16.msra.mxu0 0
        %1942 = vmatprep.subr.bf16.mxu0 0
        %1943 = vmatpush2.bf16.msra.mxu0 0
        %1944 = vmatprep.subr.bf16.mxu0 0
        %1945 = vmatpush2.bf16.msra.mxu0 0
        %1946 = vmatprep.subr.bf16.mxu0 0
        %1947 = vmatpush2.bf16.msra.mxu0 0
        %1948 = vmatprep.mubr.bf16.mxu0 0
        %1949 = vmatmul.mubr.bf16.gmra.mxu0 %v1914
        %v1950 = vpop.f32.mrf.mxu0
        %v1951 = vadd.f32 0.0, %v1950
        %v1952 = vpop.f32.mrf.mxu0
        %v1953 = vpop.f32.mrf.mxu0
        %v1954 = vpop.f32.mrf.mxu0
        %1955 = vdwg.mxu0
        %v1956 = vadd.f32 %v1898, %v1951
        %v1957 = vrot.slane %v1841, 1
        %v1962 = vunpack.c.l.b16 %v485
        %v1963 = vunpack.c.l.b16 %v486
        %v1964 = vunpack.c.l.b16 %v487
        %v1965 = vunpack.c.l.b16 %v488
        %v1966 = vpack.c.b16 %v1963, %v1962
        %v1967 = vpack.c.b16 %v1965, %v1964
        %v1971 = vsel %vm574, %v1957, 0
        %1973 = vmatprep.subr.bf16.mxu0 0
        %1974 = vmatpush1.bf16.msra.mxu0 0
        %1975 = vmatprep.subr.bf16.mxu0 0
        %1976 = vmatpush1.bf16.msra.mxu0 0
        %1977 = vmatprep.subr.bf16.mxu0 0
        %1978 = vmatpush1.bf16.msra.mxu0 0
        %1979 = vmatprep.subr.bf16.mxu0 0
        %1980 = vmatpush1.bf16.msra.mxu0 0
        %1981 = vmatprep.subr.bf16.mxu0 0
        %1982 = vmatpush1.bf16.msra.mxu0 0
        %1983 = vmatprep.subr.bf16.mxu0 0
        %1984 = vmatpush1.bf16.msra.mxu0 0
        %1985 = vmatprep.subr.bf16.mxu0 0
        %1986 = vmatpush1.bf16.msra.mxu0 %v1967
        %1987 = vmatprep.subr.bf16.mxu0 0
        %1988 = vmatpush1.bf16.msra.mxu0 %v1966
        %1989 = vmatprep.subr.bf16.mxu0 0
        %1990 = vmatpush2.bf16.msra.mxu0 0
        %1991 = vmatprep.subr.bf16.mxu0 0
        %1992 = vmatpush2.bf16.msra.mxu0 0
        %1993 = vmatprep.subr.bf16.mxu0 0
        %1994 = vmatpush2.bf16.msra.mxu0 0
        %1995 = vmatprep.subr.bf16.mxu0 0
        %1996 = vmatpush2.bf16.msra.mxu0 0
        %1997 = vmatprep.subr.bf16.mxu0 0
        %1998 = vmatpush2.bf16.msra.mxu0 0
        %1999 = vmatprep.subr.bf16.mxu0 0
        %2000 = vmatpush2.bf16.msra.mxu0 0
        %2001 = vmatprep.subr.bf16.mxu0 0
        %2002 = vmatpush2.bf16.msra.mxu0 0
        %2003 = vmatprep.subr.bf16.mxu0 0
        %2004 = vmatpush2.bf16.msra.mxu0 0
        %2005 = vmatprep.mubr.bf16.mxu0 0
        %2006 = vmatmul.mubr.bf16.gmra.mxu0 %v1971
        %v2007 = vpop.f32.mrf.mxu0
        %v2008 = vadd.f32 0.0, %v2007
        %v2009 = vpop.f32.mrf.mxu0
        %v2010 = vpop.f32.mrf.mxu0
        %v2011 = vpop.f32.mrf.mxu0
        %2012 = vdwg.mxu0
        %v2013 = vadd.f32 %v1956, %v2008
        %v2014 = vrot.slane %v1784, 2
        %v2019 = vunpack.c.l.b16 %v489
        %v2020 = vunpack.c.l.b16 %v490
        %v2021 = vunpack.c.l.b16 %v491
        %v2022 = vunpack.c.l.b16 %v492
        %v2023 = vpack.c.b16 %v2020, %v2019
        %v2024 = vpack.c.b16 %v2022, %v2021
        %v2028 = vsel %vm574, %v2014, 0
        %2030 = vmatprep.subr.bf16.mxu0 0
        %2031 = vmatpush1.bf16.msra.mxu0 0
        %2032 = vmatprep.subr.bf16.mxu0 0
        %2033 = vmatpush1.bf16.msra.mxu0 0
        %2034 = vmatprep.subr.bf16.mxu0 0
        %2035 = vmatpush1.bf16.msra.mxu0 0
        %2036 = vmatprep.subr.bf16.mxu0 0
        %2037 = vmatpush1.bf16.msra.mxu0 0
        %2038 = vmatprep.subr.bf16.mxu0 0
        %2039 = vmatpush1.bf16.msra.mxu0 0
        %2040 = vmatprep.subr.bf16.mxu0 0
        %2041 = vmatpush1.bf16.msra.mxu0 0
        %2042 = vmatprep.subr.bf16.mxu0 0
        %2043 = vmatpush1.bf16.msra.mxu0 %v2024
        %2044 = vmatprep.subr.bf16.mxu0 0
        %2045 = vmatpush1.bf16.msra.mxu0 %v2023
        %2046 = vmatprep.subr.bf16.mxu0 0
        %2047 = vmatpush2.bf16.msra.mxu0 0
        %2048 = vmatprep.subr.bf16.mxu0 0
        %2049 = vmatpush2.bf16.msra.mxu0 0
        %2050 = vmatprep.subr.bf16.mxu0 0
        %2051 = vmatpush2.bf16.msra.mxu0 0
        %2052 = vmatprep.subr.bf16.mxu0 0
        %2053 = vmatpush2.bf16.msra.mxu0 0
        %2054 = vmatprep.subr.bf16.mxu0 0
        %2055 = vmatpush2.bf16.msra.mxu0 0
        %2056 = vmatprep.subr.bf16.mxu0 0
        %2057 = vmatpush2.bf16.msra.mxu0 0
        %2058 = vmatprep.subr.bf16.mxu0 0
        %2059 = vmatpush2.bf16.msra.mxu0 0
        %2060 = vmatprep.subr.bf16.mxu0 0
        %2061 = vmatpush2.bf16.msra.mxu0 0
        %2062 = vmatprep.mubr.bf16.mxu0 0
        %2063 = vmatmul.mubr.bf16.gmra.mxu0 %v2028
        %v2064 = vpop.f32.mrf.mxu0
        %v2065 = vadd.f32 0.0, %v2064
        %v2066 = vpop.f32.mrf.mxu0
        %v2067 = vpop.f32.mrf.mxu0
        %v2068 = vpop.f32.mrf.mxu0
        %2069 = vdwg.mxu0
        %v2070 = vadd.f32 %v2013, %v2065
        %2071 = vmatprep.subr.bf16.mxu0 0
        %2072 = vmatpush1.bf16.msra.mxu0 0
        %2073 = vmatprep.subr.bf16.mxu0 0
        %2074 = vmatpush1.bf16.msra.mxu0 0
        %2075 = vmatprep.subr.bf16.mxu0 0
        %2076 = vmatpush1.bf16.msra.mxu0 0
        %2077 = vmatprep.subr.bf16.mxu0 0
        %2078 = vmatpush1.bf16.msra.mxu0 0
        %2079 = vmatprep.subr.bf16.mxu0 0
        %2080 = vmatpush1.bf16.msra.mxu0 0
        %2081 = vmatprep.subr.bf16.mxu0 0
        %2082 = vmatpush1.bf16.msra.mxu0 0
        %2083 = vmatprep.subr.bf16.mxu0 0
        %2084 = vmatpush1.bf16.msra.mxu0 %v571
        %2085 = vmatprep.subr.bf16.mxu0 0
        %2086 = vmatpush1.bf16.msra.mxu0 %v570
        %2087 = vmatprep.subr.bf16.mxu0 0
        %2088 = vmatpush2.bf16.msra.mxu0 0
        %2089 = vmatprep.subr.bf16.mxu0 0
        %2090 = vmatpush2.bf16.msra.mxu0 0
        %2091 = vmatprep.subr.bf16.mxu0 0
        %2092 = vmatpush2.bf16.msra.mxu0 0
        %2093 = vmatprep.subr.bf16.mxu0 0
        %2094 = vmatpush2.bf16.msra.mxu0 0
        %2095 = vmatprep.subr.bf16.mxu0 0
        %2096 = vmatpush2.bf16.msra.mxu0 0
        %2097 = vmatprep.subr.bf16.mxu0 0
        %2098 = vmatpush2.bf16.msra.mxu0 0
        %2099 = vmatprep.subr.bf16.mxu0 0
        %2100 = vmatpush2.bf16.msra.mxu0 0
        %2101 = vmatprep.subr.bf16.mxu0 0
        %2102 = vmatpush2.bf16.msra.mxu0 0
        %2103 = vmatprep.mubr.bf16.mxu0 0
        %2104 = vmatmul.mubr.bf16.gmra.mxu0 %v939
        %v2105 = vpop.f32.mrf.mxu0
        %v2106 = vadd.f32 0.0, %v2105
        %v2107 = vpop.f32.mrf.mxu0
        %v2108 = vpop.f32.mrf.mxu0
        %v2109 = vpop.f32.mrf.mxu0
        %2110 = vdwg.mxu0
        %v2111 = vadd.f32 %v558, %v2106
        %2112 = vmatprep.subr.bf16.mxu0 0
        %2113 = vmatpush1.bf16.msra.mxu0 0
        %2114 = vmatprep.subr.bf16.mxu0 0
        %2115 = vmatpush1.bf16.msra.mxu0 0
        %2116 = vmatprep.subr.bf16.mxu0 0
        %2117 = vmatpush1.bf16.msra.mxu0 0
        %2118 = vmatprep.subr.bf16.mxu0 0
        %2119 = vmatpush1.bf16.msra.mxu0 0
        %2120 = vmatprep.subr.bf16.mxu0 0
        %2121 = vmatpush1.bf16.msra.mxu0 0
        %2122 = vmatprep.subr.bf16.mxu0 0
        %2123 = vmatpush1.bf16.msra.mxu0 0
        %2124 = vmatprep.subr.bf16.mxu0 0
        %2125 = vmatpush1.bf16.msra.mxu0 %v634
        %2126 = vmatprep.subr.bf16.mxu0 0
        %2127 = vmatpush1.bf16.msra.mxu0 %v633
        %2128 = vmatprep.subr.bf16.mxu0 0
        %2129 = vmatpush2.bf16.msra.mxu0 0
        %2130 = vmatprep.subr.bf16.mxu0 0
        %2131 = vmatpush2.bf16.msra.mxu0 0
        %2132 = vmatprep.subr.bf16.mxu0 0
        %2133 = vmatpush2.bf16.msra.mxu0 0
        %2134 = vmatprep.subr.bf16.mxu0 0
        %2135 = vmatpush2.bf16.msra.mxu0 0
        %2136 = vmatprep.subr.bf16.mxu0 0
        %2137 = vmatpush2.bf16.msra.mxu0 0
        %2138 = vmatprep.subr.bf16.mxu0 0
        %2139 = vmatpush2.bf16.msra.mxu0 0
        %2140 = vmatprep.subr.bf16.mxu0 0
        %2141 = vmatpush2.bf16.msra.mxu0 0
        %2142 = vmatprep.subr.bf16.mxu0 0
        %2143 = vmatpush2.bf16.msra.mxu0 0
        %2144 = vmatprep.mubr.bf16.mxu0 0
        %2145 = vmatmul.mubr.bf16.gmra.mxu0 %v1003
        %v2146 = vpop.f32.mrf.mxu0
        %v2147 = vadd.f32 0.0, %v2146
        %v2148 = vpop.f32.mrf.mxu0
        %v2149 = vpop.f32.mrf.mxu0
        %v2150 = vpop.f32.mrf.mxu0
        %2151 = vdwg.mxu0
        %v2152 = vadd.f32 %v2111, %v2147
        %2153 = vmatprep.subr.bf16.mxu0 0
        %2154 = vmatpush1.bf16.msra.mxu0 0
        %2155 = vmatprep.subr.bf16.mxu0 0
        %2156 = vmatpush1.bf16.msra.mxu0 0
        %2157 = vmatprep.subr.bf16.mxu0 0
        %2158 = vmatpush1.bf16.msra.mxu0 0
        %2159 = vmatprep.subr.bf16.mxu0 0
        %2160 = vmatpush1.bf16.msra.mxu0 0
        %2161 = vmatprep.subr.bf16.mxu0 0
        %2162 = vmatpush1.bf16.msra.mxu0 0
        %2163 = vmatprep.subr.bf16.mxu0 0
        %2164 = vmatpush1.bf16.msra.mxu0 0
        %2165 = vmatprep.subr.bf16.mxu0 0
        %2166 = vmatpush1.bf16.msra.mxu0 %v692
        %2167 = vmatprep.subr.bf16.mxu0 0
        %2168 = vmatpush1.bf16.msra.mxu0 %v691
        %2169 = vmatprep.subr.bf16.mxu0 0
        %2170 = vmatpush2.bf16.msra.mxu0 0
        %2171 = vmatprep.subr.bf16.mxu0 0
        %2172 = vmatpush2.bf16.msra.mxu0 0
        %2173 = vmatprep.subr.bf16.mxu0 0
        %2174 = vmatpush2.bf16.msra.mxu0 0
        %2175 = vmatprep.subr.bf16.mxu0 0
        %2176 = vmatpush2.bf16.msra.mxu0 0
        %2177 = vmatprep.subr.bf16.mxu0 0
        %2178 = vmatpush2.bf16.msra.mxu0 0
        %2179 = vmatprep.subr.bf16.mxu0 0
        %2180 = vmatpush2.bf16.msra.mxu0 0
        %2181 = vmatprep.subr.bf16.mxu0 0
        %2182 = vmatpush2.bf16.msra.mxu0 0
        %2183 = vmatprep.subr.bf16.mxu0 0
        %2184 = vmatpush2.bf16.msra.mxu0 0
        %2185 = vmatprep.mubr.bf16.mxu0 0
        %2186 = vmatmul.mubr.bf16.gmra.mxu0 %v1060
        %v2187 = vpop.f32.mrf.mxu0
        %v2188 = vadd.f32 0.0, %v2187
        %v2189 = vpop.f32.mrf.mxu0
        %v2190 = vpop.f32.mrf.mxu0
        %v2191 = vpop.f32.mrf.mxu0
        %2192 = vdwg.mxu0
        %v2193 = vadd.f32 %v2152, %v2188
        %2194 = vmatprep.subr.bf16.mxu0 0
        %2195 = vmatpush1.bf16.msra.mxu0 0
        %2196 = vmatprep.subr.bf16.mxu0 0
        %2197 = vmatpush1.bf16.msra.mxu0 0
        %2198 = vmatprep.subr.bf16.mxu0 0
        %2199 = vmatpush1.bf16.msra.mxu0 0
        %2200 = vmatprep.subr.bf16.mxu0 0
        %2201 = vmatpush1.bf16.msra.mxu0 0
        %2202 = vmatprep.subr.bf16.mxu0 0
        %2203 = vmatpush1.bf16.msra.mxu0 0
        %2204 = vmatprep.subr.bf16.mxu0 0
        %2205 = vmatpush1.bf16.msra.mxu0 0
        %2206 = vmatprep.subr.bf16.mxu0 0
        %2207 = vmatpush1.bf16.msra.mxu0 %v757
        %2208 = vmatprep.subr.bf16.mxu0 0
        %2209 = vmatpush1.bf16.msra.mxu0 %v756
        %2210 = vmatprep.subr.bf16.mxu0 0
        %2211 = vmatpush2.bf16.msra.mxu0 0
        %2212 = vmatprep.subr.bf16.mxu0 0
        %2213 = vmatpush2.bf16.msra.mxu0 0
        %2214 = vmatprep.subr.bf16.mxu0 0
        %2215 = vmatpush2.bf16.msra.mxu0 0
        %2216 = vmatprep.subr.bf16.mxu0 0
        %2217 = vmatpush2.bf16.msra.mxu0 0
        %2218 = vmatprep.subr.bf16.mxu0 0
        %2219 = vmatpush2.bf16.msra.mxu0 0
        %2220 = vmatprep.subr.bf16.mxu0 0
        %2221 = vmatpush2.bf16.msra.mxu0 0
        %2222 = vmatprep.subr.bf16.mxu0 0
        %2223 = vmatpush2.bf16.msra.mxu0 0
        %2224 = vmatprep.subr.bf16.mxu0 0
        %2225 = vmatpush2.bf16.msra.mxu0 0
        %2226 = vmatprep.mubr.bf16.mxu0 0
        %2227 = vmatmul.mubr.bf16.gmra.mxu0 %v1647
        %v2228 = vpop.f32.mrf.mxu0
        %v2229 = vadd.f32 0.0, %v2228
        %v2230 = vpop.f32.mrf.mxu0
        %v2231 = vpop.f32.mrf.mxu0
        %v2232 = vpop.f32.mrf.mxu0
        %2233 = vdwg.mxu0
        %v2234 = vadd.f32 %v2193, %v2229
        %2235 = vmatprep.subr.bf16.mxu0 0
        %2236 = vmatpush1.bf16.msra.mxu0 0
        %2237 = vmatprep.subr.bf16.mxu0 0
        %2238 = vmatpush1.bf16.msra.mxu0 0
        %2239 = vmatprep.subr.bf16.mxu0 0
        %2240 = vmatpush1.bf16.msra.mxu0 0
        %2241 = vmatprep.subr.bf16.mxu0 0
        %2242 = vmatpush1.bf16.msra.mxu0 0
        %2243 = vmatprep.subr.bf16.mxu0 0
        %2244 = vmatpush1.bf16.msra.mxu0 0
        %2245 = vmatprep.subr.bf16.mxu0 0
        %2246 = vmatpush1.bf16.msra.mxu0 0
        %2247 = vmatprep.subr.bf16.mxu0 0
        %2248 = vmatpush1.bf16.msra.mxu0 %v814
        %2249 = vmatprep.subr.bf16.mxu0 0
        %2250 = vmatpush1.bf16.msra.mxu0 %v813
        %2251 = vmatprep.subr.bf16.mxu0 0
        %2252 = vmatpush2.bf16.msra.mxu0 0
        %2253 = vmatprep.subr.bf16.mxu0 0
        %2254 = vmatpush2.bf16.msra.mxu0 0
        %2255 = vmatprep.subr.bf16.mxu0 0
        %2256 = vmatpush2.bf16.msra.mxu0 0
        %2257 = vmatprep.subr.bf16.mxu0 0
        %2258 = vmatpush2.bf16.msra.mxu0 0
        %2259 = vmatprep.subr.bf16.mxu0 0
        %2260 = vmatpush2.bf16.msra.mxu0 0
        %2261 = vmatprep.subr.bf16.mxu0 0
        %2262 = vmatpush2.bf16.msra.mxu0 0
        %2263 = vmatprep.subr.bf16.mxu0 0
        %2264 = vmatpush2.bf16.msra.mxu0 0
        %2265 = vmatprep.subr.bf16.mxu0 0
        %2266 = vmatpush2.bf16.msra.mxu0 0
        %2267 = vmatprep.mubr.bf16.mxu0 0
        %2268 = vmatmul.mubr.bf16.gmra.mxu0 %v1693
        %v2269 = vpop.f32.mrf.mxu0
        %v2270 = vadd.f32 0.0, %v2269
        %v2271 = vpop.f32.mrf.mxu0
        %v2272 = vpop.f32.mrf.mxu0
        %v2273 = vpop.f32.mrf.mxu0
        %2274 = vdwg.mxu0
        %v2275 = vadd.f32 %v2234, %v2270
        %2276 = vmatprep.subr.bf16.mxu0 0
        %2277 = vmatpush1.bf16.msra.mxu0 0
        %2278 = vmatprep.subr.bf16.mxu0 0
        %2279 = vmatpush1.bf16.msra.mxu0 0
        %2280 = vmatprep.subr.bf16.mxu0 0
        %2281 = vmatpush1.bf16.msra.mxu0 0
        %2282 = vmatprep.subr.bf16.mxu0 0
        %2283 = vmatpush1.bf16.msra.mxu0 0
        %2284 = vmatprep.subr.bf16.mxu0 0
        %2285 = vmatpush1.bf16.msra.mxu0 0
        %2286 = vmatprep.subr.bf16.mxu0 0
        %2287 = vmatpush1.bf16.msra.mxu0 0
        %2288 = vmatprep.subr.bf16.mxu0 0
        %2289 = vmatpush1.bf16.msra.mxu0 %v876
        %2290 = vmatprep.subr.bf16.mxu0 0
        %2291 = vmatpush1.bf16.msra.mxu0 %v875
        %2292 = vmatprep.subr.bf16.mxu0 0
        %2293 = vmatpush2.bf16.msra.mxu0 0
        %2294 = vmatprep.subr.bf16.mxu0 0
        %2295 = vmatpush2.bf16.msra.mxu0 0
        %2296 = vmatprep.subr.bf16.mxu0 0
        %2297 = vmatpush2.bf16.msra.mxu0 0
        %2298 = vmatprep.subr.bf16.mxu0 0
        %2299 = vmatpush2.bf16.msra.mxu0 0
        %2300 = vmatprep.subr.bf16.mxu0 0
        %2301 = vmatpush2.bf16.msra.mxu0 0
        %2302 = vmatprep.subr.bf16.mxu0 0
        %2303 = vmatpush2.bf16.msra.mxu0 0
        %2304 = vmatprep.subr.bf16.mxu0 0
        %2305 = vmatpush2.bf16.msra.mxu0 0
        %2306 = vmatprep.subr.bf16.mxu0 0
        %2307 = vmatpush2.bf16.msra.mxu0 0
        %2308 = vmatprep.mubr.bf16.mxu0 0
        %2309 = vmatmul.mubr.bf16.gmra.mxu0 %v1740
        %v2310 = vpop.f32.mrf.mxu0
        %v2311 = vadd.f32 0.0, %v2310
        %v2312 = vpop.f32.mrf.mxu0
        %v2313 = vpop.f32.mrf.mxu0
        %v2314 = vpop.f32.mrf.mxu0
        %2315 = vdwg.mxu0
        %v2316 = vadd.f32 %v2275, %v2311
        %v2317 = vpack.c.bf16 %v414, %v413
        %v2319 = vrot.slane %v2317, 2
        %v2321 = vsel %vm574, %v2319, 0
        %2323 = vmatprep.subr.bf16.mxu0 0
        %2324 = vmatpush1.bf16.msra.mxu0 0
        %2325 = vmatprep.subr.bf16.mxu0 0
        %2326 = vmatpush1.bf16.msra.mxu0 0
        %2327 = vmatprep.subr.bf16.mxu0 0
        %2328 = vmatpush1.bf16.msra.mxu0 0
        %2329 = vmatprep.subr.bf16.mxu0 0
        %2330 = vmatpush1.bf16.msra.mxu0 0
        %2331 = vmatprep.subr.bf16.mxu0 0
        %2332 = vmatpush1.bf16.msra.mxu0 0
        %2333 = vmatprep.subr.bf16.mxu0 0
        %2334 = vmatpush1.bf16.msra.mxu0 0
        %2335 = vmatprep.subr.bf16.mxu0 0
        %2336 = vmatpush1.bf16.msra.mxu0 %v935
        %2337 = vmatprep.subr.bf16.mxu0 0
        %2338 = vmatpush1.bf16.msra.mxu0 %v934
        %2339 = vmatprep.subr.bf16.mxu0 0
        %2340 = vmatpush2.bf16.msra.mxu0 0
        %2341 = vmatprep.subr.bf16.mxu0 0
        %2342 = vmatpush2.bf16.msra.mxu0 0
        %2343 = vmatprep.subr.bf16.mxu0 0
        %2344 = vmatpush2.bf16.msra.mxu0 0
        %2345 = vmatprep.subr.bf16.mxu0 0
        %2346 = vmatpush2.bf16.msra.mxu0 0
        %2347 = vmatprep.subr.bf16.mxu0 0
        %2348 = vmatpush2.bf16.msra.mxu0 0
        %2349 = vmatprep.subr.bf16.mxu0 0
        %2350 = vmatpush2.bf16.msra.mxu0 0
        %2351 = vmatprep.subr.bf16.mxu0 0
        %2352 = vmatpush2.bf16.msra.mxu0 0
        %2353 = vmatprep.subr.bf16.mxu0 0
        %2354 = vmatpush2.bf16.msra.mxu0 0
        %2355 = vmatprep.mubr.bf16.mxu0 0
        %2356 = vmatmul.mubr.bf16.gmra.mxu0 %v2321
        %v2357 = vpop.f32.mrf.mxu0
        %v2358 = vadd.f32 0.0, %v2357
        %v2359 = vpop.f32.mrf.mxu0
        %v2360 = vpop.f32.mrf.mxu0
        %v2361 = vpop.f32.mrf.mxu0
        %2362 = vdwg.mxu0
        %v2363 = vadd.f32 %v2316, %v2358
        %v2365 = vshrl.u32 %v2317, 16
        %v2367 = vrot.slane %v2365, 2
        %v2368 = vshll.u32 %v2317, 16
        %v2370 = vrot.slane %v2368, 3
        %v2371 = vor.u32 %v2367, %v2370
        %v2373 = vsel %vm574, %v2371, 0
        %2375 = vmatprep.subr.bf16.mxu0 0
        %2376 = vmatpush1.bf16.msra.mxu0 0
        %2377 = vmatprep.subr.bf16.mxu0 0
        %2378 = vmatpush1.bf16.msra.mxu0 0
        %2379 = vmatprep.subr.bf16.mxu0 0
        %2380 = vmatpush1.bf16.msra.mxu0 0
        %2381 = vmatprep.subr.bf16.mxu0 0
        %2382 = vmatpush1.bf16.msra.mxu0 0
        %2383 = vmatprep.subr.bf16.mxu0 0
        %2384 = vmatpush1.bf16.msra.mxu0 0
        %2385 = vmatprep.subr.bf16.mxu0 0
        %2386 = vmatpush1.bf16.msra.mxu0 0
        %2387 = vmatprep.subr.bf16.mxu0 0
        %2388 = vmatpush1.bf16.msra.mxu0 %v999
        %2389 = vmatprep.subr.bf16.mxu0 0
        %2390 = vmatpush1.bf16.msra.mxu0 %v998
        %2391 = vmatprep.subr.bf16.mxu0 0
        %2392 = vmatpush2.bf16.msra.mxu0 0
        %2393 = vmatprep.subr.bf16.mxu0 0
        %2394 = vmatpush2.bf16.msra.mxu0 0
        %2395 = vmatprep.subr.bf16.mxu0 0
        %2396 = vmatpush2.bf16.msra.mxu0 0
        %2397 = vmatprep.subr.bf16.mxu0 0
        %2398 = vmatpush2.bf16.msra.mxu0 0
        %2399 = vmatprep.subr.bf16.mxu0 0
        %2400 = vmatpush2.bf16.msra.mxu0 0
        %2401 = vmatprep.subr.bf16.mxu0 0
        %2402 = vmatpush2.bf16.msra.mxu0 0
        %2403 = vmatprep.subr.bf16.mxu0 0
        %2404 = vmatpush2.bf16.msra.mxu0 0
        %2405 = vmatprep.subr.bf16.mxu0 0
        %2406 = vmatpush2.bf16.msra.mxu0 0
        %2407 = vmatprep.mubr.bf16.mxu0 0
        %2408 = vmatmul.mubr.bf16.gmra.mxu0 %v2373
        %v2409 = vpop.f32.mrf.mxu0
        %v2410 = vadd.f32 0.0, %v2409
        %v2411 = vpop.f32.mrf.mxu0
        %v2412 = vpop.f32.mrf.mxu0
        %v2413 = vpop.f32.mrf.mxu0
        %2414 = vdwg.mxu0
        %v2415 = vadd.f32 %v2363, %v2410
        %v2416 = vrot.slane %v2317, 3
        %v2418 = vsel %vm574, %v2416, 0
        %2420 = vmatprep.subr.bf16.mxu0 0
        %2421 = vmatpush1.bf16.msra.mxu0 0
        %2422 = vmatprep.subr.bf16.mxu0 0
        %2423 = vmatpush1.bf16.msra.mxu0 0
        %2424 = vmatprep.subr.bf16.mxu0 0
        %2425 = vmatpush1.bf16.msra.mxu0 0
        %2426 = vmatprep.subr.bf16.mxu0 0
        %2427 = vmatpush1.bf16.msra.mxu0 0
        %2428 = vmatprep.subr.bf16.mxu0 0
        %2429 = vmatpush1.bf16.msra.mxu0 0
        %2430 = vmatprep.subr.bf16.mxu0 0
        %2431 = vmatpush1.bf16.msra.mxu0 0
        %2432 = vmatprep.subr.bf16.mxu0 0
        %2433 = vmatpush1.bf16.msra.mxu0 %v1056
        %2434 = vmatprep.subr.bf16.mxu0 0
        %2435 = vmatpush1.bf16.msra.mxu0 %v1055
        %2436 = vmatprep.subr.bf16.mxu0 0
        %2437 = vmatpush2.bf16.msra.mxu0 0
        %2438 = vmatprep.subr.bf16.mxu0 0
        %2439 = vmatpush2.bf16.msra.mxu0 0
        %2440 = vmatprep.subr.bf16.mxu0 0
        %2441 = vmatpush2.bf16.msra.mxu0 0
        %2442 = vmatprep.subr.bf16.mxu0 0
        %2443 = vmatpush2.bf16.msra.mxu0 0
        %2444 = vmatprep.subr.bf16.mxu0 0
        %2445 = vmatpush2.bf16.msra.mxu0 0
        %2446 = vmatprep.subr.bf16.mxu0 0
        %2447 = vmatpush2.bf16.msra.mxu0 0
        %2448 = vmatprep.subr.bf16.mxu0 0
        %2449 = vmatpush2.bf16.msra.mxu0 0
        %2450 = vmatprep.subr.bf16.mxu0 0
        %2451 = vmatpush2.bf16.msra.mxu0 0
        %2452 = vmatprep.mubr.bf16.mxu0 0
        %2453 = vmatmul.mubr.bf16.gmra.mxu0 %v2418
        %v2454 = vpop.f32.mrf.mxu0
        %v2455 = vadd.f32 0.0, %v2454
        %v2456 = vpop.f32.mrf.mxu0
        %v2457 = vpop.f32.mrf.mxu0
        %v2458 = vpop.f32.mrf.mxu0
        %2459 = vdwg.mxu0
        %v2460 = vadd.f32 %v2415, %v2455
        %v2461 = vmax.f32 %v2460, 0.0
        %v2462 = vpack.c.bf16 %v2461, %v2461
        %v2467 = vunpack.c.l.b16 %v493
        %v2468 = vunpack.c.l.b16 %v494
        %v2469 = vunpack.c.l.b16 %v495
        %v2470 = vunpack.c.l.b16 %v496
        %v2471 = vpack.c.b16 %v2468, %v2467
        %v2472 = vpack.c.b16 %v2470, %v2469
        %v2476 = vsel %vm574, %v2462, 0
        %2478 = vmatprep.subr.bf16.mxu0 0
        %2479 = vmatpush1.bf16.msra.mxu0 0
        %2480 = vmatprep.subr.bf16.mxu0 0
        %2481 = vmatpush1.bf16.msra.mxu0 0
        %2482 = vmatprep.subr.bf16.mxu0 0
        %2483 = vmatpush1.bf16.msra.mxu0 0
        %2484 = vmatprep.subr.bf16.mxu0 0
        %2485 = vmatpush1.bf16.msra.mxu0 0
        %2486 = vmatprep.subr.bf16.mxu0 0
        %2487 = vmatpush1.bf16.msra.mxu0 0
        %2488 = vmatprep.subr.bf16.mxu0 0
        %2489 = vmatpush1.bf16.msra.mxu0 0
        %2490 = vmatprep.subr.bf16.mxu0 0
        %2491 = vmatpush1.bf16.msra.mxu0 %v2472
        %2492 = vmatprep.subr.bf16.mxu0 0
        %2493 = vmatpush1.bf16.msra.mxu0 %v2471
        %2494 = vmatprep.subr.bf16.mxu0 0
        %2495 = vmatpush2.bf16.msra.mxu0 0
        %2496 = vmatprep.subr.bf16.mxu0 0
        %2497 = vmatpush2.bf16.msra.mxu0 0
        %2498 = vmatprep.subr.bf16.mxu0 0
        %2499 = vmatpush2.bf16.msra.mxu0 0
        %2500 = vmatprep.subr.bf16.mxu0 0
        %2501 = vmatpush2.bf16.msra.mxu0 0
        %2502 = vmatprep.subr.bf16.mxu0 0
        %2503 = vmatpush2.bf16.msra.mxu0 0
        %2504 = vmatprep.subr.bf16.mxu0 0
        %2505 = vmatpush2.bf16.msra.mxu0 0
        %2506 = vmatprep.subr.bf16.mxu0 0
        %2507 = vmatpush2.bf16.msra.mxu0 0
        %2508 = vmatprep.subr.bf16.mxu0 0
        %2509 = vmatpush2.bf16.msra.mxu0 0
        %2510 = vmatprep.mubr.bf16.mxu0 0
        %2511 = vmatmul.mubr.bf16.gmra.mxu0 %v2476
        %v2512 = vpop.f32.mrf.mxu0
        %v2513 = vadd.f32 0.0, %v2512
        %v2514 = vpop.f32.mrf.mxu0
        %v2515 = vpop.f32.mrf.mxu0
        %v2516 = vpop.f32.mrf.mxu0
        %2517 = vdwg.mxu0
        %v2518 = vadd.f32 %v2070, %v2513
        %v2519 = vshrl.u32 %v2462, 16
        %v2525 = vunpack.c.l.b16 %v497
        %v2526 = vunpack.c.l.b16 %v498
        %v2527 = vunpack.c.l.b16 %v499
        %v2528 = vunpack.c.l.b16 %v500
        %v2529 = vpack.c.b16 %v2526, %v2525
        %v2530 = vpack.c.b16 %v2528, %v2527
        %v2534 = vsel %vm574, %v2519, 0
        %2536 = vmatprep.subr.bf16.mxu0 0
        %2537 = vmatpush1.bf16.msra.mxu0 0
        %2538 = vmatprep.subr.bf16.mxu0 0
        %2539 = vmatpush1.bf16.msra.mxu0 0
        %2540 = vmatprep.subr.bf16.mxu0 0
        %2541 = vmatpush1.bf16.msra.mxu0 0
        %2542 = vmatprep.subr.bf16.mxu0 0
        %2543 = vmatpush1.bf16.msra.mxu0 0
        %2544 = vmatprep.subr.bf16.mxu0 0
        %2545 = vmatpush1.bf16.msra.mxu0 0
        %2546 = vmatprep.subr.bf16.mxu0 0
        %2547 = vmatpush1.bf16.msra.mxu0 0
        %2548 = vmatprep.subr.bf16.mxu0 0
        %2549 = vmatpush1.bf16.msra.mxu0 %v2530
        %2550 = vmatprep.subr.bf16.mxu0 0
        %2551 = vmatpush1.bf16.msra.mxu0 %v2529
        %2552 = vmatprep.subr.bf16.mxu0 0
        %2553 = vmatpush2.bf16.msra.mxu0 0
        %2554 = vmatprep.subr.bf16.mxu0 0
        %2555 = vmatpush2.bf16.msra.mxu0 0
        %2556 = vmatprep.subr.bf16.mxu0 0
        %2557 = vmatpush2.bf16.msra.mxu0 0
        %2558 = vmatprep.subr.bf16.mxu0 0
        %2559 = vmatpush2.bf16.msra.mxu0 0
        %2560 = vmatprep.subr.bf16.mxu0 0
        %2561 = vmatpush2.bf16.msra.mxu0 0
        %2562 = vmatprep.subr.bf16.mxu0 0
        %2563 = vmatpush2.bf16.msra.mxu0 0
        %2564 = vmatprep.subr.bf16.mxu0 0
        %2565 = vmatpush2.bf16.msra.mxu0 0
        %2566 = vmatprep.subr.bf16.mxu0 0
        %2567 = vmatpush2.bf16.msra.mxu0 0
        %2568 = vmatprep.mubr.bf16.mxu0 0
        %2569 = vmatmul.mubr.bf16.gmra.mxu0 %v2534
        %v2570 = vpop.f32.mrf.mxu0
        %v2571 = vadd.f32 0.0, %v2570
        %v2572 = vpop.f32.mrf.mxu0
        %v2573 = vpop.f32.mrf.mxu0
        %v2574 = vpop.f32.mrf.mxu0
        %2575 = vdwg.mxu0
        %v2576 = vadd.f32 %v2518, %v2571
        %v2578 = vrot.slane %v2462, 1
        %v2583 = vunpack.c.l.b16 %v501
        %v2584 = vunpack.c.l.b16 %v502
        %v2585 = vunpack.c.l.b16 %v503
        %v2586 = vunpack.c.l.b16 %v504
        %v2587 = vpack.c.b16 %v2584, %v2583
        %v2588 = vpack.c.b16 %v2586, %v2585
        %v2592 = vsel %vm574, %v2578, 0
        %2594 = vmatprep.subr.bf16.mxu0 0
        %2595 = vmatpush1.bf16.msra.mxu0 0
        %2596 = vmatprep.subr.bf16.mxu0 0
        %2597 = vmatpush1.bf16.msra.mxu0 0
        %2598 = vmatprep.subr.bf16.mxu0 0
        %2599 = vmatpush1.bf16.msra.mxu0 0
        %2600 = vmatprep.subr.bf16.mxu0 0
        %2601 = vmatpush1.bf16.msra.mxu0 0
        %2602 = vmatprep.subr.bf16.mxu0 0
        %2603 = vmatpush1.bf16.msra.mxu0 0
        %2604 = vmatprep.subr.bf16.mxu0 0
        %2605 = vmatpush1.bf16.msra.mxu0 0
        %2606 = vmatprep.subr.bf16.mxu0 0
        %2607 = vmatpush1.bf16.msra.mxu0 %v2588
        %2608 = vmatprep.subr.bf16.mxu0 0
        %2609 = vmatpush1.bf16.msra.mxu0 %v2587
        %2610 = vmatprep.subr.bf16.mxu0 0
        %2611 = vmatpush2.bf16.msra.mxu0 0
        %2612 = vmatprep.subr.bf16.mxu0 0
        %2613 = vmatpush2.bf16.msra.mxu0 0
        %2614 = vmatprep.subr.bf16.mxu0 0
        %2615 = vmatpush2.bf16.msra.mxu0 0
        %2616 = vmatprep.subr.bf16.mxu0 0
        %2617 = vmatpush2.bf16.msra.mxu0 0
        %2618 = vmatprep.subr.bf16.mxu0 0
        %2619 = vmatpush2.bf16.msra.mxu0 0
        %2620 = vmatprep.subr.bf16.mxu0 0
        %2621 = vmatpush2.bf16.msra.mxu0 0
        %2622 = vmatprep.subr.bf16.mxu0 0
        %2623 = vmatpush2.bf16.msra.mxu0 0
        %2624 = vmatprep.subr.bf16.mxu0 0
        %2625 = vmatpush2.bf16.msra.mxu0 0
        %2626 = vmatprep.mubr.bf16.mxu0 0
        %2627 = vmatmul.mubr.bf16.gmra.mxu0 %v2592
        %v2628 = vpop.f32.mrf.mxu0
        %v2629 = vadd.f32 0.0, %v2628
        %v2630 = vpop.f32.mrf.mxu0
        %v2631 = vpop.f32.mrf.mxu0
        %v2632 = vpop.f32.mrf.mxu0
        %2633 = vdwg.mxu0
        %v2634 = vadd.f32 %v2576, %v2629
        %v2635 = vrot.slane %v2519, 1
        %v2640 = vunpack.c.l.b16 %v505
        %v2641 = vunpack.c.l.b16 %v506
        %v2642 = vunpack.c.l.b16 %v507
        %v2643 = vunpack.c.l.b16 %v508
        %v2644 = vpack.c.b16 %v2641, %v2640
        %v2645 = vpack.c.b16 %v2643, %v2642
        %v2649 = vsel %vm574, %v2635, 0
        %2651 = vmatprep.subr.bf16.mxu0 0
        %2652 = vmatpush1.bf16.msra.mxu0 0
        %2653 = vmatprep.subr.bf16.mxu0 0
        %2654 = vmatpush1.bf16.msra.mxu0 0
        %2655 = vmatprep.subr.bf16.mxu0 0
        %2656 = vmatpush1.bf16.msra.mxu0 0
        %2657 = vmatprep.subr.bf16.mxu0 0
        %2658 = vmatpush1.bf16.msra.mxu0 0
        %2659 = vmatprep.subr.bf16.mxu0 0
        %2660 = vmatpush1.bf16.msra.mxu0 0
        %2661 = vmatprep.subr.bf16.mxu0 0
        %2662 = vmatpush1.bf16.msra.mxu0 0
        %2663 = vmatprep.subr.bf16.mxu0 0
        %2664 = vmatpush1.bf16.msra.mxu0 %v2645
        %2665 = vmatprep.subr.bf16.mxu0 0
        %2666 = vmatpush1.bf16.msra.mxu0 %v2644
        %2667 = vmatprep.subr.bf16.mxu0 0
        %2668 = vmatpush2.bf16.msra.mxu0 0
        %2669 = vmatprep.subr.bf16.mxu0 0
        %2670 = vmatpush2.bf16.msra.mxu0 0
        %2671 = vmatprep.subr.bf16.mxu0 0
        %2672 = vmatpush2.bf16.msra.mxu0 0
        %2673 = vmatprep.subr.bf16.mxu0 0
        %2674 = vmatpush2.bf16.msra.mxu0 0
        %2675 = vmatprep.subr.bf16.mxu0 0
        %2676 = vmatpush2.bf16.msra.mxu0 0
        %2677 = vmatprep.subr.bf16.mxu0 0
        %2678 = vmatpush2.bf16.msra.mxu0 0
        %2679 = vmatprep.subr.bf16.mxu0 0
        %2680 = vmatpush2.bf16.msra.mxu0 0
        %2681 = vmatprep.subr.bf16.mxu0 0
        %2682 = vmatpush2.bf16.msra.mxu0 0
        %2683 = vmatprep.mubr.bf16.mxu0 0
        %2684 = vmatmul.mubr.bf16.gmra.mxu0 %v2649
        %v2685 = vpop.f32.mrf.mxu0
        %v2686 = vadd.f32 0.0, %v2685
        %v2687 = vpop.f32.mrf.mxu0
        %v2688 = vpop.f32.mrf.mxu0
        %v2689 = vpop.f32.mrf.mxu0
        %2690 = vdwg.mxu0
        %v2691 = vadd.f32 %v2634, %v2686
        %v2692 = vrot.slane %v2462, 2
        %v2697 = vunpack.c.l.b16 %v509
        %v2698 = vunpack.c.l.b16 %v510
        %v2699 = vunpack.c.l.b16 %v511
        %v2700 = vunpack.c.l.b16 %v512
        %v2701 = vpack.c.b16 %v2698, %v2697
        %v2702 = vpack.c.b16 %v2700, %v2699
        %v2706 = vsel %vm574, %v2692, 0
        %2708 = vmatprep.subr.bf16.mxu0 0
        %2709 = vmatpush1.bf16.msra.mxu0 0
        %2710 = vmatprep.subr.bf16.mxu0 0
        %2711 = vmatpush1.bf16.msra.mxu0 0
        %2712 = vmatprep.subr.bf16.mxu0 0
        %2713 = vmatpush1.bf16.msra.mxu0 0
        %2714 = vmatprep.subr.bf16.mxu0 0
        %2715 = vmatpush1.bf16.msra.mxu0 0
        %2716 = vmatprep.subr.bf16.mxu0 0
        %2717 = vmatpush1.bf16.msra.mxu0 0
        %2718 = vmatprep.subr.bf16.mxu0 0
        %2719 = vmatpush1.bf16.msra.mxu0 0
        %2720 = vmatprep.subr.bf16.mxu0 0
        %2721 = vmatpush1.bf16.msra.mxu0 %v2702
        %2722 = vmatprep.subr.bf16.mxu0 0
        %2723 = vmatpush1.bf16.msra.mxu0 %v2701
        %2724 = vmatprep.subr.bf16.mxu0 0
        %2725 = vmatpush2.bf16.msra.mxu0 0
        %2726 = vmatprep.subr.bf16.mxu0 0
        %2727 = vmatpush2.bf16.msra.mxu0 0
        %2728 = vmatprep.subr.bf16.mxu0 0
        %2729 = vmatpush2.bf16.msra.mxu0 0
        %2730 = vmatprep.subr.bf16.mxu0 0
        %2731 = vmatpush2.bf16.msra.mxu0 0
        %2732 = vmatprep.subr.bf16.mxu0 0
        %2733 = vmatpush2.bf16.msra.mxu0 0
        %2734 = vmatprep.subr.bf16.mxu0 0
        %2735 = vmatpush2.bf16.msra.mxu0 0
        %2736 = vmatprep.subr.bf16.mxu0 0
        %2737 = vmatpush2.bf16.msra.mxu0 0
        %2738 = vmatprep.subr.bf16.mxu0 0
        %2739 = vmatpush2.bf16.msra.mxu0 0
        %2740 = vmatprep.mubr.bf16.mxu0 0
        %2741 = vmatmul.mubr.bf16.gmra.mxu0 %v2706
        %v2742 = vpop.f32.mrf.mxu0
        %v2743 = vadd.f32 0.0, %v2742
        %v2744 = vpop.f32.mrf.mxu0
        %v2745 = vpop.f32.mrf.mxu0
        %v2746 = vpop.f32.mrf.mxu0
        %2747 = vdwg.mxu0
        %v2748 = vadd.f32 %v2691, %v2743
        %2749 = vmatprep.subr.bf16.mxu0 0
        %2750 = vmatpush1.bf16.msra.mxu0 0
        %2751 = vmatprep.subr.bf16.mxu0 0
        %2752 = vmatpush1.bf16.msra.mxu0 0
        %2753 = vmatprep.subr.bf16.mxu0 0
        %2754 = vmatpush1.bf16.msra.mxu0 0
        %2755 = vmatprep.subr.bf16.mxu0 0
        %2756 = vmatpush1.bf16.msra.mxu0 0
        %2757 = vmatprep.subr.bf16.mxu0 0
        %2758 = vmatpush1.bf16.msra.mxu0 0
        %2759 = vmatprep.subr.bf16.mxu0 0
        %2760 = vmatpush1.bf16.msra.mxu0 0
        %2761 = vmatprep.subr.bf16.mxu0 0
        %2762 = vmatpush1.bf16.msra.mxu0 %v571
        %2763 = vmatprep.subr.bf16.mxu0 0
        %2764 = vmatpush1.bf16.msra.mxu0 %v570
        %2765 = vmatprep.subr.bf16.mxu0 0
        %2766 = vmatpush2.bf16.msra.mxu0 0
        %2767 = vmatprep.subr.bf16.mxu0 0
        %2768 = vmatpush2.bf16.msra.mxu0 0
        %2769 = vmatprep.subr.bf16.mxu0 0
        %2770 = vmatpush2.bf16.msra.mxu0 0
        %2771 = vmatprep.subr.bf16.mxu0 0
        %2772 = vmatpush2.bf16.msra.mxu0 0
        %2773 = vmatprep.subr.bf16.mxu0 0
        %2774 = vmatpush2.bf16.msra.mxu0 0
        %2775 = vmatprep.subr.bf16.mxu0 0
        %2776 = vmatpush2.bf16.msra.mxu0 0
        %2777 = vmatprep.subr.bf16.mxu0 0
        %2778 = vmatpush2.bf16.msra.mxu0 0
        %2779 = vmatprep.subr.bf16.mxu0 0
        %2780 = vmatpush2.bf16.msra.mxu0 0
        %2781 = vmatprep.mubr.bf16.mxu0 0
        %2782 = vmatmul.mubr.bf16.gmra.mxu0 %v1647
        %v2783 = vpop.f32.mrf.mxu0
        %v2784 = vadd.f32 0.0, %v2783
        %v2785 = vpop.f32.mrf.mxu0
        %v2786 = vpop.f32.mrf.mxu0
        %v2787 = vpop.f32.mrf.mxu0
        %2788 = vdwg.mxu0
        %v2789 = vadd.f32 %v558, %v2784
        %2790 = vmatprep.subr.bf16.mxu0 0
        %2791 = vmatpush1.bf16.msra.mxu0 0
        %2792 = vmatprep.subr.bf16.mxu0 0
        %2793 = vmatpush1.bf16.msra.mxu0 0
        %2794 = vmatprep.subr.bf16.mxu0 0
        %2795 = vmatpush1.bf16.msra.mxu0 0
        %2796 = vmatprep.subr.bf16.mxu0 0
        %2797 = vmatpush1.bf16.msra.mxu0 0
        %2798 = vmatprep.subr.bf16.mxu0 0
        %2799 = vmatpush1.bf16.msra.mxu0 0
        %2800 = vmatprep.subr.bf16.mxu0 0
        %2801 = vmatpush1.bf16.msra.mxu0 0
        %2802 = vmatprep.subr.bf16.mxu0 0
        %2803 = vmatpush1.bf16.msra.mxu0 %v634
        %2804 = vmatprep.subr.bf16.mxu0 0
        %2805 = vmatpush1.bf16.msra.mxu0 %v633
        %2806 = vmatprep.subr.bf16.mxu0 0
        %2807 = vmatpush2.bf16.msra.mxu0 0
        %2808 = vmatprep.subr.bf16.mxu0 0
        %2809 = vmatpush2.bf16.msra.mxu0 0
        %2810 = vmatprep.subr.bf16.mxu0 0
        %2811 = vmatpush2.bf16.msra.mxu0 0
        %2812 = vmatprep.subr.bf16.mxu0 0
        %2813 = vmatpush2.bf16.msra.mxu0 0
        %2814 = vmatprep.subr.bf16.mxu0 0
        %2815 = vmatpush2.bf16.msra.mxu0 0
        %2816 = vmatprep.subr.bf16.mxu0 0
        %2817 = vmatpush2.bf16.msra.mxu0 0
        %2818 = vmatprep.subr.bf16.mxu0 0
        %2819 = vmatpush2.bf16.msra.mxu0 0
        %2820 = vmatprep.subr.bf16.mxu0 0
        %2821 = vmatpush2.bf16.msra.mxu0 0
        %2822 = vmatprep.mubr.bf16.mxu0 0
        %2823 = vmatmul.mubr.bf16.gmra.mxu0 %v1693
        %v2824 = vpop.f32.mrf.mxu0
        %v2825 = vadd.f32 0.0, %v2824
        %v2826 = vpop.f32.mrf.mxu0
        %v2827 = vpop.f32.mrf.mxu0
        %v2828 = vpop.f32.mrf.mxu0
        %2829 = vdwg.mxu0
        %v2830 = vadd.f32 %v2789, %v2825
        %2831 = vmatprep.subr.bf16.mxu0 0
        %2832 = vmatpush1.bf16.msra.mxu0 0
        %2833 = vmatprep.subr.bf16.mxu0 0
        %2834 = vmatpush1.bf16.msra.mxu0 0
        %2835 = vmatprep.subr.bf16.mxu0 0
        %2836 = vmatpush1.bf16.msra.mxu0 0
        %2837 = vmatprep.subr.bf16.mxu0 0
        %2838 = vmatpush1.bf16.msra.mxu0 0
        %2839 = vmatprep.subr.bf16.mxu0 0
        %2840 = vmatpush1.bf16.msra.mxu0 0
        %2841 = vmatprep.subr.bf16.mxu0 0
        %2842 = vmatpush1.bf16.msra.mxu0 0
        %2843 = vmatprep.subr.bf16.mxu0 0
        %2844 = vmatpush1.bf16.msra.mxu0 %v692
        %2845 = vmatprep.subr.bf16.mxu0 0
        %2846 = vmatpush1.bf16.msra.mxu0 %v691
        %2847 = vmatprep.subr.bf16.mxu0 0
        %2848 = vmatpush2.bf16.msra.mxu0 0
        %2849 = vmatprep.subr.bf16.mxu0 0
        %2850 = vmatpush2.bf16.msra.mxu0 0
        %2851 = vmatprep.subr.bf16.mxu0 0
        %2852 = vmatpush2.bf16.msra.mxu0 0
        %2853 = vmatprep.subr.bf16.mxu0 0
        %2854 = vmatpush2.bf16.msra.mxu0 0
        %2855 = vmatprep.subr.bf16.mxu0 0
        %2856 = vmatpush2.bf16.msra.mxu0 0
        %2857 = vmatprep.subr.bf16.mxu0 0
        %2858 = vmatpush2.bf16.msra.mxu0 0
        %2859 = vmatprep.subr.bf16.mxu0 0
        %2860 = vmatpush2.bf16.msra.mxu0 0
        %2861 = vmatprep.subr.bf16.mxu0 0
        %2862 = vmatpush2.bf16.msra.mxu0 0
        %2863 = vmatprep.mubr.bf16.mxu0 0
        %2864 = vmatmul.mubr.bf16.gmra.mxu0 %v1740
        %v2865 = vpop.f32.mrf.mxu0
        %v2866 = vadd.f32 0.0, %v2865
        %v2867 = vpop.f32.mrf.mxu0
        %v2868 = vpop.f32.mrf.mxu0
        %v2869 = vpop.f32.mrf.mxu0
        %2870 = vdwg.mxu0
        %v2871 = vadd.f32 %v2830, %v2866
        %2872 = vmatprep.subr.bf16.mxu0 0
        %2873 = vmatpush1.bf16.msra.mxu0 0
        %2874 = vmatprep.subr.bf16.mxu0 0
        %2875 = vmatpush1.bf16.msra.mxu0 0
        %2876 = vmatprep.subr.bf16.mxu0 0
        %2877 = vmatpush1.bf16.msra.mxu0 0
        %2878 = vmatprep.subr.bf16.mxu0 0
        %2879 = vmatpush1.bf16.msra.mxu0 0
        %2880 = vmatprep.subr.bf16.mxu0 0
        %2881 = vmatpush1.bf16.msra.mxu0 0
        %2882 = vmatprep.subr.bf16.mxu0 0
        %2883 = vmatpush1.bf16.msra.mxu0 0
        %2884 = vmatprep.subr.bf16.mxu0 0
        %2885 = vmatpush1.bf16.msra.mxu0 %v757
        %2886 = vmatprep.subr.bf16.mxu0 0
        %2887 = vmatpush1.bf16.msra.mxu0 %v756
        %2888 = vmatprep.subr.bf16.mxu0 0
        %2889 = vmatpush2.bf16.msra.mxu0 0
        %2890 = vmatprep.subr.bf16.mxu0 0
        %2891 = vmatpush2.bf16.msra.mxu0 0
        %2892 = vmatprep.subr.bf16.mxu0 0
        %2893 = vmatpush2.bf16.msra.mxu0 0
        %2894 = vmatprep.subr.bf16.mxu0 0
        %2895 = vmatpush2.bf16.msra.mxu0 0
        %2896 = vmatprep.subr.bf16.mxu0 0
        %2897 = vmatpush2.bf16.msra.mxu0 0
        %2898 = vmatprep.subr.bf16.mxu0 0
        %2899 = vmatpush2.bf16.msra.mxu0 0
        %2900 = vmatprep.subr.bf16.mxu0 0
        %2901 = vmatpush2.bf16.msra.mxu0 0
        %2902 = vmatprep.subr.bf16.mxu0 0
        %2903 = vmatpush2.bf16.msra.mxu0 0
        %2904 = vmatprep.mubr.bf16.mxu0 0
        %2905 = vmatmul.mubr.bf16.gmra.mxu0 %v2321
        %v2906 = vpop.f32.mrf.mxu0
        %v2907 = vadd.f32 0.0, %v2906
        %v2908 = vpop.f32.mrf.mxu0
        %v2909 = vpop.f32.mrf.mxu0
        %v2910 = vpop.f32.mrf.mxu0
        %2911 = vdwg.mxu0
        %v2912 = vadd.f32 %v2871, %v2907
        %2913 = vmatprep.subr.bf16.mxu0 0
        %2914 = vmatpush1.bf16.msra.mxu0 0
        %2915 = vmatprep.subr.bf16.mxu0 0
        %2916 = vmatpush1.bf16.msra.mxu0 0
        %2917 = vmatprep.subr.bf16.mxu0 0
        %2918 = vmatpush1.bf16.msra.mxu0 0
        %2919 = vmatprep.subr.bf16.mxu0 0
        %2920 = vmatpush1.bf16.msra.mxu0 0
        %2921 = vmatprep.subr.bf16.mxu0 0
        %2922 = vmatpush1.bf16.msra.mxu0 0
        %2923 = vmatprep.subr.bf16.mxu0 0
        %2924 = vmatpush1.bf16.msra.mxu0 0
        %2925 = vmatprep.subr.bf16.mxu0 0
        %2926 = vmatpush1.bf16.msra.mxu0 %v814
        %2927 = vmatprep.subr.bf16.mxu0 0
        %2928 = vmatpush1.bf16.msra.mxu0 %v813
        %2929 = vmatprep.subr.bf16.mxu0 0
        %2930 = vmatpush2.bf16.msra.mxu0 0
        %2931 = vmatprep.subr.bf16.mxu0 0
        %2932 = vmatpush2.bf16.msra.mxu0 0
        %2933 = vmatprep.subr.bf16.mxu0 0
        %2934 = vmatpush2.bf16.msra.mxu0 0
        %2935 = vmatprep.subr.bf16.mxu0 0
        %2936 = vmatpush2.bf16.msra.mxu0 0
        %2937 = vmatprep.subr.bf16.mxu0 0
        %2938 = vmatpush2.bf16.msra.mxu0 0
        %2939 = vmatprep.subr.bf16.mxu0 0
        %2940 = vmatpush2.bf16.msra.mxu0 0
        %2941 = vmatprep.subr.bf16.mxu0 0
        %2942 = vmatpush2.bf16.msra.mxu0 0
        %2943 = vmatprep.subr.bf16.mxu0 0
        %2944 = vmatpush2.bf16.msra.mxu0 0
        %2945 = vmatprep.mubr.bf16.mxu0 0
        %2946 = vmatmul.mubr.bf16.gmra.mxu0 %v2373
        %v2947 = vpop.f32.mrf.mxu0
        %v2948 = vadd.f32 0.0, %v2947
        %v2949 = vpop.f32.mrf.mxu0
        %v2950 = vpop.f32.mrf.mxu0
        %v2951 = vpop.f32.mrf.mxu0
        %2952 = vdwg.mxu0
        %v2953 = vadd.f32 %v2912, %v2948
        %2954 = vmatprep.subr.bf16.mxu0 0
        %2955 = vmatpush1.bf16.msra.mxu0 0
        %2956 = vmatprep.subr.bf16.mxu0 0
        %2957 = vmatpush1.bf16.msra.mxu0 0
        %2958 = vmatprep.subr.bf16.mxu0 0
        %2959 = vmatpush1.bf16.msra.mxu0 0
        %2960 = vmatprep.subr.bf16.mxu0 0
        %2961 = vmatpush1.bf16.msra.mxu0 0
        %2962 = vmatprep.subr.bf16.mxu0 0
        %2963 = vmatpush1.bf16.msra.mxu0 0
        %2964 = vmatprep.subr.bf16.mxu0 0
        %2965 = vmatpush1.bf16.msra.mxu0 0
        %2966 = vmatprep.subr.bf16.mxu0 0
        %2967 = vmatpush1.bf16.msra.mxu0 %v876
        %2968 = vmatprep.subr.bf16.mxu0 0
        %2969 = vmatpush1.bf16.msra.mxu0 %v875
        %2970 = vmatprep.subr.bf16.mxu0 0
        %2971 = vmatpush2.bf16.msra.mxu0 0
        %2972 = vmatprep.subr.bf16.mxu0 0
        %2973 = vmatpush2.bf16.msra.mxu0 0
        %2974 = vmatprep.subr.bf16.mxu0 0
        %2975 = vmatpush2.bf16.msra.mxu0 0
        %2976 = vmatprep.subr.bf16.mxu0 0
        %2977 = vmatpush2.bf16.msra.mxu0 0
        %2978 = vmatprep.subr.bf16.mxu0 0
        %2979 = vmatpush2.bf16.msra.mxu0 0
        %2980 = vmatprep.subr.bf16.mxu0 0
        %2981 = vmatpush2.bf16.msra.mxu0 0
        %2982 = vmatprep.subr.bf16.mxu0 0
        %2983 = vmatpush2.bf16.msra.mxu0 0
        %2984 = vmatprep.subr.bf16.mxu0 0
        %2985 = vmatpush2.bf16.msra.mxu0 0
        %2986 = vmatprep.mubr.bf16.mxu0 0
        %2987 = vmatmul.mubr.bf16.gmra.mxu0 %v2418
        %v2988 = vpop.f32.mrf.mxu0
        %v2989 = vadd.f32 0.0, %v2988
        %v2990 = vpop.f32.mrf.mxu0
        %v2991 = vpop.f32.mrf.mxu0
        %v2992 = vpop.f32.mrf.mxu0
        %2993 = vdwg.mxu0
        %v2994 = vadd.f32 %v2953, %v2989
        %v2995 = vpack.c.bf16 %v414, %v414
        %v2997 = vshrl.u32 %v2995, 16
        %v2999 = vrot.slane %v2997, 1
        %v3000 = vshll.u32 %v2995, 16
        %v3002 = vrot.slane %v3000, 2
        %v3003 = vor.u32 %v2999, %v3002
        %v3005 = vsel %vm574, %v3003, 0
        %3007 = vmatprep.subr.bf16.mxu0 0
        %3008 = vmatpush1.bf16.msra.mxu0 0
        %3009 = vmatprep.subr.bf16.mxu0 0
        %3010 = vmatpush1.bf16.msra.mxu0 0
        %3011 = vmatprep.subr.bf16.mxu0 0
        %3012 = vmatpush1.bf16.msra.mxu0 0
        %3013 = vmatprep.subr.bf16.mxu0 0
        %3014 = vmatpush1.bf16.msra.mxu0 0
        %3015 = vmatprep.subr.bf16.mxu0 0
        %3016 = vmatpush1.bf16.msra.mxu0 0
        %3017 = vmatprep.subr.bf16.mxu0 0
        %3018 = vmatpush1.bf16.msra.mxu0 0
        %3019 = vmatprep.subr.bf16.mxu0 0
        %3020 = vmatpush1.bf16.msra.mxu0 %v935
        %3021 = vmatprep.subr.bf16.mxu0 0
        %3022 = vmatpush1.bf16.msra.mxu0 %v934
        %3023 = vmatprep.subr.bf16.mxu0 0
        %3024 = vmatpush2.bf16.msra.mxu0 0
        %3025 = vmatprep.subr.bf16.mxu0 0
        %3026 = vmatpush2.bf16.msra.mxu0 0
        %3027 = vmatprep.subr.bf16.mxu0 0
        %3028 = vmatpush2.bf16.msra.mxu0 0
        %3029 = vmatprep.subr.bf16.mxu0 0
        %3030 = vmatpush2.bf16.msra.mxu0 0
        %3031 = vmatprep.subr.bf16.mxu0 0
        %3032 = vmatpush2.bf16.msra.mxu0 0
        %3033 = vmatprep.subr.bf16.mxu0 0
        %3034 = vmatpush2.bf16.msra.mxu0 0
        %3035 = vmatprep.subr.bf16.mxu0 0
        %3036 = vmatpush2.bf16.msra.mxu0 0
        %3037 = vmatprep.subr.bf16.mxu0 0
        %3038 = vmatpush2.bf16.msra.mxu0 0
        %3039 = vmatprep.mubr.bf16.mxu0 0
        %3040 = vmatmul.mubr.bf16.gmra.mxu0 %v3005
        %v3041 = vpop.f32.mrf.mxu0
        %v3042 = vadd.f32 0.0, %v3041
        %v3043 = vpop.f32.mrf.mxu0
        %v3044 = vpop.f32.mrf.mxu0
        %v3045 = vpop.f32.mrf.mxu0
        %3046 = vdwg.mxu0
        %v3047 = vadd.f32 %v2994, %v3042
        %v3048 = vpack.c.bf16 %v415, %v414
        %v3050 = vrot.slane %v3048, 2
        %v3052 = vsel %vm574, %v3050, 0
        %3054 = vmatprep.subr.bf16.mxu0 0
        %3055 = vmatpush1.bf16.msra.mxu0 0
        %3056 = vmatprep.subr.bf16.mxu0 0
        %3057 = vmatpush1.bf16.msra.mxu0 0
        %3058 = vmatprep.subr.bf16.mxu0 0
        %3059 = vmatpush1.bf16.msra.mxu0 0
        %3060 = vmatprep.subr.bf16.mxu0 0
        %3061 = vmatpush1.bf16.msra.mxu0 0
        %3062 = vmatprep.subr.bf16.mxu0 0
        %3063 = vmatpush1.bf16.msra.mxu0 0
        %3064 = vmatprep.subr.bf16.mxu0 0
        %3065 = vmatpush1.bf16.msra.mxu0 0
        %3066 = vmatprep.subr.bf16.mxu0 0
        %3067 = vmatpush1.bf16.msra.mxu0 %v999
        %3068 = vmatprep.subr.bf16.mxu0 0
        %3069 = vmatpush1.bf16.msra.mxu0 %v998
        %3070 = vmatprep.subr.bf16.mxu0 0
        %3071 = vmatpush2.bf16.msra.mxu0 0
        %3072 = vmatprep.subr.bf16.mxu0 0
        %3073 = vmatpush2.bf16.msra.mxu0 0
        %3074 = vmatprep.subr.bf16.mxu0 0
        %3075 = vmatpush2.bf16.msra.mxu0 0
        %3076 = vmatprep.subr.bf16.mxu0 0
        %3077 = vmatpush2.bf16.msra.mxu0 0
        %3078 = vmatprep.subr.bf16.mxu0 0
        %3079 = vmatpush2.bf16.msra.mxu0 0
        %3080 = vmatprep.subr.bf16.mxu0 0
        %3081 = vmatpush2.bf16.msra.mxu0 0
        %3082 = vmatprep.subr.bf16.mxu0 0
        %3083 = vmatpush2.bf16.msra.mxu0 0
        %3084 = vmatprep.subr.bf16.mxu0 0
        %3085 = vmatpush2.bf16.msra.mxu0 0
        %3086 = vmatprep.mubr.bf16.mxu0 0
        %3087 = vmatmul.mubr.bf16.gmra.mxu0 %v3052
        %v3088 = vpop.f32.mrf.mxu0
        %v3089 = vadd.f32 0.0, %v3088
        %v3090 = vpop.f32.mrf.mxu0
        %v3091 = vpop.f32.mrf.mxu0
        %v3092 = vpop.f32.mrf.mxu0
        %3093 = vdwg.mxu0
        %v3094 = vadd.f32 %v3047, %v3089
        %v3096 = vshrl.u32 %v3048, 16
        %v3098 = vrot.slane %v3096, 2
        %v3099 = vshll.u32 %v3048, 16
        %v3101 = vrot.slane %v3099, 3
        %v3102 = vor.u32 %v3098, %v3101
        %v3104 = vsel %vm574, %v3102, 0
        %3106 = vmatprep.subr.bf16.mxu0 0
        %3107 = vmatpush1.bf16.msra.mxu0 0
        %3108 = vmatprep.subr.bf16.mxu0 0
        %3109 = vmatpush1.bf16.msra.mxu0 0
        %3110 = vmatprep.subr.bf16.mxu0 0
        %3111 = vmatpush1.bf16.msra.mxu0 0
        %3112 = vmatprep.subr.bf16.mxu0 0
        %3113 = vmatpush1.bf16.msra.mxu0 0
        %3114 = vmatprep.subr.bf16.mxu0 0
        %3115 = vmatpush1.bf16.msra.mxu0 0
        %3116 = vmatprep.subr.bf16.mxu0 0
        %3117 = vmatpush1.bf16.msra.mxu0 0
        %3118 = vmatprep.subr.bf16.mxu0 0
        %3119 = vmatpush1.bf16.msra.mxu0 %v1056
        %3120 = vmatprep.subr.bf16.mxu0 0
        %3121 = vmatpush1.bf16.msra.mxu0 %v1055
        %3122 = vmatprep.subr.bf16.mxu0 0
        %3123 = vmatpush2.bf16.msra.mxu0 0
        %3124 = vmatprep.subr.bf16.mxu0 0
        %3125 = vmatpush2.bf16.msra.mxu0 0
        %3126 = vmatprep.subr.bf16.mxu0 0
        %3127 = vmatpush2.bf16.msra.mxu0 0
        %3128 = vmatprep.subr.bf16.mxu0 0
        %3129 = vmatpush2.bf16.msra.mxu0 0
        %3130 = vmatprep.subr.bf16.mxu0 0
        %3131 = vmatpush2.bf16.msra.mxu0 0
        %3132 = vmatprep.subr.bf16.mxu0 0
        %3133 = vmatpush2.bf16.msra.mxu0 0
        %3134 = vmatprep.subr.bf16.mxu0 0
        %3135 = vmatpush2.bf16.msra.mxu0 0
        %3136 = vmatprep.subr.bf16.mxu0 0
        %3137 = vmatpush2.bf16.msra.mxu0 0
        %3138 = vmatprep.mubr.bf16.mxu0 0
        %3139 = vmatmul.mubr.bf16.gmra.mxu0 %v3104
        %v3140 = vpop.f32.mrf.mxu0
        %v3141 = vadd.f32 0.0, %v3140
        %v3142 = vpop.f32.mrf.mxu0
        %v3143 = vpop.f32.mrf.mxu0
        %v3144 = vpop.f32.mrf.mxu0
        %3145 = vdwg.mxu0
        %v3146 = vadd.f32 %v3094, %v3141
        %v3147 = vmax.f32 %v3146, 0.0
        %v3148 = vpack.c.bf16 %v3147, %v3147
        %v3153 = vunpack.c.l.b16 %v513
        %v3154 = vunpack.c.l.b16 %v514
        %v3155 = vunpack.c.l.b16 %v515
        %v3156 = vunpack.c.l.b16 %v516
        %v3157 = vpack.c.b16 %v3154, %v3153
        %v3158 = vpack.c.b16 %v3156, %v3155
        %v3162 = vsel %vm574, %v3148, 0
        %3164 = vmatprep.subr.bf16.mxu0 0
        %3165 = vmatpush1.bf16.msra.mxu0 0
        %3166 = vmatprep.subr.bf16.mxu0 0
        %3167 = vmatpush1.bf16.msra.mxu0 0
        %3168 = vmatprep.subr.bf16.mxu0 0
        %3169 = vmatpush1.bf16.msra.mxu0 0
        %3170 = vmatprep.subr.bf16.mxu0 0
        %3171 = vmatpush1.bf16.msra.mxu0 0
        %3172 = vmatprep.subr.bf16.mxu0 0
        %3173 = vmatpush1.bf16.msra.mxu0 0
        %3174 = vmatprep.subr.bf16.mxu0 0
        %3175 = vmatpush1.bf16.msra.mxu0 0
        %3176 = vmatprep.subr.bf16.mxu0 0
        %3177 = vmatpush1.bf16.msra.mxu0 %v3158
        %3178 = vmatprep.subr.bf16.mxu0 0
        %3179 = vmatpush1.bf16.msra.mxu0 %v3157
        %3180 = vmatprep.subr.bf16.mxu0 0
        %3181 = vmatpush2.bf16.msra.mxu0 0
        %3182 = vmatprep.subr.bf16.mxu0 0
        %3183 = vmatpush2.bf16.msra.mxu0 0
        %3184 = vmatprep.subr.bf16.mxu0 0
        %3185 = vmatpush2.bf16.msra.mxu0 0
        %3186 = vmatprep.subr.bf16.mxu0 0
        %3187 = vmatpush2.bf16.msra.mxu0 0
        %3188 = vmatprep.subr.bf16.mxu0 0
        %3189 = vmatpush2.bf16.msra.mxu0 0
        %3190 = vmatprep.subr.bf16.mxu0 0
        %3191 = vmatpush2.bf16.msra.mxu0 0
        %3192 = vmatprep.subr.bf16.mxu0 0
        %3193 = vmatpush2.bf16.msra.mxu0 0
        %3194 = vmatprep.subr.bf16.mxu0 0
        %3195 = vmatpush2.bf16.msra.mxu0 0
        %3196 = vmatprep.mubr.bf16.mxu0 0
        %3197 = vmatmul.mubr.bf16.gmra.mxu0 %v3162
        %v3198 = vpop.f32.mrf.mxu0
        %v3199 = vadd.f32 0.0, %v3198
        %v3200 = vpop.f32.mrf.mxu0
        %v3201 = vpop.f32.mrf.mxu0
        %v3202 = vpop.f32.mrf.mxu0
        %3203 = vdwg.mxu0
        %v3204 = vadd.f32 %v2748, %v3199
        %v3205 = vshrl.u32 %v3148, 16
        %v3211 = vunpack.c.l.b16 %v517
        %v3212 = vunpack.c.l.b16 %v518
        %v3213 = vunpack.c.l.b16 %v519
        %v3214 = vunpack.c.l.b16 %v520
        %v3215 = vpack.c.b16 %v3212, %v3211
        %v3216 = vpack.c.b16 %v3214, %v3213
        %v3220 = vsel %vm574, %v3205, 0
        %3222 = vmatprep.subr.bf16.mxu0 0
        %3223 = vmatpush1.bf16.msra.mxu0 0
        %3224 = vmatprep.subr.bf16.mxu0 0
        %3225 = vmatpush1.bf16.msra.mxu0 0
        %3226 = vmatprep.subr.bf16.mxu0 0
        %3227 = vmatpush1.bf16.msra.mxu0 0
        %3228 = vmatprep.subr.bf16.mxu0 0
        %3229 = vmatpush1.bf16.msra.mxu0 0
        %3230 = vmatprep.subr.bf16.mxu0 0
        %3231 = vmatpush1.bf16.msra.mxu0 0
        %3232 = vmatprep.subr.bf16.mxu0 0
        %3233 = vmatpush1.bf16.msra.mxu0 0
        %3234 = vmatprep.subr.bf16.mxu0 0
        %3235 = vmatpush1.bf16.msra.mxu0 %v3216
        %3236 = vmatprep.subr.bf16.mxu0 0
        %3237 = vmatpush1.bf16.msra.mxu0 %v3215
        %3238 = vmatprep.subr.bf16.mxu0 0
        %3239 = vmatpush2.bf16.msra.mxu0 0
        %3240 = vmatprep.subr.bf16.mxu0 0
        %3241 = vmatpush2.bf16.msra.mxu0 0
        %3242 = vmatprep.subr.bf16.mxu0 0
        %3243 = vmatpush2.bf16.msra.mxu0 0
        %3244 = vmatprep.subr.bf16.mxu0 0
        %3245 = vmatpush2.bf16.msra.mxu0 0
        %3246 = vmatprep.subr.bf16.mxu0 0
        %3247 = vmatpush2.bf16.msra.mxu0 0
        %3248 = vmatprep.subr.bf16.mxu0 0
        %3249 = vmatpush2.bf16.msra.mxu0 0
        %3250 = vmatprep.subr.bf16.mxu0 0
        %3251 = vmatpush2.bf16.msra.mxu0 0
        %3252 = vmatprep.subr.bf16.mxu0 0
        %3253 = vmatpush2.bf16.msra.mxu0 0
        %3254 = vmatprep.mubr.bf16.mxu0 0
        %3255 = vmatmul.mubr.bf16.gmra.mxu0 %v3220
        %v3256 = vpop.f32.mrf.mxu0
        %v3257 = vadd.f32 0.0, %v3256
        %v3258 = vpop.f32.mrf.mxu0
        %v3259 = vpop.f32.mrf.mxu0
        %v3260 = vpop.f32.mrf.mxu0
        %3261 = vdwg.mxu0
        %v3262 = vadd.f32 %v3204, %v3257
        %v3264 = vrot.slane %v3148, 1
        %v3269 = vunpack.c.l.b16 %v521
        %v3270 = vunpack.c.l.b16 %v522
        %v3271 = vunpack.c.l.b16 %v523
        %v3272 = vunpack.c.l.b16 %v524
        %v3273 = vpack.c.b16 %v3270, %v3269
        %v3274 = vpack.c.b16 %v3272, %v3271
        %v3278 = vsel %vm574, %v3264, 0
        %3280 = vmatprep.subr.bf16.mxu0 0
        %3281 = vmatpush1.bf16.msra.mxu0 0
        %3282 = vmatprep.subr.bf16.mxu0 0
        %3283 = vmatpush1.bf16.msra.mxu0 0
        %3284 = vmatprep.subr.bf16.mxu0 0
        %3285 = vmatpush1.bf16.msra.mxu0 0
        %3286 = vmatprep.subr.bf16.mxu0 0
        %3287 = vmatpush1.bf16.msra.mxu0 0
        %3288 = vmatprep.subr.bf16.mxu0 0
        %3289 = vmatpush1.bf16.msra.mxu0 0
        %3290 = vmatprep.subr.bf16.mxu0 0
        %3291 = vmatpush1.bf16.msra.mxu0 0
        %3292 = vmatprep.subr.bf16.mxu0 0
        %3293 = vmatpush1.bf16.msra.mxu0 %v3274
        %3294 = vmatprep.subr.bf16.mxu0 0
        %3295 = vmatpush1.bf16.msra.mxu0 %v3273
        %3296 = vmatprep.subr.bf16.mxu0 0
        %3297 = vmatpush2.bf16.msra.mxu0 0
        %3298 = vmatprep.subr.bf16.mxu0 0
        %3299 = vmatpush2.bf16.msra.mxu0 0
        %3300 = vmatprep.subr.bf16.mxu0 0
        %3301 = vmatpush2.bf16.msra.mxu0 0
        %3302 = vmatprep.subr.bf16.mxu0 0
        %3303 = vmatpush2.bf16.msra.mxu0 0
        %3304 = vmatprep.subr.bf16.mxu0 0
        %3305 = vmatpush2.bf16.msra.mxu0 0
        %3306 = vmatprep.subr.bf16.mxu0 0
        %3307 = vmatpush2.bf16.msra.mxu0 0
        %3308 = vmatprep.subr.bf16.mxu0 0
        %3309 = vmatpush2.bf16.msra.mxu0 0
        %3310 = vmatprep.subr.bf16.mxu0 0
        %3311 = vmatpush2.bf16.msra.mxu0 0
        %3312 = vmatprep.mubr.bf16.mxu0 0
        %3313 = vmatmul.mubr.bf16.gmra.mxu0 %v3278
        %v3314 = vpop.f32.mrf.mxu0
        %v3315 = vadd.f32 0.0, %v3314
        %v3316 = vpop.f32.mrf.mxu0
        %v3317 = vpop.f32.mrf.mxu0
        %v3318 = vpop.f32.mrf.mxu0
        %3319 = vdwg.mxu0
        %v3320 = vadd.f32 %v3262, %v3315
        %v3321 = vrot.slane %v3205, 1
        %v3326 = vunpack.c.l.b16 %v525
        %v3327 = vunpack.c.l.b16 %v526
        %v3328 = vunpack.c.l.b16 %v527
        %v3329 = vunpack.c.l.b16 %v528
        %v3330 = vpack.c.b16 %v3327, %v3326
        %v3331 = vpack.c.b16 %v3329, %v3328
        %v3335 = vsel %vm574, %v3321, 0
        %3337 = vmatprep.subr.bf16.mxu0 0
        %3338 = vmatpush1.bf16.msra.mxu0 0
        %3339 = vmatprep.subr.bf16.mxu0 0
        %3340 = vmatpush1.bf16.msra.mxu0 0
        %3341 = vmatprep.subr.bf16.mxu0 0
        %3342 = vmatpush1.bf16.msra.mxu0 0
        %3343 = vmatprep.subr.bf16.mxu0 0
        %3344 = vmatpush1.bf16.msra.mxu0 0
        %3345 = vmatprep.subr.bf16.mxu0 0
        %3346 = vmatpush1.bf16.msra.mxu0 0
        %3347 = vmatprep.subr.bf16.mxu0 0
        %3348 = vmatpush1.bf16.msra.mxu0 0
        %3349 = vmatprep.subr.bf16.mxu0 0
        %3350 = vmatpush1.bf16.msra.mxu0 %v3331
        %3351 = vmatprep.subr.bf16.mxu0 0
        %3352 = vmatpush1.bf16.msra.mxu0 %v3330
        %3353 = vmatprep.subr.bf16.mxu0 0
        %3354 = vmatpush2.bf16.msra.mxu0 0
        %3355 = vmatprep.subr.bf16.mxu0 0
        %3356 = vmatpush2.bf16.msra.mxu0 0
        %3357 = vmatprep.subr.bf16.mxu0 0
        %3358 = vmatpush2.bf16.msra.mxu0 0
        %3359 = vmatprep.subr.bf16.mxu0 0
        %3360 = vmatpush2.bf16.msra.mxu0 0
        %3361 = vmatprep.subr.bf16.mxu0 0
        %3362 = vmatpush2.bf16.msra.mxu0 0
        %3363 = vmatprep.subr.bf16.mxu0 0
        %3364 = vmatpush2.bf16.msra.mxu0 0
        %3365 = vmatprep.subr.bf16.mxu0 0
        %3366 = vmatpush2.bf16.msra.mxu0 0
        %3367 = vmatprep.subr.bf16.mxu0 0
        %3368 = vmatpush2.bf16.msra.mxu0 0
        %3369 = vmatprep.mubr.bf16.mxu0 0
        %3370 = vmatmul.mubr.bf16.gmra.mxu0 %v3335
        %v3371 = vpop.f32.mrf.mxu0
        %v3372 = vadd.f32 0.0, %v3371
        %v3373 = vpop.f32.mrf.mxu0
        %v3374 = vpop.f32.mrf.mxu0
        %v3375 = vpop.f32.mrf.mxu0
        %3376 = vdwg.mxu0
        %v3377 = vadd.f32 %v3320, %v3372
        %v3378 = vrot.slane %v3148, 2
        %v3383 = vunpack.c.l.b16 %v529
        %v3384 = vunpack.c.l.b16 %v530
        %v3385 = vunpack.c.l.b16 %v531
        %v3386 = vunpack.c.l.b16 %v532
        %v3387 = vpack.c.b16 %v3384, %v3383
        %v3388 = vpack.c.b16 %v3386, %v3385
        %v3392 = vsel %vm574, %v3378, 0
        %3394 = vmatprep.subr.bf16.mxu0 0
        %3395 = vmatpush1.bf16.msra.mxu0 0
        %3396 = vmatprep.subr.bf16.mxu0 0
        %3397 = vmatpush1.bf16.msra.mxu0 0
        %3398 = vmatprep.subr.bf16.mxu0 0
        %3399 = vmatpush1.bf16.msra.mxu0 0
        %3400 = vmatprep.subr.bf16.mxu0 0
        %3401 = vmatpush1.bf16.msra.mxu0 0
        %3402 = vmatprep.subr.bf16.mxu0 0
        %3403 = vmatpush1.bf16.msra.mxu0 0
        %3404 = vmatprep.subr.bf16.mxu0 0
        %3405 = vmatpush1.bf16.msra.mxu0 0
        %3406 = vmatprep.subr.bf16.mxu0 0
        %3407 = vmatpush1.bf16.msra.mxu0 %v3388
        %3408 = vmatprep.subr.bf16.mxu0 0
        %3409 = vmatpush1.bf16.msra.mxu0 %v3387
        %3410 = vmatprep.subr.bf16.mxu0 0
        %3411 = vmatpush2.bf16.msra.mxu0 0
        %3412 = vmatprep.subr.bf16.mxu0 0
        %3413 = vmatpush2.bf16.msra.mxu0 0
        %3414 = vmatprep.subr.bf16.mxu0 0
        %3415 = vmatpush2.bf16.msra.mxu0 0
        %3416 = vmatprep.subr.bf16.mxu0 0
        %3417 = vmatpush2.bf16.msra.mxu0 0
        %3418 = vmatprep.subr.bf16.mxu0 0
        %3419 = vmatpush2.bf16.msra.mxu0 0
        %3420 = vmatprep.subr.bf16.mxu0 0
        %3421 = vmatpush2.bf16.msra.mxu0 0
        %3422 = vmatprep.subr.bf16.mxu0 0
        %3423 = vmatpush2.bf16.msra.mxu0 0
        %3424 = vmatprep.subr.bf16.mxu0 0
        %3425 = vmatpush2.bf16.msra.mxu0 0
        %3426 = vmatprep.mubr.bf16.mxu0 0
        %3427 = vmatmul.mubr.bf16.gmra.mxu0 %v3392
        %v3428 = vpop.f32.mrf.mxu0
        %v3429 = vadd.f32 0.0, %v3428
        %v3430 = vpop.f32.mrf.mxu0
        %v3431 = vpop.f32.mrf.mxu0
        %v3432 = vpop.f32.mrf.mxu0
        %3433 = vdwg.mxu0
        %v3434 = vadd.f32 %v3377, %v3429
        %3435 = vmatprep.subr.bf16.mxu0 0
        %3436 = vmatpush1.bf16.msra.mxu0 0
        %3437 = vmatprep.subr.bf16.mxu0 0
        %3438 = vmatpush1.bf16.msra.mxu0 0
        %3439 = vmatprep.subr.bf16.mxu0 0
        %3440 = vmatpush1.bf16.msra.mxu0 0
        %3441 = vmatprep.subr.bf16.mxu0 0
        %3442 = vmatpush1.bf16.msra.mxu0 0
        %3443 = vmatprep.subr.bf16.mxu0 0
        %3444 = vmatpush1.bf16.msra.mxu0 0
        %3445 = vmatprep.subr.bf16.mxu0 0
        %3446 = vmatpush1.bf16.msra.mxu0 0
        %3447 = vmatprep.subr.bf16.mxu0 0
        %3448 = vmatpush1.bf16.msra.mxu0 %v571
        %3449 = vmatprep.subr.bf16.mxu0 0
        %3450 = vmatpush1.bf16.msra.mxu0 %v570
        %3451 = vmatprep.subr.bf16.mxu0 0
        %3452 = vmatpush2.bf16.msra.mxu0 0
        %3453 = vmatprep.subr.bf16.mxu0 0
        %3454 = vmatpush2.bf16.msra.mxu0 0
        %3455 = vmatprep.subr.bf16.mxu0 0
        %3456 = vmatpush2.bf16.msra.mxu0 0
        %3457 = vmatprep.subr.bf16.mxu0 0
        %3458 = vmatpush2.bf16.msra.mxu0 0
        %3459 = vmatprep.subr.bf16.mxu0 0
        %3460 = vmatpush2.bf16.msra.mxu0 0
        %3461 = vmatprep.subr.bf16.mxu0 0
        %3462 = vmatpush2.bf16.msra.mxu0 0
        %3463 = vmatprep.subr.bf16.mxu0 0
        %3464 = vmatpush2.bf16.msra.mxu0 0
        %3465 = vmatprep.subr.bf16.mxu0 0
        %3466 = vmatpush2.bf16.msra.mxu0 0
        %3467 = vmatprep.mubr.bf16.mxu0 0
        %3468 = vmatmul.mubr.bf16.gmra.mxu0 %v2321
        %v3469 = vpop.f32.mrf.mxu0
        %v3470 = vadd.f32 0.0, %v3469
        %v3471 = vpop.f32.mrf.mxu0
        %v3472 = vpop.f32.mrf.mxu0
        %v3473 = vpop.f32.mrf.mxu0
        %3474 = vdwg.mxu0
        %v3475 = vadd.f32 %v558, %v3470
        %3476 = vmatprep.subr.bf16.mxu0 0
        %3477 = vmatpush1.bf16.msra.mxu0 0
        %3478 = vmatprep.subr.bf16.mxu0 0
        %3479 = vmatpush1.bf16.msra.mxu0 0
        %3480 = vmatprep.subr.bf16.mxu0 0
        %3481 = vmatpush1.bf16.msra.mxu0 0
        %3482 = vmatprep.subr.bf16.mxu0 0
        %3483 = vmatpush1.bf16.msra.mxu0 0
        %3484 = vmatprep.subr.bf16.mxu0 0
        %3485 = vmatpush1.bf16.msra.mxu0 0
        %3486 = vmatprep.subr.bf16.mxu0 0
        %3487 = vmatpush1.bf16.msra.mxu0 0
        %3488 = vmatprep.subr.bf16.mxu0 0
        %3489 = vmatpush1.bf16.msra.mxu0 %v634
        %3490 = vmatprep.subr.bf16.mxu0 0
        %3491 = vmatpush1.bf16.msra.mxu0 %v633
        %3492 = vmatprep.subr.bf16.mxu0 0
        %3493 = vmatpush2.bf16.msra.mxu0 0
        %3494 = vmatprep.subr.bf16.mxu0 0
        %3495 = vmatpush2.bf16.msra.mxu0 0
        %3496 = vmatprep.subr.bf16.mxu0 0
        %3497 = vmatpush2.bf16.msra.mxu0 0
        %3498 = vmatprep.subr.bf16.mxu0 0
        %3499 = vmatpush2.bf16.msra.mxu0 0
        %3500 = vmatprep.subr.bf16.mxu0 0
        %3501 = vmatpush2.bf16.msra.mxu0 0
        %3502 = vmatprep.subr.bf16.mxu0 0
        %3503 = vmatpush2.bf16.msra.mxu0 0
        %3504 = vmatprep.subr.bf16.mxu0 0
        %3505 = vmatpush2.bf16.msra.mxu0 0
        %3506 = vmatprep.subr.bf16.mxu0 0
        %3507 = vmatpush2.bf16.msra.mxu0 0
        %3508 = vmatprep.mubr.bf16.mxu0 0
        %3509 = vmatmul.mubr.bf16.gmra.mxu0 %v2373
        %v3510 = vpop.f32.mrf.mxu0
        %v3511 = vadd.f32 0.0, %v3510
        %v3512 = vpop.f32.mrf.mxu0
        %v3513 = vpop.f32.mrf.mxu0
        %v3514 = vpop.f32.mrf.mxu0
        %3515 = vdwg.mxu0
        %v3516 = vadd.f32 %v3475, %v3511
        %3517 = vmatprep.subr.bf16.mxu0 0
        %3518 = vmatpush1.bf16.msra.mxu0 0
        %3519 = vmatprep.subr.bf16.mxu0 0
        %3520 = vmatpush1.bf16.msra.mxu0 0
        %3521 = vmatprep.subr.bf16.mxu0 0
        %3522 = vmatpush1.bf16.msra.mxu0 0
        %3523 = vmatprep.subr.bf16.mxu0 0
        %3524 = vmatpush1.bf16.msra.mxu0 0
        %3525 = vmatprep.subr.bf16.mxu0 0
        %3526 = vmatpush1.bf16.msra.mxu0 0
        %3527 = vmatprep.subr.bf16.mxu0 0
        %3528 = vmatpush1.bf16.msra.mxu0 0
        %3529 = vmatprep.subr.bf16.mxu0 0
        %3530 = vmatpush1.bf16.msra.mxu0 %v692
        %3531 = vmatprep.subr.bf16.mxu0 0
        %3532 = vmatpush1.bf16.msra.mxu0 %v691
        %3533 = vmatprep.subr.bf16.mxu0 0
        %3534 = vmatpush2.bf16.msra.mxu0 0
        %3535 = vmatprep.subr.bf16.mxu0 0
        %3536 = vmatpush2.bf16.msra.mxu0 0
        %3537 = vmatprep.subr.bf16.mxu0 0
        %3538 = vmatpush2.bf16.msra.mxu0 0
        %3539 = vmatprep.subr.bf16.mxu0 0
        %3540 = vmatpush2.bf16.msra.mxu0 0
        %3541 = vmatprep.subr.bf16.mxu0 0
        %3542 = vmatpush2.bf16.msra.mxu0 0
        %3543 = vmatprep.subr.bf16.mxu0 0
        %3544 = vmatpush2.bf16.msra.mxu0 0
        %3545 = vmatprep.subr.bf16.mxu0 0
        %3546 = vmatpush2.bf16.msra.mxu0 0
        %3547 = vmatprep.subr.bf16.mxu0 0
        %3548 = vmatpush2.bf16.msra.mxu0 0
        %3549 = vmatprep.mubr.bf16.mxu0 0
        %3550 = vmatmul.mubr.bf16.gmra.mxu0 %v2418
        %v3551 = vpop.f32.mrf.mxu0
        %v3552 = vadd.f32 0.0, %v3551
        %v3553 = vpop.f32.mrf.mxu0
        %v3554 = vpop.f32.mrf.mxu0
        %v3555 = vpop.f32.mrf.mxu0
        %3556 = vdwg.mxu0
        %v3557 = vadd.f32 %v3516, %v3552
        %3558 = vmatprep.subr.bf16.mxu0 0
        %3559 = vmatpush1.bf16.msra.mxu0 0
        %3560 = vmatprep.subr.bf16.mxu0 0
        %3561 = vmatpush1.bf16.msra.mxu0 0
        %3562 = vmatprep.subr.bf16.mxu0 0
        %3563 = vmatpush1.bf16.msra.mxu0 0
        %3564 = vmatprep.subr.bf16.mxu0 0
        %3565 = vmatpush1.bf16.msra.mxu0 0
        %3566 = vmatprep.subr.bf16.mxu0 0
        %3567 = vmatpush1.bf16.msra.mxu0 0
        %3568 = vmatprep.subr.bf16.mxu0 0
        %3569 = vmatpush1.bf16.msra.mxu0 0
        %3570 = vmatprep.subr.bf16.mxu0 0
        %3571 = vmatpush1.bf16.msra.mxu0 %v757
        %3572 = vmatprep.subr.bf16.mxu0 0
        %3573 = vmatpush1.bf16.msra.mxu0 %v756
        %3574 = vmatprep.subr.bf16.mxu0 0
        %3575 = vmatpush2.bf16.msra.mxu0 0
        %3576 = vmatprep.subr.bf16.mxu0 0
        %3577 = vmatpush2.bf16.msra.mxu0 0
        %3578 = vmatprep.subr.bf16.mxu0 0
        %3579 = vmatpush2.bf16.msra.mxu0 0
        %3580 = vmatprep.subr.bf16.mxu0 0
        %3581 = vmatpush2.bf16.msra.mxu0 0
        %3582 = vmatprep.subr.bf16.mxu0 0
        %3583 = vmatpush2.bf16.msra.mxu0 0
        %3584 = vmatprep.subr.bf16.mxu0 0
        %3585 = vmatpush2.bf16.msra.mxu0 0
        %3586 = vmatprep.subr.bf16.mxu0 0
        %3587 = vmatpush2.bf16.msra.mxu0 0
        %3588 = vmatprep.subr.bf16.mxu0 0
        %3589 = vmatpush2.bf16.msra.mxu0 0
        %3590 = vmatprep.mubr.bf16.mxu0 0
        %3591 = vmatmul.mubr.bf16.gmra.mxu0 %v3005
        %v3592 = vpop.f32.mrf.mxu0
        %v3593 = vadd.f32 0.0, %v3592
        %v3594 = vpop.f32.mrf.mxu0
        %v3595 = vpop.f32.mrf.mxu0
        %v3596 = vpop.f32.mrf.mxu0
        %3597 = vdwg.mxu0
        %v3598 = vadd.f32 %v3557, %v3593
        %3599 = vmatprep.subr.bf16.mxu0 0
        %3600 = vmatpush1.bf16.msra.mxu0 0
        %3601 = vmatprep.subr.bf16.mxu0 0
        %3602 = vmatpush1.bf16.msra.mxu0 0
        %3603 = vmatprep.subr.bf16.mxu0 0
        %3604 = vmatpush1.bf16.msra.mxu0 0
        %3605 = vmatprep.subr.bf16.mxu0 0
        %3606 = vmatpush1.bf16.msra.mxu0 0
        %3607 = vmatprep.subr.bf16.mxu0 0
        %3608 = vmatpush1.bf16.msra.mxu0 0
        %3609 = vmatprep.subr.bf16.mxu0 0
        %3610 = vmatpush1.bf16.msra.mxu0 0
        %3611 = vmatprep.subr.bf16.mxu0 0
        %3612 = vmatpush1.bf16.msra.mxu0 %v814
        %3613 = vmatprep.subr.bf16.mxu0 0
        %3614 = vmatpush1.bf16.msra.mxu0 %v813
        %3615 = vmatprep.subr.bf16.mxu0 0
        %3616 = vmatpush2.bf16.msra.mxu0 0
        %3617 = vmatprep.subr.bf16.mxu0 0
        %3618 = vmatpush2.bf16.msra.mxu0 0
        %3619 = vmatprep.subr.bf16.mxu0 0
        %3620 = vmatpush2.bf16.msra.mxu0 0
        %3621 = vmatprep.subr.bf16.mxu0 0
        %3622 = vmatpush2.bf16.msra.mxu0 0
        %3623 = vmatprep.subr.bf16.mxu0 0
        %3624 = vmatpush2.bf16.msra.mxu0 0
        %3625 = vmatprep.subr.bf16.mxu0 0
        %3626 = vmatpush2.bf16.msra.mxu0 0
        %3627 = vmatprep.subr.bf16.mxu0 0
        %3628 = vmatpush2.bf16.msra.mxu0 0
        %3629 = vmatprep.subr.bf16.mxu0 0
        %3630 = vmatpush2.bf16.msra.mxu0 0
        %3631 = vmatprep.mubr.bf16.mxu0 0
        %3632 = vmatmul.mubr.bf16.gmra.mxu0 %v3052
        %v3633 = vpop.f32.mrf.mxu0
        %v3634 = vadd.f32 0.0, %v3633
        %v3635 = vpop.f32.mrf.mxu0
        %v3636 = vpop.f32.mrf.mxu0
        %v3637 = vpop.f32.mrf.mxu0
        %3638 = vdwg.mxu0
        %v3639 = vadd.f32 %v3598, %v3634
        %3640 = vmatprep.subr.bf16.mxu0 0
        %3641 = vmatpush1.bf16.msra.mxu0 0
        %3642 = vmatprep.subr.bf16.mxu0 0
        %3643 = vmatpush1.bf16.msra.mxu0 0
        %3644 = vmatprep.subr.bf16.mxu0 0
        %3645 = vmatpush1.bf16.msra.mxu0 0
        %3646 = vmatprep.subr.bf16.mxu0 0
        %3647 = vmatpush1.bf16.msra.mxu0 0
        %3648 = vmatprep.subr.bf16.mxu0 0
        %3649 = vmatpush1.bf16.msra.mxu0 0
        %3650 = vmatprep.subr.bf16.mxu0 0
        %3651 = vmatpush1.bf16.msra.mxu0 0
        %3652 = vmatprep.subr.bf16.mxu0 0
        %3653 = vmatpush1.bf16.msra.mxu0 %v876
        %3654 = vmatprep.subr.bf16.mxu0 0
        %3655 = vmatpush1.bf16.msra.mxu0 %v875
        %3656 = vmatprep.subr.bf16.mxu0 0
        %3657 = vmatpush2.bf16.msra.mxu0 0
        %3658 = vmatprep.subr.bf16.mxu0 0
        %3659 = vmatpush2.bf16.msra.mxu0 0
        %3660 = vmatprep.subr.bf16.mxu0 0
        %3661 = vmatpush2.bf16.msra.mxu0 0
        %3662 = vmatprep.subr.bf16.mxu0 0
        %3663 = vmatpush2.bf16.msra.mxu0 0
        %3664 = vmatprep.subr.bf16.mxu0 0
        %3665 = vmatpush2.bf16.msra.mxu0 0
        %3666 = vmatprep.subr.bf16.mxu0 0
        %3667 = vmatpush2.bf16.msra.mxu0 0
        %3668 = vmatprep.subr.bf16.mxu0 0
        %3669 = vmatpush2.bf16.msra.mxu0 0
        %3670 = vmatprep.subr.bf16.mxu0 0
        %3671 = vmatpush2.bf16.msra.mxu0 0
        %3672 = vmatprep.mubr.bf16.mxu0 0
        %3673 = vmatmul.mubr.bf16.gmra.mxu0 %v3104
        %v3674 = vpop.f32.mrf.mxu0
        %v3675 = vadd.f32 0.0, %v3674
        %v3676 = vpop.f32.mrf.mxu0
        %v3677 = vpop.f32.mrf.mxu0
        %v3678 = vpop.f32.mrf.mxu0
        %3679 = vdwg.mxu0
        %v3680 = vadd.f32 %v3639, %v3675
        %v3681 = vpack.c.bf16 %v415, %v415
        %v3683 = vrot.slane %v3681, 1
        %v3685 = vsel %vm574, %v3683, 0
        %3687 = vmatprep.subr.bf16.mxu0 0
        %3688 = vmatpush1.bf16.msra.mxu0 0
        %3689 = vmatprep.subr.bf16.mxu0 0
        %3690 = vmatpush1.bf16.msra.mxu0 0
        %3691 = vmatprep.subr.bf16.mxu0 0
        %3692 = vmatpush1.bf16.msra.mxu0 0
        %3693 = vmatprep.subr.bf16.mxu0 0
        %3694 = vmatpush1.bf16.msra.mxu0 0
        %3695 = vmatprep.subr.bf16.mxu0 0
        %3696 = vmatpush1.bf16.msra.mxu0 0
        %3697 = vmatprep.subr.bf16.mxu0 0
        %3698 = vmatpush1.bf16.msra.mxu0 0
        %3699 = vmatprep.subr.bf16.mxu0 0
        %3700 = vmatpush1.bf16.msra.mxu0 %v935
        %3701 = vmatprep.subr.bf16.mxu0 0
        %3702 = vmatpush1.bf16.msra.mxu0 %v934
        %3703 = vmatprep.subr.bf16.mxu0 0
        %3704 = vmatpush2.bf16.msra.mxu0 0
        %3705 = vmatprep.subr.bf16.mxu0 0
        %3706 = vmatpush2.bf16.msra.mxu0 0
        %3707 = vmatprep.subr.bf16.mxu0 0
        %3708 = vmatpush2.bf16.msra.mxu0 0
        %3709 = vmatprep.subr.bf16.mxu0 0
        %3710 = vmatpush2.bf16.msra.mxu0 0
        %3711 = vmatprep.subr.bf16.mxu0 0
        %3712 = vmatpush2.bf16.msra.mxu0 0
        %3713 = vmatprep.subr.bf16.mxu0 0
        %3714 = vmatpush2.bf16.msra.mxu0 0
        %3715 = vmatprep.subr.bf16.mxu0 0
        %3716 = vmatpush2.bf16.msra.mxu0 0
        %3717 = vmatprep.subr.bf16.mxu0 0
        %3718 = vmatpush2.bf16.msra.mxu0 0
        %3719 = vmatprep.mubr.bf16.mxu0 0
        %3720 = vmatmul.mubr.bf16.gmra.mxu0 %v3685
        %v3721 = vpop.f32.mrf.mxu0
        %v3722 = vadd.f32 0.0, %v3721
        %v3723 = vpop.f32.mrf.mxu0
        %v3724 = vpop.f32.mrf.mxu0
        %v3725 = vpop.f32.mrf.mxu0
        %3726 = vdwg.mxu0
        %v3727 = vadd.f32 %v3680, %v3722
        %v3729 = vshrl.u32 %v3681, 16
        %v3731 = vrot.slane %v3729, 1
        %v3732 = vshll.u32 %v3681, 16
        %v3734 = vrot.slane %v3732, 2
        %v3735 = vor.u32 %v3731, %v3734
        %v3737 = vsel %vm574, %v3735, 0
        %3739 = vmatprep.subr.bf16.mxu0 0
        %3740 = vmatpush1.bf16.msra.mxu0 0
        %3741 = vmatprep.subr.bf16.mxu0 0
        %3742 = vmatpush1.bf16.msra.mxu0 0
        %3743 = vmatprep.subr.bf16.mxu0 0
        %3744 = vmatpush1.bf16.msra.mxu0 0
        %3745 = vmatprep.subr.bf16.mxu0 0
        %3746 = vmatpush1.bf16.msra.mxu0 0
        %3747 = vmatprep.subr.bf16.mxu0 0
        %3748 = vmatpush1.bf16.msra.mxu0 0
        %3749 = vmatprep.subr.bf16.mxu0 0
        %3750 = vmatpush1.bf16.msra.mxu0 0
        %3751 = vmatprep.subr.bf16.mxu0 0
        %3752 = vmatpush1.bf16.msra.mxu0 %v999
        %3753 = vmatprep.subr.bf16.mxu0 0
        %3754 = vmatpush1.bf16.msra.mxu0 %v998
        %3755 = vmatprep.subr.bf16.mxu0 0
        %3756 = vmatpush2.bf16.msra.mxu0 0
        %3757 = vmatprep.subr.bf16.mxu0 0
        %3758 = vmatpush2.bf16.msra.mxu0 0
        %3759 = vmatprep.subr.bf16.mxu0 0
        %3760 = vmatpush2.bf16.msra.mxu0 0
        %3761 = vmatprep.subr.bf16.mxu0 0
        %3762 = vmatpush2.bf16.msra.mxu0 0
        %3763 = vmatprep.subr.bf16.mxu0 0
        %3764 = vmatpush2.bf16.msra.mxu0 0
        %3765 = vmatprep.subr.bf16.mxu0 0
        %3766 = vmatpush2.bf16.msra.mxu0 0
        %3767 = vmatprep.subr.bf16.mxu0 0
        %3768 = vmatpush2.bf16.msra.mxu0 0
        %3769 = vmatprep.subr.bf16.mxu0 0
        %3770 = vmatpush2.bf16.msra.mxu0 0
        %3771 = vmatprep.mubr.bf16.mxu0 0
        %3772 = vmatmul.mubr.bf16.gmra.mxu0 %v3737
        %v3773 = vpop.f32.mrf.mxu0
        %v3774 = vadd.f32 0.0, %v3773
        %v3775 = vpop.f32.mrf.mxu0
        %v3776 = vpop.f32.mrf.mxu0
        %v3777 = vpop.f32.mrf.mxu0
        %3778 = vdwg.mxu0
        %v3779 = vadd.f32 %v3727, %v3774
        %v3780 = vpack.c.bf16 %v416, %v415
        %v3782 = vrot.slane %v3780, 2
        %v3784 = vsel %vm574, %v3782, 0
        %3786 = vmatprep.subr.bf16.mxu0 0
        %3787 = vmatpush1.bf16.msra.mxu0 0
        %3788 = vmatprep.subr.bf16.mxu0 0
        %3789 = vmatpush1.bf16.msra.mxu0 0
        %3790 = vmatprep.subr.bf16.mxu0 0
        %3791 = vmatpush1.bf16.msra.mxu0 0
        %3792 = vmatprep.subr.bf16.mxu0 0
        %3793 = vmatpush1.bf16.msra.mxu0 0
        %3794 = vmatprep.subr.bf16.mxu0 0
        %3795 = vmatpush1.bf16.msra.mxu0 0
        %3796 = vmatprep.subr.bf16.mxu0 0
        %3797 = vmatpush1.bf16.msra.mxu0 0
        %3798 = vmatprep.subr.bf16.mxu0 0
        %3799 = vmatpush1.bf16.msra.mxu0 %v1056
        %3800 = vmatprep.subr.bf16.mxu0 0
        %3801 = vmatpush1.bf16.msra.mxu0 %v1055
        %3802 = vmatprep.subr.bf16.mxu0 0
        %3803 = vmatpush2.bf16.msra.mxu0 0
        %3804 = vmatprep.subr.bf16.mxu0 0
        %3805 = vmatpush2.bf16.msra.mxu0 0
        %3806 = vmatprep.subr.bf16.mxu0 0
        %3807 = vmatpush2.bf16.msra.mxu0 0
        %3808 = vmatprep.subr.bf16.mxu0 0
        %3809 = vmatpush2.bf16.msra.mxu0 0
        %3810 = vmatprep.subr.bf16.mxu0 0
        %3811 = vmatpush2.bf16.msra.mxu0 0
        %3812 = vmatprep.subr.bf16.mxu0 0
        %3813 = vmatpush2.bf16.msra.mxu0 0
        %3814 = vmatprep.subr.bf16.mxu0 0
        %3815 = vmatpush2.bf16.msra.mxu0 0
        %3816 = vmatprep.subr.bf16.mxu0 0
        %3817 = vmatpush2.bf16.msra.mxu0 0
        %3818 = vmatprep.mubr.bf16.mxu0 0
        %3819 = vmatmul.mubr.bf16.gmra.mxu0 %v3784
        %v3820 = vpop.f32.mrf.mxu0
        %v3821 = vadd.f32 0.0, %v3820
        %v3822 = vpop.f32.mrf.mxu0
        %v3823 = vpop.f32.mrf.mxu0
        %v3824 = vpop.f32.mrf.mxu0
        %3825 = vdwg.mxu0
        %v3826 = vadd.f32 %v3779, %v3821
        %v3827 = vmax.f32 %v3826, 0.0
        %v3828 = vpack.c.bf16 %v3827, %v3827
        %v3833 = vunpack.c.l.b16 %v533
        %v3834 = vunpack.c.l.b16 %v534
        %v3835 = vunpack.c.l.b16 %v535
        %v3836 = vunpack.c.l.b16 %v536
        %v3837 = vpack.c.b16 %v3834, %v3833
        %v3838 = vpack.c.b16 %v3836, %v3835
        %v3842 = vsel %vm574, %v3828, 0
        %3844 = vmatprep.subr.bf16.mxu0 0
        %3845 = vmatpush1.bf16.msra.mxu0 0
        %3846 = vmatprep.subr.bf16.mxu0 0
        %3847 = vmatpush1.bf16.msra.mxu0 0
        %3848 = vmatprep.subr.bf16.mxu0 0
        %3849 = vmatpush1.bf16.msra.mxu0 0
        %3850 = vmatprep.subr.bf16.mxu0 0
        %3851 = vmatpush1.bf16.msra.mxu0 0
        %3852 = vmatprep.subr.bf16.mxu0 0
        %3853 = vmatpush1.bf16.msra.mxu0 0
        %3854 = vmatprep.subr.bf16.mxu0 0
        %3855 = vmatpush1.bf16.msra.mxu0 0
        %3856 = vmatprep.subr.bf16.mxu0 0
        %3857 = vmatpush1.bf16.msra.mxu0 %v3838
        %3858 = vmatprep.subr.bf16.mxu0 0
        %3859 = vmatpush1.bf16.msra.mxu0 %v3837
        %3860 = vmatprep.subr.bf16.mxu0 0
        %3861 = vmatpush2.bf16.msra.mxu0 0
        %3862 = vmatprep.subr.bf16.mxu0 0
        %3863 = vmatpush2.bf16.msra.mxu0 0
        %3864 = vmatprep.subr.bf16.mxu0 0
        %3865 = vmatpush2.bf16.msra.mxu0 0
        %3866 = vmatprep.subr.bf16.mxu0 0
        %3867 = vmatpush2.bf16.msra.mxu0 0
        %3868 = vmatprep.subr.bf16.mxu0 0
        %3869 = vmatpush2.bf16.msra.mxu0 0
        %3870 = vmatprep.subr.bf16.mxu0 0
        %3871 = vmatpush2.bf16.msra.mxu0 0
        %3872 = vmatprep.subr.bf16.mxu0 0
        %3873 = vmatpush2.bf16.msra.mxu0 0
        %3874 = vmatprep.subr.bf16.mxu0 0
        %3875 = vmatpush2.bf16.msra.mxu0 0
        %3876 = vmatprep.mubr.bf16.mxu0 0
        %3877 = vmatmul.mubr.bf16.gmra.mxu0 %v3842
        %v3878 = vpop.f32.mrf.mxu0
        %v3879 = vadd.f32 0.0, %v3878
        %v3880 = vpop.f32.mrf.mxu0
        %v3881 = vpop.f32.mrf.mxu0
        %v3882 = vpop.f32.mrf.mxu0
        %3883 = vdwg.mxu0
        %v3884 = vadd.f32 %v3434, %v3879
        %v3885 = vshrl.u32 %v3828, 16
        %v3891 = vunpack.c.l.b16 %v537
        %v3892 = vunpack.c.l.b16 %v538
        %v3893 = vunpack.c.l.b16 %v539
        %v3894 = vunpack.c.l.b16 %v540
        %v3895 = vpack.c.b16 %v3892, %v3891
        %v3896 = vpack.c.b16 %v3894, %v3893
        %v3900 = vsel %vm574, %v3885, 0
        %3902 = vmatprep.subr.bf16.mxu0 0
        %3903 = vmatpush1.bf16.msra.mxu0 0
        %3904 = vmatprep.subr.bf16.mxu0 0
        %3905 = vmatpush1.bf16.msra.mxu0 0
        %3906 = vmatprep.subr.bf16.mxu0 0
        %3907 = vmatpush1.bf16.msra.mxu0 0
        %3908 = vmatprep.subr.bf16.mxu0 0
        %3909 = vmatpush1.bf16.msra.mxu0 0
        %3910 = vmatprep.subr.bf16.mxu0 0
        %3911 = vmatpush1.bf16.msra.mxu0 0
        %3912 = vmatprep.subr.bf16.mxu0 0
        %3913 = vmatpush1.bf16.msra.mxu0 0
        %3914 = vmatprep.subr.bf16.mxu0 0
        %3915 = vmatpush1.bf16.msra.mxu0 %v3896
        %3916 = vmatprep.subr.bf16.mxu0 0
        %3917 = vmatpush1.bf16.msra.mxu0 %v3895
        %3918 = vmatprep.subr.bf16.mxu0 0
        %3919 = vmatpush2.bf16.msra.mxu0 0
        %3920 = vmatprep.subr.bf16.mxu0 0
        %3921 = vmatpush2.bf16.msra.mxu0 0
        %3922 = vmatprep.subr.bf16.mxu0 0
        %3923 = vmatpush2.bf16.msra.mxu0 0
        %3924 = vmatprep.subr.bf16.mxu0 0
        %3925 = vmatpush2.bf16.msra.mxu0 0
        %3926 = vmatprep.subr.bf16.mxu0 0
        %3927 = vmatpush2.bf16.msra.mxu0 0
        %3928 = vmatprep.subr.bf16.mxu0 0
        %3929 = vmatpush2.bf16.msra.mxu0 0
        %3930 = vmatprep.subr.bf16.mxu0 0
        %3931 = vmatpush2.bf16.msra.mxu0 0
        %3932 = vmatprep.subr.bf16.mxu0 0
        %3933 = vmatpush2.bf16.msra.mxu0 0
        %3934 = vmatprep.mubr.bf16.mxu0 0
        %3935 = vmatmul.mubr.bf16.gmra.mxu0 %v3900
        %v3936 = vpop.f32.mrf.mxu0
        %v3937 = vadd.f32 0.0, %v3936
        %v3938 = vpop.f32.mrf.mxu0
        %v3939 = vpop.f32.mrf.mxu0
        %v3940 = vpop.f32.mrf.mxu0
        %3941 = vdwg.mxu0
        %v3942 = vadd.f32 %v3884, %v3937
        %v3944 = vrot.slane %v3828, 1
        %v3949 = vunpack.c.l.b16 %v541
        %v3950 = vunpack.c.l.b16 %v542
        %v3951 = vunpack.c.l.b16 %v543
        %v3952 = vunpack.c.l.b16 %v544
        %v3953 = vpack.c.b16 %v3950, %v3949
        %v3954 = vpack.c.b16 %v3952, %v3951
        %v3958 = vsel %vm574, %v3944, 0
        %3960 = vmatprep.subr.bf16.mxu0 0
        %3961 = vmatpush1.bf16.msra.mxu0 0
        %3962 = vmatprep.subr.bf16.mxu0 0
        %3963 = vmatpush1.bf16.msra.mxu0 0
        %3964 = vmatprep.subr.bf16.mxu0 0
        %3965 = vmatpush1.bf16.msra.mxu0 0
        %3966 = vmatprep.subr.bf16.mxu0 0
        %3967 = vmatpush1.bf16.msra.mxu0 0
        %3968 = vmatprep.subr.bf16.mxu0 0
        %3969 = vmatpush1.bf16.msra.mxu0 0
        %3970 = vmatprep.subr.bf16.mxu0 0
        %3971 = vmatpush1.bf16.msra.mxu0 0
        %3972 = vmatprep.subr.bf16.mxu0 0
        %3973 = vmatpush1.bf16.msra.mxu0 %v3954
        %3974 = vmatprep.subr.bf16.mxu0 0
        %3975 = vmatpush1.bf16.msra.mxu0 %v3953
        %3976 = vmatprep.subr.bf16.mxu0 0
        %3977 = vmatpush2.bf16.msra.mxu0 0
        %3978 = vmatprep.subr.bf16.mxu0 0
        %3979 = vmatpush2.bf16.msra.mxu0 0
        %3980 = vmatprep.subr.bf16.mxu0 0
        %3981 = vmatpush2.bf16.msra.mxu0 0
        %3982 = vmatprep.subr.bf16.mxu0 0
        %3983 = vmatpush2.bf16.msra.mxu0 0
        %3984 = vmatprep.subr.bf16.mxu0 0
        %3985 = vmatpush2.bf16.msra.mxu0 0
        %3986 = vmatprep.subr.bf16.mxu0 0
        %3987 = vmatpush2.bf16.msra.mxu0 0
        %3988 = vmatprep.subr.bf16.mxu0 0
        %3989 = vmatpush2.bf16.msra.mxu0 0
        %3990 = vmatprep.subr.bf16.mxu0 0
        %3991 = vmatpush2.bf16.msra.mxu0 0
        %3992 = vmatprep.mubr.bf16.mxu0 0
        %3993 = vmatmul.mubr.bf16.gmra.mxu0 %v3958
        %v3994 = vpop.f32.mrf.mxu0
        %v3995 = vadd.f32 0.0, %v3994
        %v3996 = vpop.f32.mrf.mxu0
        %v3997 = vpop.f32.mrf.mxu0
        %v3998 = vpop.f32.mrf.mxu0
        %3999 = vdwg.mxu0
        %v4000 = vadd.f32 %v3942, %v3995
        %v4001 = vrot.slane %v3885, 1
        %v4006 = vunpack.c.l.b16 %v545
        %v4007 = vunpack.c.l.b16 %v546
        %v4008 = vunpack.c.l.b16 %v547
        %v4009 = vunpack.c.l.b16 %v548
        %v4010 = vpack.c.b16 %v4007, %v4006
        %v4011 = vpack.c.b16 %v4009, %v4008
        %v4015 = vsel %vm574, %v4001, 0
        %4017 = vmatprep.subr.bf16.mxu0 0
        %4018 = vmatpush1.bf16.msra.mxu0 0
        %4019 = vmatprep.subr.bf16.mxu0 0
        %4020 = vmatpush1.bf16.msra.mxu0 0
        %4021 = vmatprep.subr.bf16.mxu0 0
        %4022 = vmatpush1.bf16.msra.mxu0 0
        %4023 = vmatprep.subr.bf16.mxu0 0
        %4024 = vmatpush1.bf16.msra.mxu0 0
        %4025 = vmatprep.subr.bf16.mxu0 0
        %4026 = vmatpush1.bf16.msra.mxu0 0
        %4027 = vmatprep.subr.bf16.mxu0 0
        %4028 = vmatpush1.bf16.msra.mxu0 0
        %4029 = vmatprep.subr.bf16.mxu0 0
        %4030 = vmatpush1.bf16.msra.mxu0 %v4011
        %4031 = vmatprep.subr.bf16.mxu0 0
        %4032 = vmatpush1.bf16.msra.mxu0 %v4010
        %4033 = vmatprep.subr.bf16.mxu0 0
        %4034 = vmatpush2.bf16.msra.mxu0 0
        %4035 = vmatprep.subr.bf16.mxu0 0
        %4036 = vmatpush2.bf16.msra.mxu0 0
        %4037 = vmatprep.subr.bf16.mxu0 0
        %4038 = vmatpush2.bf16.msra.mxu0 0
        %4039 = vmatprep.subr.bf16.mxu0 0
        %4040 = vmatpush2.bf16.msra.mxu0 0
        %4041 = vmatprep.subr.bf16.mxu0 0
        %4042 = vmatpush2.bf16.msra.mxu0 0
        %4043 = vmatprep.subr.bf16.mxu0 0
        %4044 = vmatpush2.bf16.msra.mxu0 0
        %4045 = vmatprep.subr.bf16.mxu0 0
        %4046 = vmatpush2.bf16.msra.mxu0 0
        %4047 = vmatprep.subr.bf16.mxu0 0
        %4048 = vmatpush2.bf16.msra.mxu0 0
        %4049 = vmatprep.mubr.bf16.mxu0 0
        %4050 = vmatmul.mubr.bf16.gmra.mxu0 %v4015
        %v4051 = vpop.f32.mrf.mxu0
        %v4052 = vadd.f32 0.0, %v4051
        %v4053 = vpop.f32.mrf.mxu0
        %v4054 = vpop.f32.mrf.mxu0
        %v4055 = vpop.f32.mrf.mxu0
        %4056 = vdwg.mxu0
        %v4057 = vadd.f32 %v4000, %v4052
        %v4058 = vrot.slane %v3828, 2
        %v4063 = vunpack.c.l.b16 %v549
        %v4064 = vunpack.c.l.b16 %v550
        %v4065 = vunpack.c.l.b16 %v551
        %v4066 = vunpack.c.l.b16 %v552
        %v4067 = vpack.c.b16 %v4064, %v4063
        %v4068 = vpack.c.b16 %v4066, %v4065
        %v4072 = vsel %vm574, %v4058, 0
        %4074 = vmatprep.subr.bf16.mxu0 0
        %4075 = vmatpush1.bf16.msra.mxu0 0
        %4076 = vmatprep.subr.bf16.mxu0 0
        %4077 = vmatpush1.bf16.msra.mxu0 0
        %4078 = vmatprep.subr.bf16.mxu0 0
        %4079 = vmatpush1.bf16.msra.mxu0 0
        %4080 = vmatprep.subr.bf16.mxu0 0
        %4081 = vmatpush1.bf16.msra.mxu0 0
        %4082 = vmatprep.subr.bf16.mxu0 0
        %4083 = vmatpush1.bf16.msra.mxu0 0
        %4084 = vmatprep.subr.bf16.mxu0 0
        %4085 = vmatpush1.bf16.msra.mxu0 0
        %4086 = vmatprep.subr.bf16.mxu0 0
        %4087 = vmatpush1.bf16.msra.mxu0 %v4068
        %4088 = vmatprep.subr.bf16.mxu0 0
        %4089 = vmatpush1.bf16.msra.mxu0 %v4067
        %4090 = vmatprep.subr.bf16.mxu0 0
        %4091 = vmatpush2.bf16.msra.mxu0 0
        %4092 = vmatprep.subr.bf16.mxu0 0
        %4093 = vmatpush2.bf16.msra.mxu0 0
        %4094 = vmatprep.subr.bf16.mxu0 0
        %4095 = vmatpush2.bf16.msra.mxu0 0
        %4096 = vmatprep.subr.bf16.mxu0 0
        %4097 = vmatpush2.bf16.msra.mxu0 0
        %4098 = vmatprep.subr.bf16.mxu0 0
        %4099 = vmatpush2.bf16.msra.mxu0 0
        %4100 = vmatprep.subr.bf16.mxu0 0
        %4101 = vmatpush2.bf16.msra.mxu0 0
        %4102 = vmatprep.subr.bf16.mxu0 0
        %4103 = vmatpush2.bf16.msra.mxu0 0
        %4104 = vmatprep.subr.bf16.mxu0 0
        %4105 = vmatpush2.bf16.msra.mxu0 0
        %4106 = vmatprep.mubr.bf16.mxu0 0
        %4107 = vmatmul.mubr.bf16.gmra.mxu0 %v4072
        %v4108 = vpop.f32.mrf.mxu0
        %v4109 = vadd.f32 0.0, %v4108
        %v4110 = vpop.f32.mrf.mxu0
        %v4111 = vpop.f32.mrf.mxu0
        %v4112 = vpop.f32.mrf.mxu0
        %4113 = vdwg.mxu0
        %v4114 = vadd.f32 %v4057, %v4109
        %vm4115 = vcmask 253952
        %4116 = vst.msk [vmem:[%s270] sm:$0x1] %vm4115, %v4114
        %s4117 = sand.u32 %s181, 1
        %s4118 = scalar_lea.sflag [#allocation3], %s4117
        %s4119 = sand.u32 %s181, 1
        %s4120 = scalar_lea.vmem [#allocation2], %s4119
        // Predicated region
        $region49: #{image_encoder_forward.1} parent=47 // pred_check
          %p4121 = pneg %p191
        $region50: #{image_encoder_forward.1} parent=47 // pred_check_branch
          %4123 = sbr.rel (%p4121) target = $region52
        $region51: #{image_encoder_forward.1} parent=47 // pred_region
          %s4125 = ssub.s32 16, 16
          %4126 = vsyncadd %s4118, %s4125
          %s4127 = smul.addr %s21, 16
          %s4128 = scalar_lea.hbm %s7, %s4127
          %s4130 = sshll.u32 %s4120, 4
          %s4131 = int_to_ptr.vmem [resolvable:$true] %s4130
          %4133 = dma.vmem_to_hbm [thread:$0]  %s4131, 16, %s4128, %s4118
        $region52: #{image_encoder_forward.1} parent=47 // pred_fallthru
          _
      $region48: #{image_encoder_forward.1} parent=5 // pred_fallthru
        _
      %p4134 = scmp.le.s32.totalorder 2, %s16
      // Predicated region
      $region53: #{image_encoder_forward.1} parent=5 // pred_check
        %p4135 = pneg %p4134
      $region54: #{image_encoder_forward.1} parent=5 // pred_check_branch
        %4137 = sbr.rel (%p4135) target = $region56
      $region55: #{image_encoder_forward.1} parent=5 // pred_region
        %s4138 = ssub.s32 %s16, 2
        // Predicated region
        $region57: #{image_encoder_forward.1} parent=55 // pred_check
          %p4139 = pneg %p197
        $region58: #{image_encoder_forward.1} parent=55 // pred_check_branch
          %4141 = sbr.rel (%p4139) target = $region60
        $region59: #{image_encoder_forward.1} parent=55 // pred_region
          %s4142 = sand.u32 %s182, 1
          %s4143 = scalar_lea.sflag [#allocation3], %s4142
          %s4144 = sand.u32 %s182, 1
          %s4145 = scalar_lea.vmem [#allocation2], %s4144
          %4146 = dma.done %s4143, 16
        $region60: #{image_encoder_forward.1} parent=55 // pred_fallthru
          _
      $region56: #{image_encoder_forward.1} parent=5 // pred_fallthru
        _
    $region6: #{image_encoder_forward.1} parent=1 // loop_footer
      %s20 = sadd.s32 1, %s16
    $region7: #{image_encoder_forward.1} parent=1 // loop_footer_branch
      %15 = sbr.rel target = $region3
    $region8: #{image_encoder_forward.1} parent=1 // loop_exit
      _
    %4147 = vsyncpa [#allocation3], 1
    %s4148 = scalar_lea.sflag [#allocation3], 1
    %4149 = vsyncpa %s4148, 1

</llo_original>
